<compile_context>
chip_gen: v7x
topology: tpu7x:2x2x1
jax: 0.10.0
libtpu: 0.0.40
codegen_flags: <defaults>
</compile_context>

<pallas_src>
import functools

import jax
import jax.numpy as jnp
from jax import lax
from jax.experimental import pallas as pl
from jax.experimental.pallas import tpu as pltpu

# ----------------- configuration (small, consistent with the module) --------
B = 2
H = W = 7
WINDOW = 7
KK = (2 * (WINDOW // 2) + 1) ** 2        # 49
NUM_HEADS = 2
HEAD_DIM = KK                             # 49  (== H*W, required by the module)
DIM = NUM_HEADS * HEAD_DIM                # 98
HW = H * W                                # 49
MLP_RATIO = 4.0
HIDDEN = int(DIM * MLP_RATIO)             # 392
EPS = 1e-5

CP = 128             # channel axis padded 98 -> 128; channel index DIM is the "ones" channel
PR = 64              # positions padded to 64 when they are the ROW / contraction axis
PL = 128             # positions / head_dim padded to 128 when they are the LANE axis
HP = 400             # hidden padded 392 -> 400 (multiple of 16 for bf16 sublane packing)
NEG_INF = -1e30      # additive-bias padding -> softmax weight exactly 0


# ------------------------------- Pallas kernel ------------------------------
def nat_layer_kernel(x_c_ref, x_t_ref, wqkv_ref, rbias_ref, wcat_ref,
                     w1_ref, w2_ref, cpack_ref, lnrow_ref, out_ref,
                     *, n_heads, n_fold, inv_c):
    # x_c_ref : (1, CP, n_fold*PL) f32   channels x positions (residual / MLP / out)
    # x_t_ref : (1, n_fold*PR, CP) f32   positions x channels (LN1 / QKV path)
    # wqkv_ref: (CP, nh*3*PL)      bf16  head-major [q|k|v], bias in row DIM, q pre-scaled
    # rbias_ref:(1, nh*PL)         f32   per-head relative bias, NEG_INF on pad lanes
    # wcat_ref: (CP, nh*PR)        bf16  fused projection weight (both heads concatenated)
    # w1_ref  : (HP, CP) bf16 (b1 in col DIM) ; w2_ref: (CP, HP) bf16
    # cpack_ref:(CP, 4) f32  columns = [bproj, g2, be2, b2]
    # lnrow_ref:(2, CP) f32  rows    = [g1, be1]   (be*[DIM] == 1, g*[DIM] == 0)
    f32, bf16 = jnp.float32, jnp.bfloat16

    # ---- LayerNorm 1: per-position stats over channels (exact f32 XLU sums) ----
    x_t = x_t_ref[0]                                                  # (R, CP)
    mu1 = jnp.sum(x_t, axis=-1, keepdims=True) * inv_c
    ex2 = jnp.sum(x_t * x_t, axis=-1, keepdims=True) * inv_c
    # zero-padded channels contribute 0, so E[x^2] - mu^2 is exact over the 98 real ones
    var1 = ex2 - mu1 * mu1
    g1 = lnrow_ref[0:1, :]
    be1 = lnrow_ref[1:2, :]
    xn_t = ((x_t - mu1) * lax.rsqrt(var1 + EPS) * g1 + be1).astype(bf16)   # col DIM == 1

    # ---- per-head fused QKV matmul + elementwise attention ----
    on_heads = []
    for n in range(n_heads):                                          # static, small
        qkv = jnp.dot(xn_t, wqkv_ref[:, n * 3 * PL:(n + 1) * 3 * PL],
                      preferred_element_type=f32)                     # (R, 3*PL), bias folded in
        q = qkv[:, 0 * PL:1 * PL]
        k = qkv[:, 1 * PL:2 * PL]
        v = qkv[:, 2 * PL:3 * PL]
        logits = q * k + rbias_ref[:, n * PL:(n + 1) * PL]            # pad lanes -> -1e30
        m = jnp.max(logits, axis=-1, keepdims=True)
        e = jnp.exp(logits - m)
        denom = jnp.sum(e, axis=-1, keepdims=True)                    # exact f32 lane sum
        attn = e * pl.reciprocal(denom, approx=True)                  # inference-grade recip
        on_heads.append((attn * v).astype(bf16))                      # (R, PL) rows=pos, cols=d

    # ---- projection (+ residual): ONE fused matmul per fold ----
    bproj = cpack_ref[:, 0:1]
    g2 = cpack_ref[:, 1:2]
    be2 = cpack_ref[:, 2:3]
    b2 = cpack_ref[:, 3:4]
    x_c = x_c_ref[0]                                                  # (CP, n_fold*PL)
    wcat = wcat_ref[...]
    x2_parts = []
    for b in range(n_fold):                                           # static, <= 2
        on_stack = jnp.concatenate(
            [oh[b * PR:(b + 1) * PR, :] for oh in on_heads], axis=0)  # (nh*PR, PL) bf16
        y = jnp.dot(wcat, on_stack, preferred_element_type=f32)       # (CP, PL)
        x2_parts.append(x_c[:, b * PL:(b + 1) * PL] + y + bproj)
    x2 = x2_parts[0] if n_fold == 1 else jnp.concatenate(x2_parts, axis=1)  # (CP, n_fold*PL)

    # ---- LayerNorm 2 + MLP, fused across all folds (lane width n_fold*PL) ----
    mu2 = jnp.sum(x2, axis=0, keepdims=True) * inv_c
    var2 = jnp.sum(x2 * x2, axis=0, keepdims=True) * inv_c - mu2 * mu2
    xn2 = ((x2 - mu2) * lax.rsqrt(var2 + EPS) * g2 + be2).astype(bf16)      # row DIM == 1
    h = jnp.dot(w1_ref[...], xn2, preferred_element_type=f32)               # (HP, N), b1 folded
    # tanh-approximation GELU (EUP tanh; ~1e-3 abs from exact erf-GELU)
    h = 0.5 * h * (1.0 + jnp.tanh(0.7978845608028654 *
                                  (h + 0.044715 * h * h * h)))
    mo = jnp.dot(w2_ref[...], h.astype(bf16), preferred_element_type=f32) + b2
    out_ref[0] = x2 + mo                                                    # lane-dense store


# ------------------------------- wrapper (glue) ------------------------------
def _full_spec(a):
    nd = a.ndim
    return pl.BlockSpec(a.shape, lambda s: (0,) * nd)


def _fold_factor(batch):
    # v7x has two TensorCores per chip: keep one batch element per grid step so
    # the "parallel" grid axis is sharded across cores.
    # Single-TC v5e / v6e: fold pairs of batch elements into the lane axis;
    # batches > 2 keep a multi-step grid so activation DMA pipelines with compute.
    try:
        kind = jax.devices()[0].device_kind.lower()
    except Exception:
        kind = ""
    if ("v7" in kind) or ("7x" in kind):
        # TODO(synk): for B == 1 on v7x also split heads / MLP tiles across cores.
        return 1
    return 2 if batch % 2 == 0 else 1


def nat_layer_pallas(x, p):
    Bx, C, Hx, Wx = x.shape
    hw = Hx * Wx
    nh = NUM_HEADS
    hd = C // nh
    kk = p['relb'].shape[-2] * p['relb'].shape[-1]
    assert hd == hw == kk, "module only composes when head_dim == H*W == k*k"
    assert C < CP and HIDDEN <= HP and hw <= PR and hd <= PL

    G = _fold_factor(Bx)
    S = Bx // G
    scale = float(hd) ** -0.5
    f32, bf16 = jnp.float32, jnp.bfloat16

    # -- activations: positions padded to 128 on lanes (x_c) / 64 on rows (x_t)
    x3 = x.reshape(Bx, C, hw).astype(f32)
    xc = jnp.pad(x3, ((0, 0), (0, CP - C), (0, PL - hw)))                     # (B, CP, PL)
    x_c_in = (xc.reshape(S, G, CP, PL).transpose(0, 2, 1, 3)
                .reshape(S, CP, G * PL))                                      # (S, CP, G*PL)
    xt = jnp.pad(jnp.transpose(x3, (0, 2, 1)),
                 ((0, 0), (0, PR - hw), (0, CP - C)))                         # (B, PR, CP)
    x_t_in = xt.reshape(S, G * PR, CP)                                        # (S, G*PR, CP)

    # -- fused QKV weight: bias folded in as the "ones" input channel C,
    #    q block pre-scaled, head-major column layout [head][q|k|v][d pad 128]
    wq = p['Wqkv'].reshape(3, nh, hd, C)
    bq = p['bqkv'].reshape(3, nh, hd)
    w_aug = jnp.concatenate([wq, bq[..., None]], axis=-1)                     # (3, nh, hd, C+1)
    w_aug = w_aug * jnp.array([scale, 1.0, 1.0], f32).reshape(3, 1, 1, 1)
    w_aug = jnp.pad(w_aug, ((0, 0), (0, 0), (0, PL - hd), (0, CP - C - 1)))
    wqkv_in = jnp.transpose(w_aug, (3, 1, 0, 2)).reshape(CP, nh * 3 * PL).astype(bf16)

    # relative bias padded with -1e30 so padded head_dim lanes get softmax weight 0
    rb = p['relb'].reshape(nh, kk)
    rbias_in = jnp.pad(rb, ((0, 0), (0, PL - kk)),
                       constant_values=NEG_INF).reshape(1, nh * PL).astype(f32)

    # fused projection weight: both heads concatenated along the contraction axis,
    # zero columns on padded positions, zero rows on padded output channels
    wp = p['Wproj'].reshape(C, nh, hw)
    wcat_in = jnp.pad(wp, ((0, CP - C), (0, 0), (0, PR - hw))
                      ).reshape(CP, nh * PR).astype(bf16)                     # (CP, nh*PR)

    # MLP weights: b1 folded in via the "ones" channel, hidden padded to HP
    w1_aug = jnp.concatenate([p['W1'], p['b1'][:, None]], axis=1)             # (HID, C+1)
    w1_in = jnp.pad(w1_aug, ((0, HP - HIDDEN), (0, CP - C - 1))).astype(bf16)  # (HP, CP)
    w2_in = jnp.pad(p['W2'], ((0, CP - C), (0, HP - HIDDEN))).astype(bf16)     # (CP, HP)

    # small per-channel params packed (fewer DMA descriptors); the pad channel C
    # carries beta == 1 / gamma == 0 so it acts as the bias "ones" channel.
    def col(v, ones_at_c=False):
        out = jnp.zeros((CP,), f32).at[:C].set(v.astype(f32))
        if ones_at_c:
            out = out.at[C].set(1.0)
        return out
    cpack_in = jnp.stack([col(p['bproj']), col(p['g2']),
                          col(p['be2'], ones_at_c=True), col(p['b2'])], axis=1)  # (CP, 4)
    lnrow_in = jnp.stack([col(p['g1']), col(p['be1'], ones_at_c=True)], axis=0)  # (2, CP)

    params = [wqkv_in, rbias_in, wcat_in, w1_in, w2_in, cpack_in, lnrow_in]
    in_specs = [pl.BlockSpec((1, CP, G * PL), lambda s: (s, 0, 0)),
                pl.BlockSpec((1, G * PR, CP), lambda s: (s, 0, 0))]
    in_specs += [_full_spec(a) for a in params]

    kernel = functools.partial(nat_layer_kernel, n_heads=nh, n_fold=G,
                               inv_c=1.0 / C)
    out = pl.pallas_call(
        kernel,
        out_shape=jax.ShapeDtypeStruct((S, CP, G * PL), f32),
        grid_spec=pltpu.PrefetchScalarGridSpec(
            num_scalar_prefetch=0,
            grid=(S,),
            in_specs=in_specs,
            out_specs=pl.BlockSpec((1, CP, G * PL), lambda s: (s, 0, 0)),
        ),
        compiler_params=pltpu.CompilerParams(
            dimension_semantics=("parallel",),
        ),
    )(x_c_in, x_t_in, *params)

    out = (out.reshape(S, CP, G, PL).transpose(0, 2, 1, 3)
              .reshape(Bx, CP, PL)[:, :C, :hw])
    return out.reshape(Bx, C, Hx, Wx)


# -------------------------- pure-JAX reference (torch semantics) -------------
def nat_layer_reference(x, p):
    Bx, C, Hx, Wx = x.shape
    hw = Hx * Wx
    nh, hd = NUM_HEADS, C // NUM_HEADS
    scale = hd ** -0.5

    def channel_ln(z, g, b):
        zt = jnp.transpose(z, (0, 2, 3, 1))
        mu = zt.mean(-1, keepdims=True)
        var = ((zt - mu) ** 2).mean(-1, keepdims=True)
        zt = (zt - mu) / jnp.sqrt(var + EPS) * g + b
        return jnp.transpose(zt, (0, 3, 1, 2))

    def conv1x1(z, w, b):
        return jnp.einsum('oc,bchw->bohw', w, z) + b[None, :, None, None]

    shortcut = x
    xn = channel_ln(x, p['g1'], p['be1'])
    qkv = conv1x1(xn, p['Wqkv'], p['bqkv'])
    qkv = qkv.reshape(Bx, 3, nh, hd, hw).transpose(1, 0, 2, 4, 3)
    q, k, v = qkv[0] * scale, qkv[1], qkv[2]                 # (B, nh, HW, hd)
    attn = q * k + p['relb'].reshape(nh, hd)[None, :, None, :]
    attn = jax.nn.softmax(attn, axis=-1)
    out = (attn * v).reshape(Bx, C, Hx, Wx)                  # torch .view (raw reshape)
    y = conv1x1(out, p['Wproj'], p['bproj'])
    x2 = shortcut + y
    xn2 = channel_ln(x2, p['g2'], p['be2'])
    h = jax.nn.gelu(conv1x1(xn2, p['W1'], p['b1']), approximate=False)
    m = conv1x1(h, p['W2'], p['b2'])
    return x2 + m


# ----------------------------------- main ------------------------------------
if __name__ == "__main__":
    key = jax.random.PRNGKey(0)
    ks = jax.random.split(key, 10)
    side = 2 * (WINDOW // 2) + 1

    params = {
        'g1': jnp.ones((DIM,), jnp.float32),
        'be1': jnp.zeros((DIM,), jnp.float32),
        'Wqkv': 0.05 * jax.random.normal(ks[0], (3 * DIM, DIM), jnp.float32),
        'bqkv': 0.02 * jax.random.normal(ks[1], (3 * DIM,), jnp.float32),
        # trunc_normal_(std=0.02) approximated by a deterministic normal draw
        'relb': 0.02 * jax.random.normal(ks[2], (NUM_HEADS, side, side), jnp.float32),
        'Wproj': 0.05 * jax.random.normal(ks[3], (DIM, DIM), jnp.float32),
        'bproj': 0.02 * jax.random.normal(ks[4], (DIM,), jnp.float32),
        'g2': jnp.ones((DIM,), jnp.float32),
        'be2': jnp.zeros((DIM,), jnp.float32),
        'W1': 0.05 * jax.random.normal(ks[5], (HIDDEN, DIM), jnp.float32),
        'b1': 0.02 * jax.random.normal(ks[6], (HIDDEN,), jnp.float32),
        'W2': 0.05 * jax.random.normal(ks[7], (DIM, HIDDEN), jnp.float32),
        'b2': 0.02 * jax.random.normal(ks[8], (DIM,), jnp.float32),
    }
    x = jax.random.normal(ks[9], (B, DIM, H, W), jnp.float32)

    out = jax.block_until_ready(nat_layer_pallas(x, params))

    ref = nat_layer_reference(x, params)
    assert out.shape == x.shape
    max_err = float(jnp.max(jnp.abs(out - ref)))
    # tolerance covers bf16 MXU inputs + tanh-GELU + approx reciprocal (obs ~1e-3)
    if max_err > 3e-2:
        raise SystemExit(f"mismatch vs reference: max_abs_err={max_err}")
    print("KERNEL_OK")
</pallas_src>

<mosaic_0001>
module attributes {stable_mosaic.version = 11 : i64} {
  func.func @nat_layer_kernel(%arg0: i32, %arg1: memref<1x128x256xf32, #tpu.memory_space<vmem>>, %arg2: memref<1x128x128xf32, #tpu.memory_space<vmem>>, %arg3: memref<128x768xbf16, #tpu.memory_space<vmem>>, %arg4: memref<1x256xf32, #tpu.memory_space<vmem>>, %arg5: memref<128x128xbf16, #tpu.memory_space<vmem>>, %arg6: memref<400x128xbf16, #tpu.memory_space<vmem>>, %arg7: memref<128x400xbf16, #tpu.memory_space<vmem>>, %arg8: memref<128x4xf32, #tpu.memory_space<vmem>>, %arg9: memref<2x128xf32, #tpu.memory_space<vmem>>, %arg10: memref<1x128x256xf32, #tpu.memory_space<vmem>>) attributes {dimension_semantics = [#tpu.dimension_semantics<parallel>], iteration_bounds = array<i64: 1>, scalar_prefetch = 0 : i64, scratch_operands = 0 : i64, tpu.core_type = #tpu.core_type<tc>, window_params = [{transform_indices = @transform_0, window_bounds = array<i64: 1, 128, 256>}, {transform_indices = @transform_1, window_bounds = array<i64: 1, 128, 128>}, {pipeline_mode = #tpu.pipeline_mode<synchronous>, transform_indices = @transform_2, window_bounds = array<i64: 128, 768>}, {pipeline_mode = #tpu.pipeline_mode<synchronous>, transform_indices = @transform_3, window_bounds = array<i64: 1, 256>}, {pipeline_mode = #tpu.pipeline_mode<synchronous>, transform_indices = @transform_4, window_bounds = array<i64: 128, 128>}, {pipeline_mode = #tpu.pipeline_mode<synchronous>, transform_indices = @transform_5, window_bounds = array<i64: 400, 128>}, {pipeline_mode = #tpu.pipeline_mode<synchronous>, transform_indices = @transform_6, window_bounds = array<i64: 128, 400>}, {pipeline_mode = #tpu.pipeline_mode<synchronous>, transform_indices = @transform_7, window_bounds = array<i64: 128, 4>}, {pipeline_mode = #tpu.pipeline_mode<synchronous>, transform_indices = @transform_8, window_bounds = array<i64: 2, 128>}, {transform_indices = @transform_9, window_bounds = array<i64: 1, 128, 256>}]} {
    %c0 = arith.constant 0 : index
    %c0_0 = arith.constant 0 : index
    %c0_1 = arith.constant 0 : index
    %0 = vector.load %arg2[%c0, %c0_0, %c0_1] : memref<1x128x128xf32, #tpu.memory_space<vmem>>, vector<1x128x128xf32>
    %1 = vector.shape_cast %0 : vector<1x128x128xf32> to vector<128x128xf32>
    %cst = arith.constant dense<0.000000e+00> : vector<128xf32>
    %2 = vector.multi_reduction <add>, %1, %cst [1] : vector<128x128xf32> to vector<128xf32>
    %3 = vector.shape_cast %2 : vector<128xf32> to vector<128x1xf32>
    %cst_2 = arith.constant 0.0102040814 : f32
    %4 = vector.broadcast %cst_2 : f32 to vector<128x1xf32>
    %5 = arith.mulf %3, %4 : vector<128x1xf32>
    %6 = arith.mulf %1, %1 : vector<128x128xf32>
    %cst_3 = arith.constant dense<0.000000e+00> : vector<128xf32>
    %7 = vector.multi_reduction <add>, %6, %cst_3 [1] : vector<128x128xf32> to vector<128xf32>
    %8 = vector.shape_cast %7 : vector<128xf32> to vector<128x1xf32>
    %cst_4 = arith.constant 0.0102040814 : f32
    %9 = vector.broadcast %cst_4 : f32 to vector<128x1xf32>
    %10 = arith.mulf %8, %9 : vector<128x1xf32>
    %11 = arith.mulf %5, %5 : vector<128x1xf32>
    %12 = arith.subf %10, %11 : vector<128x1xf32>
    %c0_5 = arith.constant 0 : index
    %c0_6 = arith.constant 0 : index
    %13 = vector.load %arg9[%c0_5, %c0_6] : memref<2x128xf32, #tpu.memory_space<vmem>>, vector<1x128xf32>
    %c1 = arith.constant 1 : index
    %c0_7 = arith.constant 0 : index
    %14 = vector.load %arg9[%c1, %c0_7] : memref<2x128xf32, #tpu.memory_space<vmem>>, vector<1x128xf32>
    %15 = vector.broadcast %5 : vector<128x1xf32> to vector<128x128xf32>
    %16 = arith.subf %1, %15 : vector<128x128xf32>
    %cst_8 = arith.constant 9.99999974E-6 : f32
    %17 = vector.broadcast %cst_8 : f32 to vector<128x1xf32>
    %18 = arith.addf %12, %17 : vector<128x1xf32>
    %19 = math.rsqrt %18 : vector<128x1xf32>
    %20 = vector.broadcast %19 : vector<128x1xf32> to vector<128x128xf32>
    %21 = arith.mulf %16, %20 : vector<128x128xf32>
    %22 = vector.broadcast %13 : vector<1x128xf32> to vector<128x128xf32>
    %23 = arith.mulf %21, %22 : vector<128x128xf32>
    %24 = vector.broadcast %14 : vector<1x128xf32> to vector<128x128xf32>
    %25 = arith.addf %23, %24 : vector<128x128xf32>
    %26 = arith.truncf %25 : vector<128x128xf32> to vector<128x128xbf16>
    %c0_9 = arith.constant 0 : index
    %c0_10 = arith.constant 0 : index
    %27 = vector.load %arg3[%c0_9, %c0_10] : memref<128x768xbf16, #tpu.memory_space<vmem>>, vector<128x384xbf16>
    %cst_11 = arith.constant dense<0.000000e+00> : vector<128x384xf32>
    %28 = tpu.matmul %26, %27, %cst_11 {dimension_numbers = #tpu.dot_dimension_numbers<[1], [0], [0], [1], [0, 0, 1, 1], [], []>} : vector<128x128xbf16>, vector<128x384xbf16>, vector<128x384xf32> -> vector<128x384xf32>
    %29 = vector.extract_strided_slice %28 {offsets = [0, 0], sizes = [128, 128], strides = [1, 1]} : vector<128x384xf32> to vector<128x128xf32>
    %30 = vector.extract_strided_slice %28 {offsets = [0, 128], sizes = [128, 128], strides = [1, 1]} : vector<128x384xf32> to vector<128x128xf32>
    %31 = vector.extract_strided_slice %28 {offsets = [0, 256], sizes = [128, 128], strides = [1, 1]} : vector<128x384xf32> to vector<128x128xf32>
    %32 = arith.mulf %29, %30 : vector<128x128xf32>
    %c0_12 = arith.constant 0 : index
    %c0_13 = arith.constant 0 : index
    %33 = vector.load %arg4[%c0_12, %c0_13] : memref<1x256xf32, #tpu.memory_space<vmem>>, vector<1x128xf32>
    %34 = vector.broadcast %33 : vector<1x128xf32> to vector<128x128xf32>
    %35 = arith.addf %32, %34 : vector<128x128xf32>
    %cst_14 = arith.constant dense<0xFF800000> : vector<128xf32>
    %36 = vector.multi_reduction <maximumf>, %35, %cst_14 [1] : vector<128x128xf32> to vector<128xf32>
    %37 = vector.shape_cast %36 : vector<128xf32> to vector<128x1xf32>
    %38 = vector.broadcast %37 : vector<128x1xf32> to vector<128x128xf32>
    %39 = arith.subf %35, %38 : vector<128x128xf32>
    %40 = math.exp %39 : vector<128x128xf32>
    %cst_15 = arith.constant dense<0.000000e+00> : vector<128xf32>
    %41 = vector.multi_reduction <add>, %40, %cst_15 [1] : vector<128x128xf32> to vector<128xf32>
    %42 = vector.shape_cast %41 : vector<128xf32> to vector<128x1xf32>
    %43 = tpu.reciprocal %42 {approx = true} : vector<128x1xf32> -> vector<128x1xf32>
    %44 = vector.broadcast %43 : vector<128x1xf32> to vector<128x128xf32>
    %45 = arith.mulf %40, %44 : vector<128x128xf32>
    %46 = arith.mulf %45, %31 : vector<128x128xf32>
    %47 = arith.truncf %46 : vector<128x128xf32> to vector<128x128xbf16>
    %c0_16 = arith.constant 0 : index
    %c384 = arith.constant 384 : index
    %48 = vector.load %arg3[%c0_16, %c384] : memref<128x768xbf16, #tpu.memory_space<vmem>>, vector<128x384xbf16>
    %cst_17 = arith.constant dense<0.000000e+00> : vector<128x384xf32>
    %49 = tpu.matmul %26, %48, %cst_17 {dimension_numbers = #tpu.dot_dimension_numbers<[1], [0], [0], [1], [0, 0, 1, 1], [], []>} : vector<128x128xbf16>, vector<128x384xbf16>, vector<128x384xf32> -> vector<128x384xf32>
    %50 = vector.extract_strided_slice %49 {offsets = [0, 0], sizes = [128, 128], strides = [1, 1]} : vector<128x384xf32> to vector<128x128xf32>
    %51 = vector.extract_strided_slice %49 {offsets = [0, 128], sizes = [128, 128], strides = [1, 1]} : vector<128x384xf32> to vector<128x128xf32>
    %52 = vector.extract_strided_slice %49 {offsets = [0, 256], sizes = [128, 128], strides = [1, 1]} : vector<128x384xf32> to vector<128x128xf32>
    %53 = arith.mulf %50, %51 : vector<128x128xf32>
    %c0_18 = arith.constant 0 : index
    %c128 = arith.constant 128 : index
    %54 = vector.load %arg4[%c0_18, %c128] : memref<1x256xf32, #tpu.memory_space<vmem>>, vector<1x128xf32>
    %55 = vector.broadcast %54 : vector<1x128xf32> to vector<128x128xf32>
    %56 = arith.addf %53, %55 : vector<128x128xf32>
    %cst_19 = arith.constant dense<0xFF800000> : vector<128xf32>
    %57 = vector.multi_reduction <maximumf>, %56, %cst_19 [1] : vector<128x128xf32> to vector<128xf32>
    %58 = vector.shape_cast %57 : vector<128xf32> to vector<128x1xf32>
    %59 = vector.broadcast %58 : vector<128x1xf32> to vector<128x128xf32>
    %60 = arith.subf %56, %59 : vector<128x128xf32>
    %61 = math.exp %60 : vector<128x128xf32>
    %cst_20 = arith.constant dense<0.000000e+00> : vector<128xf32>
    %62 = vector.multi_reduction <add>, %61, %cst_20 [1] : vector<128x128xf32> to vector<128xf32>
    %63 = vector.shape_cast %62 : vector<128xf32> to vector<128x1xf32>
    %64 = tpu.reciprocal %63 {approx = true} : vector<128x1xf32> -> vector<128x1xf32>
    %65 = vector.broadcast %64 : vector<128x1xf32> to vector<128x128xf32>
    %66 = arith.mulf %61, %65 : vector<128x128xf32>
    %67 = arith.mulf %66, %52 : vector<128x128xf32>
    %68 = arith.truncf %67 : vector<128x128xf32> to vector<128x128xbf16>
    %c0_21 = arith.constant 0 : index
    %c0_22 = arith.constant 0 : index
    %69 = vector.load %arg8[%c0_21, %c0_22] : memref<128x4xf32, #tpu.memory_space<vmem>>, vector<128x1xf32>
    %c0_23 = arith.constant 0 : index
    %c1_24 = arith.constant 1 : index
    %70 = vector.load %arg8[%c0_23, %c1_24] : memref<128x4xf32, #tpu.memory_space<vmem>>, vector<128x1xf32>
    %c0_25 = arith.constant 0 : index
    %c2 = arith.constant 2 : index
    %71 = vector.load %arg8[%c0_25, %c2] : memref<128x4xf32, #tpu.memory_space<vmem>>, vector<128x1xf32>
    %c0_26 = arith.constant 0 : index
    %c3 = arith.constant 3 : index
    %72 = vector.load %arg8[%c0_26, %c3] : memref<128x4xf32, #tpu.memory_space<vmem>>, vector<128x1xf32>
    %c0_27 = arith.constant 0 : index
    %c0_28 = arith.constant 0 : index
    %c0_29 = arith.constant 0 : index
    %73 = vector.load %arg1[%c0_27, %c0_28, %c0_29] : memref<1x128x256xf32, #tpu.memory_space<vmem>>, vector<1x128x256xf32>
    %74 = vector.shape_cast %73 : vector<1x128x256xf32> to vector<128x256xf32>
    %c0_30 = arith.constant 0 : index
    %c0_31 = arith.constant 0 : index
    %75 = vector.load %arg5[%c0_30, %c0_31] : memref<128x128xbf16, #tpu.memory_space<vmem>>, vector<128x128xbf16>
    %76 = vector.extract_strided_slice %47 {offsets = [0, 0], sizes = [64, 128], strides = [1, 1]} : vector<128x128xbf16> to vector<64x128xbf16>
    %77 = vector.extract_strided_slice %68 {offsets = [0, 0], sizes = [64, 128], strides = [1, 1]} : vector<128x128xbf16> to vector<64x128xbf16>
    %78 = tpu.concatenate %76, %77 in 0 : vector<64x128xbf16>, vector<64x128xbf16> -> vector<128x128xbf16>
    %cst_32 = arith.constant dense<0.000000e+00> : vector<128x128xf32>
    %79 = tpu.matmul %75, %78, %cst_32 {dimension_numbers = #tpu.dot_dimension_numbers<[1], [0], [0], [1], [0, 0, 1, 1], [], []>} : vector<128x128xbf16>, vector<128x128xbf16>, vector<128x128xf32> -> vector<128x128xf32>
    %80 = vector.extract_strided_slice %74 {offsets = [0, 0], sizes = [128, 128], strides = [1, 1]} : vector<128x256xf32> to vector<128x128xf32>
    %81 = arith.addf %80, %79 : vector<128x128xf32>
    %82 = vector.broadcast %69 : vector<128x1xf32> to vector<128x128xf32>
    %83 = arith.addf %81, %82 : vector<128x128xf32>
    %84 = vector.extract_strided_slice %47 {offsets = [64, 0], sizes = [64, 128], strides = [1, 1]} : vector<128x128xbf16> to vector<64x128xbf16>
    %85 = vector.extract_strided_slice %68 {offsets = [64, 0], sizes = [64, 128], strides = [1, 1]} : vector<128x128xbf16> to vector<64x128xbf16>
    %86 = tpu.concatenate %84, %85 in 0 : vector<64x128xbf16>, vector<64x128xbf16> -> vector<128x128xbf16>
    %cst_33 = arith.constant dense<0.000000e+00> : vector<128x128xf32>
    %87 = tpu.matmul %75, %86, %cst_33 {dimension_numbers = #tpu.dot_dimension_numbers<[1], [0], [0], [1], [0, 0, 1, 1], [], []>} : vector<128x128xbf16>, vector<128x128xbf16>, vector<128x128xf32> -> vector<128x128xf32>
    %88 = vector.extract_strided_slice %74 {offsets = [0, 128], sizes = [128, 128], strides = [1, 1]} : vector<128x256xf32> to vector<128x128xf32>
    %89 = arith.addf %88, %87 : vector<128x128xf32>
    %90 = vector.broadcast %69 : vector<128x1xf32> to vector<128x128xf32>
    %91 = arith.addf %89, %90 : vector<128x128xf32>
    %92 = tpu.concatenate %83, %91 in 1 : vector<128x128xf32>, vector<128x128xf32> -> vector<128x256xf32>
    %cst_34 = arith.constant dense<0.000000e+00> : vector<256xf32>
    %93 = vector.multi_reduction <add>, %92, %cst_34 [0] : vector<128x256xf32> to vector<256xf32>
    %94 = vector.shape_cast %93 : vector<256xf32> to vector<1x256xf32>
    %cst_35 = arith.constant 0.0102040814 : f32
    %95 = vector.broadcast %cst_35 : f32 to vector<1x256xf32>
    %96 = arith.mulf %94, %95 : vector<1x256xf32>
    %97 = arith.mulf %92, %92 : vector<128x256xf32>
    %cst_36 = arith.constant dense<0.000000e+00> : vector<256xf32>
    %98 = vector.multi_reduction <add>, %97, %cst_36 [0] : vector<128x256xf32> to vector<256xf32>
    %99 = vector.shape_cast %98 : vector<256xf32> to vector<1x256xf32>
    %cst_37 = arith.constant 0.0102040814 : f32
    %100 = vector.broadcast %cst_37 : f32 to vector<1x256xf32>
    %101 = arith.mulf %99, %100 : vector<1x256xf32>
    %102 = arith.mulf %96, %96 : vector<1x256xf32>
    %103 = arith.subf %101, %102 : vector<1x256xf32>
    %104 = vector.broadcast %96 : vector<1x256xf32> to vector<128x256xf32>
    %105 = arith.subf %92, %104 : vector<128x256xf32>
    %cst_38 = arith.constant 9.99999974E-6 : f32
    %106 = vector.broadcast %cst_38 : f32 to vector<1x256xf32>
    %107 = arith.addf %103, %106 : vector<1x256xf32>
    %108 = math.rsqrt %107 : vector<1x256xf32>
    %109 = vector.broadcast %108 : vector<1x256xf32> to vector<128x256xf32>
    %110 = arith.mulf %105, %109 : vector<128x256xf32>
    %111 = vector.broadcast %70 : vector<128x1xf32> to vector<128x256xf32>
    %112 = arith.mulf %110, %111 : vector<128x256xf32>
    %113 = vector.broadcast %71 : vector<128x1xf32> to vector<128x256xf32>
    %114 = arith.addf %112, %113 : vector<128x256xf32>
    %115 = arith.truncf %114 : vector<128x256xf32> to vector<128x256xbf16>
    %c0_39 = arith.constant 0 : index
    %c0_40 = arith.constant 0 : index
    %116 = vector.load %arg6[%c0_39, %c0_40] : memref<400x128xbf16, #tpu.memory_space<vmem>>, vector<400x128xbf16>
    %cst_41 = arith.constant dense<0.000000e+00> : vector<400x256xf32>
    %117 = tpu.matmul %116, %115, %cst_41 {dimension_numbers = #tpu.dot_dimension_numbers<[1], [0], [0], [1], [0, 0, 1, 1], [], []>} : vector<400x128xbf16>, vector<128x256xbf16>, vector<400x256xf32> -> vector<400x256xf32>
    %cst_42 = arith.constant 5.000000e-01 : f32
    %118 = vector.broadcast %cst_42 : f32 to vector<400x256xf32>
    %119 = arith.mulf %118, %117 : vector<400x256xf32>
    %cst_43 = arith.constant 4.471500e-02 : f32
    %120 = vector.broadcast %cst_43 : f32 to vector<400x256xf32>
    %121 = arith.mulf %120, %117 : vector<400x256xf32>
    %122 = arith.mulf %121, %117 : vector<400x256xf32>
    %123 = arith.mulf %122, %117 : vector<400x256xf32>
    %124 = arith.addf %117, %123 : vector<400x256xf32>
    %cst_44 = arith.constant 0.797884583 : f32
    %125 = vector.broadcast %cst_44 : f32 to vector<400x256xf32>
    %126 = arith.mulf %125, %124 : vector<400x256xf32>
    %127 = math.tanh %126 : vector<400x256xf32>
    %cst_45 = arith.constant 1.000000e+00 : f32
    %128 = vector.broadcast %cst_45 : f32 to vector<400x256xf32>
    %129 = arith.addf %128, %127 : vector<400x256xf32>
    %130 = arith.mulf %119, %129 : vector<400x256xf32>
    %c0_46 = arith.constant 0 : index
    %c0_47 = arith.constant 0 : index
    %131 = vector.load %arg7[%c0_46, %c0_47] : memref<128x400xbf16, #tpu.memory_space<vmem>>, vector<128x400xbf16>
    %132 = arith.truncf %130 : vector<400x256xf32> to vector<400x256xbf16>
    %cst_48 = arith.constant dense<0.000000e+00> : vector<128x256xf32>
    %133 = tpu.matmul %131, %132, %cst_48 {dimension_numbers = #tpu.dot_dimension_numbers<[1], [0], [0], [1], [0, 0, 1, 1], [], []>} : vector<128x400xbf16>, vector<400x256xbf16>, vector<128x256xf32> -> vector<128x256xf32>
    %134 = vector.broadcast %72 : vector<128x1xf32> to vector<128x256xf32>
    %135 = arith.addf %133, %134 : vector<128x256xf32>
    %136 = arith.addf %92, %135 : vector<128x256xf32>
    %c0_49 = arith.constant 0 : index
    %c0_50 = arith.constant 0 : index
    %c0_51 = arith.constant 0 : index
    %137 = vector.load %arg10[%c0_49, %c0_50, %c0_51] : memref<1x128x256xf32, #tpu.memory_space<vmem>>, vector<1x128x256xf32>
    %138 = vector.shape_cast %137 : vector<1x128x256xf32> to vector<128x256xf32>
    %139 = vector.shape_cast %136 : vector<128x256xf32> to vector<1x128x256xf32>
    tpu.vector_store %arg10[%c0_49, %c0_50, %c0_51], %139 {strides = array<i32>} : memref<1x128x256xf32, #tpu.memory_space<vmem>>, vector<1x128x256xf32>,
    return
  }
  func.func @transform_0(%arg0: i32) -> (i32, i32, i32) {
    %c0_i32 = arith.constant 0 : i32
    %c0_i32_0 = arith.constant 0 : i32
    %c0_i32_1 = arith.constant 0 : i32
    return %arg0, %c0_i32, %c0_i32_0 : i32, i32, i32
  }
  func.func @transform_1(%arg0: i32) -> (i32, i32, i32) {
    %c0_i32 = arith.constant 0 : i32
    %c0_i32_0 = arith.constant 0 : i32
    %c0_i32_1 = arith.constant 0 : i32
    return %arg0, %c0_i32, %c0_i32_0 : i32, i32, i32
  }
  func.func @transform_2(%arg0: i32) -> (i32, i32) {
    %c0_i32 = arith.constant 0 : i32
    %c0_i32_0 = arith.constant 0 : i32
    %c0_i32_1 = arith.constant 0 : i32
    return %c0_i32, %c0_i32_0 : i32, i32
  }
  func.func @transform_3(%arg0: i32) -> (i32, i32) {
    %c0_i32 = arith.constant 0 : i32
    %c0_i32_0 = arith.constant 0 : i32
    %c0_i32_1 = arith.constant 0 : i32
    return %c0_i32, %c0_i32_0 : i32, i32
  }
  func.func @transform_4(%arg0: i32) -> (i32, i32) {
    %c0_i32 = arith.constant 0 : i32
    %c0_i32_0 = arith.constant 0 : i32
    %c0_i32_1 = arith.constant 0 : i32
    return %c0_i32, %c0_i32_0 : i32, i32
  }
  func.func @transform_5(%arg0: i32) -> (i32, i32) {
    %c0_i32 = arith.constant 0 : i32
    %c0_i32_0 = arith.constant 0 : i32
    %c0_i32_1 = arith.constant 0 : i32
    return %c0_i32, %c0_i32_0 : i32, i32
  }
  func.func @transform_6(%arg0: i32) -> (i32, i32) {
    %c0_i32 = arith.constant 0 : i32
    %c0_i32_0 = arith.constant 0 : i32
    %c0_i32_1 = arith.constant 0 : i32
    return %c0_i32, %c0_i32_0 : i32, i32
  }
  func.func @transform_7(%arg0: i32) -> (i32, i32) {
    %c0_i32 = arith.constant 0 : i32
    %c0_i32_0 = arith.constant 0 : i32
    %c0_i32_1 = arith.constant 0 : i32
    return %c0_i32, %c0_i32_0 : i32, i32
  }
  func.func @transform_8(%arg0: i32) -> (i32, i32) {
    %c0_i32 = arith.constant 0 : i32
    %c0_i32_0 = arith.constant 0 : i32
    %c0_i32_1 = arith.constant 0 : i32
    return %c0_i32, %c0_i32_0 : i32, i32
  }
  func.func @transform_9(%arg0: i32) -> (i32, i32, i32) {
    %c0_i32 = arith.constant 0 : i32
    %c0_i32_0 = arith.constant 0 : i32
    %c0_i32_1 = arith.constant 0 : i32
    return %arg0, %c0_i32, %c0_i32_0 : i32, i32, i32
  }
}

</mosaic_0001>

<llo_original>
// kernel: tpu_custom_call.1
$region0: #{tpu_custom_call.1}
  #allocation0 [shape = 'u32[]', space=smem, size = 0x4, offset = 0x4, fixed_abs, tag = 'smem constant byte address 0x4 - core index']
  #allocation1 [shape = 'u32[144,128]{1,0:T(1,128)}', space=vmem, size = 0x12000, scoped, tag = 'internal scratch']
  %s0 = inlined_call_operand.hbm [shape: f32[1,128,256], index: 0, kind: input, shape index: {}]
  %s1 = inlined_call_operand.hbm [shape: f32[1,128,128], index: 1, kind: input, shape index: {}]
  %s2 = inlined_call_operand.vmem [shape: bf16[128,768], index: 2, kind: input, shape index: {}]
  %s3 = inlined_call_operand.vmem [shape: f32[1,256], index: 3, kind: input, shape index: {}]
  %s4 = inlined_call_operand.hbm [shape: bf16[128,128], index: 4, kind: input, shape index: {}]
  %s5 = inlined_call_operand.vmem [shape: bf16[400,128], index: 5, kind: input, shape index: {}]
  %s6 = inlined_call_operand.vmem [shape: bf16[128,400], index: 6, kind: input, shape index: {}]
  %s7 = inlined_call_operand.vmem [shape: f32[128,4], index: 7, kind: input, shape index: {}]
  %s8 = inlined_call_operand.vmem [shape: f32[2,128], index: 8, kind: input, shape index: {}]
  %s9 = inlined_call_operand.hbm [shape: f32[1,128,256], index: 9, kind: output, shape index: {}]
  %s10 = sld [smem:[#allocation0]]
  $region58: #{tpu_custom_call.1} parent=0
    _
  %s12 = ssub.s32 1, %s10
  %s13 = scalar_select 0, %s12, %s10
  $region1: #{tpu_custom_call.1} parent=0
    #allocation2 [shape = 'u8[131072]{0}', space=vmem, size = 0x20000, scoped, tag = 'input window, operand 0, single buffered']
    #allocation3 [shape = 's32[1]{0}', space=sflag, size = 0x4, scoped, tag = 'scoped memory for tpu_custom_call.1']
    #allocation4 [shape = 's32[1]{0}', space=sflag, size = 0x4, scoped, tag = 'scoped memory for tpu_custom_call.1']
    #allocation5 [shape = 'u8[65536]{0}', space=vmem, size = 0x10000, scoped, tag = 'input window, operand 1, single buffered']
    #allocation6 [shape = 's32[1]{0}', space=sflag, size = 0x4, scoped, tag = 'scoped memory for tpu_custom_call.1']
    #allocation7 [shape = 'u8[32768]{0}', space=vmem, size = 0x8000, scoped, tag = 'input window, operand 4, single buffered']
    #allocation8 [shape = 'u8[131072]{0}', space=vmem, size = 0x20000, scoped, tag = 'output window, operand 0, single buffered']
    %14 = vsyncpa [#allocation3], 0
    %15 = vsyncpa [#allocation6], 0
    %16 = vsyncpa [#allocation4], 0
    // Predicated region
    $region2: #{tpu_custom_call.1} parent=1 // pred_check
      _
    $region3: #{tpu_custom_call.1} parent=1 // pred_check_branch
      %18 = sbr.rel (0) target = $region5
    $region4: #{tpu_custom_call.1} parent=1 // pred_region
      %s20 = ssub.s32 4096, 4096
      %21 = vsyncadd [#allocation3], %s20
      %s22 = sshll.u32 [#allocation2], 4
      %s23 = int_to_ptr.vmem [resolvable:$true] %s22
      %28 = dma.hbm_to_vmem [thread:$0]  %s0, 4096, %s23, [#allocation3], 256, 256, 16
    $region5: #{tpu_custom_call.1} parent=1 // pred_fallthru
      _
    // Predicated region
    $region6: #{tpu_custom_call.1} parent=1 // pred_check
      _
    $region7: #{tpu_custom_call.1} parent=1 // pred_check_branch
      %30 = sbr.rel (0) target = $region9
    $region8: #{tpu_custom_call.1} parent=1 // pred_region
      %s32 = ssub.s32 2048, 2048
      %33 = vsyncadd [#allocation6], %s32
      %s34 = sshll.u32 [#allocation5], 4
      %s35 = int_to_ptr.vmem [resolvable:$true] %s34
      %40 = dma.hbm_to_vmem [thread:$0]  %s1, 2048, %s35, [#allocation6], 128, 128, 8
    $region9: #{tpu_custom_call.1} parent=1 // pred_fallthru
      _
    // Predicated region
    $region10: #{tpu_custom_call.1} parent=1 // pred_check
      _
    $region11: #{tpu_custom_call.1} parent=1 // pred_check_branch
      %42 = sbr.rel (0) target = $region13
    $region12: #{tpu_custom_call.1} parent=1 // pred_region
      _
    $region13: #{tpu_custom_call.1} parent=1 // pred_fallthru
      _
    // Predicated region
    $region14: #{tpu_custom_call.1} parent=1 // pred_check
      _
    $region15: #{tpu_custom_call.1} parent=1 // pred_check_branch
      %44 = sbr.rel (0) target = $region17
    $region16: #{tpu_custom_call.1} parent=1 // pred_region
      _
    $region17: #{tpu_custom_call.1} parent=1 // pred_fallthru
      _
    // Predicated region
    $region18: #{tpu_custom_call.1} parent=1 // pred_check
      _
    $region19: #{tpu_custom_call.1} parent=1 // pred_check_branch
      %46 = sbr.rel (0) target = $region21
    $region20: #{tpu_custom_call.1} parent=1 // pred_region
      %s48 = ssub.s32 1024, 1024
      %49 = vsyncadd [#allocation6], %s48
      %s50 = sshll.u32 [#allocation7], 4
      %s51 = int_to_ptr.vmem [resolvable:$true] %s50
      %56 = dma.hbm_to_vmem [thread:$0]  %s4, 1024, %s51, [#allocation6], 64, 64, 4
    $region21: #{tpu_custom_call.1} parent=1 // pred_fallthru
      _
    // Predicated region
    $region22: #{tpu_custom_call.1} parent=1 // pred_check
      _
    $region23: #{tpu_custom_call.1} parent=1 // pred_check_branch
      %58 = sbr.rel (0) target = $region25
    $region24: #{tpu_custom_call.1} parent=1 // pred_region
      _
    $region25: #{tpu_custom_call.1} parent=1 // pred_fallthru
      _
    // Predicated region
    $region26: #{tpu_custom_call.1} parent=1 // pred_check
      _
    $region27: #{tpu_custom_call.1} parent=1 // pred_check_branch
      %60 = sbr.rel (0) target = $region29
    $region28: #{tpu_custom_call.1} parent=1 // pred_region
      _
    $region29: #{tpu_custom_call.1} parent=1 // pred_fallthru
      _
    // Predicated region
    $region30: #{tpu_custom_call.1} parent=1 // pred_check
      _
    $region31: #{tpu_custom_call.1} parent=1 // pred_check_branch
      %62 = sbr.rel (0) target = $region33
    $region32: #{tpu_custom_call.1} parent=1 // pred_region
      _
    $region33: #{tpu_custom_call.1} parent=1 // pred_fallthru
      _
    // Predicated region
    $region34: #{tpu_custom_call.1} parent=1 // pred_check
      _
    $region35: #{tpu_custom_call.1} parent=1 // pred_check_branch
      %64 = sbr.rel (0) target = $region37
    $region36: #{tpu_custom_call.1} parent=1 // pred_region
      _
    $region37: #{tpu_custom_call.1} parent=1 // pred_fallthru
      _
    // Predicated region
    $region38: #{tpu_custom_call.1} parent=1 // pred_check
      _
    $region39: #{tpu_custom_call.1} parent=1 // pred_check_branch
      %66 = sbr.rel (0) target = $region41
    $region40: #{tpu_custom_call.1} parent=1 // pred_region
      %67 = dma.done [#allocation3], 4096
    $region41: #{tpu_custom_call.1} parent=1 // pred_fallthru
      _
    // Predicated region
    $region42: #{tpu_custom_call.1} parent=1 // pred_check
      _
    $region43: #{tpu_custom_call.1} parent=1 // pred_check_branch
      %69 = sbr.rel (0) target = $region45
    $region44: #{tpu_custom_call.1} parent=1 // pred_region
      %70 = dma.done [#allocation6], 2048
    $region45: #{tpu_custom_call.1} parent=1 // pred_fallthru
      _
    // Predicated region
    $region46: #{tpu_custom_call.1} parent=1 // pred_check
      _
    $region47: #{tpu_custom_call.1} parent=1 // pred_check_branch
      %72 = sbr.rel (0) target = $region49
    $region48: #{tpu_custom_call.1} parent=1 // pred_region
      %73 = dma.done [#allocation6], 1024
    $region49: #{tpu_custom_call.1} parent=1 // pred_fallthru
      _
    %v75 = vld [vmem:[#allocation5] sm:$0xff]
    %v76 = vld [vmem:[#allocation5 + $0x8] sm:$0xff]
    %v77 = vld [vmem:[#allocation5 + $0x10] sm:$0xff]
    %v78 = vld [vmem:[#allocation5 + $0x18] sm:$0xff]
    %v79 = vld [vmem:[#allocation5 + $0x20] sm:$0xff]
    %v80 = vld [vmem:[#allocation5 + $0x28] sm:$0xff]
    %v81 = vld [vmem:[#allocation5 + $0x30] sm:$0xff]
    %v82 = vld [vmem:[#allocation5 + $0x38] sm:$0xff]
    %v83 = vld [vmem:[#allocation5 + $0x40] sm:$0xff]
    %v84 = vld [vmem:[#allocation5 + $0x48] sm:$0xff]
    %v85 = vld [vmem:[#allocation5 + $0x50] sm:$0xff]
    %v86 = vld [vmem:[#allocation5 + $0x58] sm:$0xff]
    %v87 = vld [vmem:[#allocation5 + $0x60] sm:$0xff]
    %v88 = vld [vmem:[#allocation5 + $0x68] sm:$0xff]
    %v89 = vld [vmem:[#allocation5 + $0x70] sm:$0xff]
    %v90 = vld [vmem:[#allocation5 + $0x78] sm:$0xff]
    %91 = vadd.xlane.f32.xlu0 %v75
    %v92 = vpop.xlane.xlu0 %91
    %93 = vadd.xlane.f32.xlu0 %v76
    %v94 = vpop.xlane.xlu0 %93
    %95 = vadd.xlane.f32.xlu0 %v77
    %v96 = vpop.xlane.xlu0 %95
    %97 = vadd.xlane.f32.xlu0 %v78
    %v98 = vpop.xlane.xlu0 %97
    %99 = vadd.xlane.f32.xlu0 %v79
    %v100 = vpop.xlane.xlu0 %99
    %101 = vadd.xlane.f32.xlu0 %v80
    %v102 = vpop.xlane.xlu0 %101
    %103 = vadd.xlane.f32.xlu0 %v81
    %v104 = vpop.xlane.xlu0 %103
    %105 = vadd.xlane.f32.xlu0 %v82
    %v106 = vpop.xlane.xlu0 %105
    %107 = vadd.xlane.f32.xlu0 %v83
    %v108 = vpop.xlane.xlu0 %107
    %109 = vadd.xlane.f32.xlu0 %v84
    %v110 = vpop.xlane.xlu0 %109
    %111 = vadd.xlane.f32.xlu0 %v85
    %v112 = vpop.xlane.xlu0 %111
    %113 = vadd.xlane.f32.xlu0 %v86
    %v114 = vpop.xlane.xlu0 %113
    %115 = vadd.xlane.f32.xlu0 %v87
    %v116 = vpop.xlane.xlu0 %115
    %117 = vadd.xlane.f32.xlu0 %v88
    %v118 = vpop.xlane.xlu0 %117
    %119 = vadd.xlane.f32.xlu0 %v89
    %v120 = vpop.xlane.xlu0 %119
    %121 = vadd.xlane.f32.xlu0 %v90
    %v122 = vpop.xlane.xlu0 %121
    %v123 = vmul.f32 %v92, 0.010204081
    %v124 = vmul.f32 %v94, 0.010204081
    %v125 = vmul.f32 %v96, 0.010204081
    %v126 = vmul.f32 %v98, 0.010204081
    %v127 = vmul.f32 %v100, 0.010204081
    %v128 = vmul.f32 %v102, 0.010204081
    %v129 = vmul.f32 %v104, 0.010204081
    %v130 = vmul.f32 %v106, 0.010204081
    %v131 = vmul.f32 %v108, 0.010204081
    %v132 = vmul.f32 %v110, 0.010204081
    %v133 = vmul.f32 %v112, 0.010204081
    %v134 = vmul.f32 %v114, 0.010204081
    %v135 = vmul.f32 %v116, 0.010204081
    %v136 = vmul.f32 %v118, 0.010204081
    %v137 = vmul.f32 %v120, 0.010204081
    %v138 = vmul.f32 %v122, 0.010204081
    %v139 = vmul.f32 %v75, %v75
    %v140 = vmul.f32 %v76, %v76
    %v141 = vmul.f32 %v77, %v77
    %v142 = vmul.f32 %v78, %v78
    %v143 = vmul.f32 %v79, %v79
    %v144 = vmul.f32 %v80, %v80
    %v145 = vmul.f32 %v81, %v81
    %v146 = vmul.f32 %v82, %v82
    %v147 = vmul.f32 %v83, %v83
    %v148 = vmul.f32 %v84, %v84
    %v149 = vmul.f32 %v85, %v85
    %v150 = vmul.f32 %v86, %v86
    %v151 = vmul.f32 %v87, %v87
    %v152 = vmul.f32 %v88, %v88
    %v153 = vmul.f32 %v89, %v89
    %v154 = vmul.f32 %v90, %v90
    %155 = vadd.xlane.f32.xlu0 %v139
    %v156 = vpop.xlane.xlu0 %155
    %157 = vadd.xlane.f32.xlu0 %v140
    %v158 = vpop.xlane.xlu0 %157
    %159 = vadd.xlane.f32.xlu0 %v141
    %v160 = vpop.xlane.xlu0 %159
    %161 = vadd.xlane.f32.xlu0 %v142
    %v162 = vpop.xlane.xlu0 %161
    %163 = vadd.xlane.f32.xlu0 %v143
    %v164 = vpop.xlane.xlu0 %163
    %165 = vadd.xlane.f32.xlu0 %v144
    %v166 = vpop.xlane.xlu0 %165
    %167 = vadd.xlane.f32.xlu0 %v145
    %v168 = vpop.xlane.xlu0 %167
    %169 = vadd.xlane.f32.xlu0 %v146
    %v170 = vpop.xlane.xlu0 %169
    %171 = vadd.xlane.f32.xlu0 %v147
    %v172 = vpop.xlane.xlu0 %171
    %173 = vadd.xlane.f32.xlu0 %v148
    %v174 = vpop.xlane.xlu0 %173
    %175 = vadd.xlane.f32.xlu0 %v149
    %v176 = vpop.xlane.xlu0 %175
    %177 = vadd.xlane.f32.xlu0 %v150
    %v178 = vpop.xlane.xlu0 %177
    %179 = vadd.xlane.f32.xlu0 %v151
    %v180 = vpop.xlane.xlu0 %179
    %181 = vadd.xlane.f32.xlu0 %v152
    %v182 = vpop.xlane.xlu0 %181
    %183 = vadd.xlane.f32.xlu0 %v153
    %v184 = vpop.xlane.xlu0 %183
    %185 = vadd.xlane.f32.xlu0 %v154
    %v186 = vpop.xlane.xlu0 %185
    %v187 = vmul.f32 %v156, 0.010204081
    %v188 = vmul.f32 %v158, 0.010204081
    %v189 = vmul.f32 %v160, 0.010204081
    %v190 = vmul.f32 %v162, 0.010204081
    %v191 = vmul.f32 %v164, 0.010204081
    %v192 = vmul.f32 %v166, 0.010204081
    %v193 = vmul.f32 %v168, 0.010204081
    %v194 = vmul.f32 %v170, 0.010204081
    %v195 = vmul.f32 %v172, 0.010204081
    %v196 = vmul.f32 %v174, 0.010204081
    %v197 = vmul.f32 %v176, 0.010204081
    %v198 = vmul.f32 %v178, 0.010204081
    %v199 = vmul.f32 %v180, 0.010204081
    %v200 = vmul.f32 %v182, 0.010204081
    %v201 = vmul.f32 %v184, 0.010204081
    %v202 = vmul.f32 %v186, 0.010204081
    %v203 = vmul.f32 %v123, %v123
    %v204 = vmul.f32 %v124, %v124
    %v205 = vmul.f32 %v125, %v125
    %v206 = vmul.f32 %v126, %v126
    %v207 = vmul.f32 %v127, %v127
    %v208 = vmul.f32 %v128, %v128
    %v209 = vmul.f32 %v129, %v129
    %v210 = vmul.f32 %v130, %v130
    %v211 = vmul.f32 %v131, %v131
    %v212 = vmul.f32 %v132, %v132
    %v213 = vmul.f32 %v133, %v133
    %v214 = vmul.f32 %v134, %v134
    %v215 = vmul.f32 %v135, %v135
    %v216 = vmul.f32 %v136, %v136
    %v217 = vmul.f32 %v137, %v137
    %v218 = vmul.f32 %v138, %v138
    %v219 = vsub.f32 %v187, %v203
    %v220 = vsub.f32 %v188, %v204
    %v221 = vsub.f32 %v189, %v205
    %v222 = vsub.f32 %v190, %v206
    %v223 = vsub.f32 %v191, %v207
    %v224 = vsub.f32 %v192, %v208
    %v225 = vsub.f32 %v193, %v209
    %v226 = vsub.f32 %v194, %v210
    %v227 = vsub.f32 %v195, %v211
    %v228 = vsub.f32 %v196, %v212
    %v229 = vsub.f32 %v197, %v213
    %v230 = vsub.f32 %v198, %v214
    %v231 = vsub.f32 %v199, %v215
    %v232 = vsub.f32 %v200, %v216
    %v233 = vsub.f32 %v201, %v217
    %v234 = vsub.f32 %v202, %v218
    %v235 = vld [vmem:[%s8] sm:$0x1]
    %v236 = vld [vmem:[%s8 + $0x1] sm:$0x1]
    %v237 = vsub.f32 %v75, %v123
    %v238 = vsub.f32 %v76, %v124
    %v239 = vsub.f32 %v77, %v125
    %v240 = vsub.f32 %v78, %v126
    %v241 = vsub.f32 %v79, %v127
    %v242 = vsub.f32 %v80, %v128
    %v243 = vsub.f32 %v81, %v129
    %v244 = vsub.f32 %v82, %v130
    %v245 = vsub.f32 %v83, %v131
    %v246 = vsub.f32 %v84, %v132
    %v247 = vsub.f32 %v85, %v133
    %v248 = vsub.f32 %v86, %v134
    %v249 = vsub.f32 %v87, %v135
    %v250 = vsub.f32 %v88, %v136
    %v251 = vsub.f32 %v89, %v137
    %v252 = vsub.f32 %v90, %v138
    %v253 = vadd.f32 %v219, 1e-05
    %v254 = vadd.f32 %v220, 1e-05
    %v255 = vadd.f32 %v221, 1e-05
    %v256 = vadd.f32 %v222, 1e-05
    %v257 = vadd.f32 %v223, 1e-05
    %v258 = vadd.f32 %v224, 1e-05
    %v259 = vadd.f32 %v225, 1e-05
    %v260 = vadd.f32 %v226, 1e-05
    %v261 = vadd.f32 %v227, 1e-05
    %v262 = vadd.f32 %v228, 1e-05
    %v263 = vadd.f32 %v229, 1e-05
    %v264 = vadd.f32 %v230, 1e-05
    %v265 = vadd.f32 %v231, 1e-05
    %v266 = vadd.f32 %v232, 1e-05
    %v267 = vadd.f32 %v233, 1e-05
    %v268 = vadd.f32 %v234, 1e-05
    %v269 = vrsqrt.pop %v253
    %v270 = vrsqrt.pop %v254
    %v271 = vrsqrt.pop %v255
    %v272 = vrsqrt.pop %v256
    %v273 = vrsqrt.pop %v257
    %v274 = vrsqrt.pop %v258
    %v275 = vrsqrt.pop %v259
    %v276 = vrsqrt.pop %v260
    %v277 = vrsqrt.pop %v261
    %v278 = vrsqrt.pop %v262
    %v279 = vrsqrt.pop %v263
    %v280 = vrsqrt.pop %v264
    %v281 = vrsqrt.pop %v265
    %v282 = vrsqrt.pop %v266
    %v283 = vrsqrt.pop %v267
    %v284 = vrsqrt.pop %v268
    %v285 = vmul.f32 %v237, %v269
    %v286 = vmul.f32 %v238, %v270
    %v287 = vmul.f32 %v239, %v271
    %v288 = vmul.f32 %v240, %v272
    %v289 = vmul.f32 %v241, %v273
    %v290 = vmul.f32 %v242, %v274
    %v291 = vmul.f32 %v243, %v275
    %v292 = vmul.f32 %v244, %v276
    %v293 = vmul.f32 %v245, %v277
    %v294 = vmul.f32 %v246, %v278
    %v295 = vmul.f32 %v247, %v279
    %v296 = vmul.f32 %v248, %v280
    %v297 = vmul.f32 %v249, %v281
    %v298 = vmul.f32 %v250, %v282
    %v299 = vmul.f32 %v251, %v283
    %v300 = vmul.f32 %v252, %v284
    %v301 = vlaneseq
    %v302 = vshrl.u32 %v301, 7
    %v303 = vsub.s32 0, %v302
    %v304 = vrot.slane %v235, %v303
    %v305 = vmul.f32 %v285, %v304
    %v306 = vmul.f32 %v286, %v304
    %v307 = vmul.f32 %v287, %v304
    %v308 = vmul.f32 %v288, %v304
    %v309 = vmul.f32 %v289, %v304
    %v310 = vmul.f32 %v290, %v304
    %v311 = vmul.f32 %v291, %v304
    %v312 = vmul.f32 %v292, %v304
    %v313 = vmul.f32 %v293, %v304
    %v314 = vmul.f32 %v294, %v304
    %v315 = vmul.f32 %v295, %v304
    %v316 = vmul.f32 %v296, %v304
    %v317 = vmul.f32 %v297, %v304
    %v318 = vmul.f32 %v298, %v304
    %v319 = vmul.f32 %v299, %v304
    %v320 = vmul.f32 %v300, %v304
    %v321 = vlaneseq
    %v322 = vshrl.u32 %v321, 7
    %v323 = vsub.s32 0, %v322
    %v324 = vrot.slane %v236, %v323
    %v325 = vadd.f32 %v305, %v324
    %v326 = vadd.f32 %v306, %v324
    %v327 = vadd.f32 %v307, %v324
    %v328 = vadd.f32 %v308, %v324
    %v329 = vadd.f32 %v309, %v324
    %v330 = vadd.f32 %v310, %v324
    %v331 = vadd.f32 %v311, %v324
    %v332 = vadd.f32 %v312, %v324
    %v333 = vadd.f32 %v313, %v324
    %v334 = vadd.f32 %v314, %v324
    %v335 = vadd.f32 %v315, %v324
    %v336 = vadd.f32 %v316, %v324
    %v337 = vadd.f32 %v317, %v324
    %v338 = vadd.f32 %v318, %v324
    %v339 = vadd.f32 %v319, %v324
    %v340 = vadd.f32 %v320, %v324
    %v341 = vpack.c.bf16 %v326, %v325
    %v342 = vpack.c.bf16 %v328, %v327
    %v343 = vpack.c.bf16 %v330, %v329
    %v344 = vpack.c.bf16 %v332, %v331
    %v345 = vpack.c.bf16 %v334, %v333
    %v346 = vpack.c.bf16 %v336, %v335
    %v347 = vpack.c.bf16 %v338, %v337
    %v348 = vpack.c.bf16 %v340, %v339
    %v349 = vld [vmem:[%s2] sm:$0xff]
    %v350 = vld [vmem:[%s2 + $0x8] sm:$0xf]
    %v351 = vld [vmem:[%s2 + $0x18] sm:$0xff]
    %v352 = vld [vmem:[%s2 + $0x20] sm:$0xf]
    %v353 = vld [vmem:[%s2 + $0x30] sm:$0xff]
    %v354 = vld [vmem:[%s2 + $0x38] sm:$0xf]
    %v355 = vld [vmem:[%s2 + $0x48] sm:$0xff]
    %v356 = vld [vmem:[%s2 + $0x50] sm:$0xf]
    %v357 = vld [vmem:[%s2 + $0x60] sm:$0xff]
    %v358 = vld [vmem:[%s2 + $0x68] sm:$0xf]
    %v359 = vld [vmem:[%s2 + $0x78] sm:$0xff]
    %v360 = vld [vmem:[%s2 + $0x80] sm:$0xf]
    %v361 = vld [vmem:[%s2 + $0x90] sm:$0xff]
    %v362 = vld [vmem:[%s2 + $0x98] sm:$0xf]
    %v363 = vld [vmem:[%s2 + $0xa8] sm:$0xff]
    %v364 = vld [vmem:[%s2 + $0xb0] sm:$0xf]
    %v365 = vld [vmem:[%s2 + $0xc0] sm:$0xff]
    %v366 = vld [vmem:[%s2 + $0xc8] sm:$0xf]
    %v367 = vld [vmem:[%s2 + $0xd8] sm:$0xff]
    %v368 = vld [vmem:[%s2 + $0xe0] sm:$0xf]
    %v369 = vld [vmem:[%s2 + $0xf0] sm:$0xff]
    %v370 = vld [vmem:[%s2 + $0xf8] sm:$0xf]
    %v371 = vld [vmem:[%s2 + $0x108] sm:$0xff]
    %v372 = vld [vmem:[%s2 + $0x110] sm:$0xf]
    %v373 = vld [vmem:[%s2 + $0x120] sm:$0xff]
    %v374 = vld [vmem:[%s2 + $0x128] sm:$0xf]
    %v375 = vld [vmem:[%s2 + $0x138] sm:$0xff]
    %v376 = vld [vmem:[%s2 + $0x140] sm:$0xf]
    %v377 = vld [vmem:[%s2 + $0x150] sm:$0xff]
    %v378 = vld [vmem:[%s2 + $0x158] sm:$0xf]
    %v379 = vld [vmem:[%s2 + $0x168] sm:$0xff]
    %v380 = vld [vmem:[%s2 + $0x170] sm:$0xf]
    %v413 = vunpack.c.l.b16 %v349
    %v414 = vunpack.c.h.b16 %v349
    %v415 = vunpack.c.l.b16 %v350
    %v416 = vunpack.c.l.b16 %v351
    %v417 = vunpack.c.h.b16 %v351
    %v418 = vunpack.c.l.b16 %v352
    %v419 = vunpack.c.l.b16 %v353
    %v420 = vunpack.c.h.b16 %v353
    %v421 = vunpack.c.l.b16 %v354
    %v422 = vunpack.c.l.b16 %v355
    %v423 = vunpack.c.h.b16 %v355
    %v424 = vunpack.c.l.b16 %v356
    %v425 = vunpack.c.l.b16 %v357
    %v426 = vunpack.c.h.b16 %v357
    %v427 = vunpack.c.l.b16 %v358
    %v428 = vunpack.c.l.b16 %v359
    %v429 = vunpack.c.h.b16 %v359
    %v430 = vunpack.c.l.b16 %v360
    %v431 = vunpack.c.l.b16 %v361
    %v432 = vunpack.c.h.b16 %v361
    %v433 = vunpack.c.l.b16 %v362
    %v434 = vunpack.c.l.b16 %v363
    %v435 = vunpack.c.h.b16 %v363
    %v436 = vunpack.c.l.b16 %v364
    %v437 = vunpack.c.l.b16 %v365
    %v438 = vunpack.c.h.b16 %v365
    %v439 = vunpack.c.l.b16 %v366
    %v440 = vunpack.c.l.b16 %v367
    %v441 = vunpack.c.h.b16 %v367
    %v442 = vunpack.c.l.b16 %v368
    %v443 = vunpack.c.l.b16 %v369
    %v444 = vunpack.c.h.b16 %v369
    %v445 = vunpack.c.l.b16 %v370
    %v446 = vunpack.c.l.b16 %v371
    %v447 = vunpack.c.h.b16 %v371
    %v448 = vunpack.c.l.b16 %v372
    %v449 = vunpack.c.l.b16 %v373
    %v450 = vunpack.c.h.b16 %v373
    %v451 = vunpack.c.l.b16 %v374
    %v452 = vunpack.c.l.b16 %v375
    %v453 = vunpack.c.h.b16 %v375
    %v454 = vunpack.c.l.b16 %v376
    %v455 = vunpack.c.l.b16 %v377
    %v456 = vunpack.c.h.b16 %v377
    %v457 = vunpack.c.l.b16 %v378
    %v458 = vunpack.c.l.b16 %v379
    %v459 = vunpack.c.h.b16 %v379
    %v460 = vunpack.c.l.b16 %v380
    %v461 = vpack.c.b16 %v416, %v413
    %v462 = vpack.c.b16 %v417, %v414
    %v463 = vpack.c.b16 %v418, %v415
    %v464 = vpack.c.b16 %v422, %v419
    %v465 = vpack.c.b16 %v423, %v420
    %v466 = vpack.c.b16 %v424, %v421
    %v467 = vpack.c.b16 %v428, %v425
    %v468 = vpack.c.b16 %v429, %v426
    %v469 = vpack.c.b16 %v430, %v427
    %v470 = vpack.c.b16 %v434, %v431
    %v471 = vpack.c.b16 %v435, %v432
    %v472 = vpack.c.b16 %v436, %v433
    %v473 = vpack.c.b16 %v440, %v437
    %v474 = vpack.c.b16 %v441, %v438
    %v475 = vpack.c.b16 %v442, %v439
    %v476 = vpack.c.b16 %v446, %v443
    %v477 = vpack.c.b16 %v447, %v444
    %v478 = vpack.c.b16 %v448, %v445
    %v479 = vpack.c.b16 %v452, %v449
    %v480 = vpack.c.b16 %v453, %v450
    %v481 = vpack.c.b16 %v454, %v451
    %v482 = vpack.c.b16 %v458, %v455
    %v483 = vpack.c.b16 %v459, %v456
    %v484 = vpack.c.b16 %v460, %v457
    %509 = vmatprep.subr.bf16.mxu0 %v462
    %510 = vmatpush1.bf16.msra.mxu0 %v461
    %511 = vmatprep.subr.bf16.mxu0 %v465
    %512 = vmatpush1.bf16.msra.mxu0 %v464
    %513 = vmatprep.subr.bf16.mxu0 %v468
    %514 = vmatpush1.bf16.msra.mxu0 %v467
    %515 = vmatprep.subr.bf16.mxu0 %v471
    %516 = vmatpush1.bf16.msra.mxu0 %v470
    %517 = vmatprep.subr.bf16.mxu0 %v474
    %518 = vmatpush1.bf16.msra.mxu0 %v473
    %519 = vmatprep.subr.bf16.mxu0 %v477
    %520 = vmatpush1.bf16.msra.mxu0 %v476
    %521 = vmatprep.subr.bf16.mxu0 %v480
    %522 = vmatpush1.bf16.msra.mxu0 %v479
    %523 = vmatprep.subr.bf16.mxu0 %v483
    %524 = vmatpush1.bf16.msra.mxu0 %v482
    %525 = vmatprep.subr.bf16.mxu0 0
    %526 = vmatpush1.bf16.msra.mxu0 0
    %527 = vmatprep.subr.bf16.mxu0 0
    %528 = vmatpush1.bf16.msra.mxu0 0
    %529 = vmatprep.subr.bf16.mxu0 0
    %530 = vmatpush1.bf16.msra.mxu0 0
    %531 = vmatprep.subr.bf16.mxu0 0
    %532 = vmatpush1.bf16.msra.mxu0 0
    %533 = vmatprep.subr.bf16.mxu0 0
    %534 = vmatpush1.bf16.msra.mxu0 0
    %535 = vmatprep.subr.bf16.mxu0 0
    %536 = vmatpush1.bf16.msra.mxu0 0
    %537 = vmatprep.subr.bf16.mxu0 0
    %538 = vmatpush1.bf16.msra.mxu0 0
    %539 = vmatprep.subr.bf16.mxu0 0
    %540 = vmatpush1.bf16.msra.mxu0 0
    %541 = vmatprep.mubr.bf16.mxu0 0
    %542 = vmatmul.mubr.bf16.gmra.mrb[0].mxu0 %v341
    %v543 = vpop.f32.mrb[0].mxu0
    %v544 = vadd.f32 0.0, %v543
    %v545 = vpop.f32.mrb[0].mxu0
    %v546 = vadd.f32 0.0, %v545
    %v547 = vpop.f32.mrb[0].mxu0
    %v548 = vadd.f32 0.0, %v547
    %v549 = vpop.f32.mrb[0].mxu0
    %v550 = vadd.f32 0.0, %v549
    %551 = vmatprep.mubr.bf16.mxu0 0
    %552 = vmatmul.mubr.bf16.gmra.mrb[0].mxu0 %v342
    %v553 = vpop.f32.mrb[0].mxu0
    %v554 = vadd.f32 0.0, %v553
    %v555 = vpop.f32.mrb[0].mxu0
    %v556 = vadd.f32 0.0, %v555
    %v557 = vpop.f32.mrb[0].mxu0
    %v558 = vadd.f32 0.0, %v557
    %v559 = vpop.f32.mrb[0].mxu0
    %v560 = vadd.f32 0.0, %v559
    %561 = vmatprep.mubr.bf16.mxu0 0
    %562 = vmatmul.mubr.bf16.gmra.mrb[0].mxu0 %v343
    %v563 = vpop.f32.mrb[0].mxu0
    %v564 = vadd.f32 0.0, %v563
    %v565 = vpop.f32.mrb[0].mxu0
    %v566 = vadd.f32 0.0, %v565
    %v567 = vpop.f32.mrb[0].mxu0
    %v568 = vadd.f32 0.0, %v567
    %v569 = vpop.f32.mrb[0].mxu0
    %v570 = vadd.f32 0.0, %v569
    %571 = vmatprep.mubr.bf16.mxu0 0
    %572 = vmatmul.mubr.bf16.gmra.mrb[0].mxu0 %v344
    %v573 = vpop.f32.mrb[0].mxu0
    %v574 = vadd.f32 0.0, %v573
    %v575 = vpop.f32.mrb[0].mxu0
    %v576 = vadd.f32 0.0, %v575
    %v577 = vpop.f32.mrb[0].mxu0
    %v578 = vadd.f32 0.0, %v577
    %v579 = vpop.f32.mrb[0].mxu0
    %v580 = vadd.f32 0.0, %v579
    %581 = vmatprep.mubr.bf16.mxu0 0
    %582 = vmatmul.mubr.bf16.gmra.mrb[0].mxu0 %v345
    %v583 = vpop.f32.mrb[0].mxu0
    %v584 = vadd.f32 0.0, %v583
    %v585 = vpop.f32.mrb[0].mxu0
    %v586 = vadd.f32 0.0, %v585
    %v587 = vpop.f32.mrb[0].mxu0
    %v588 = vadd.f32 0.0, %v587
    %v589 = vpop.f32.mrb[0].mxu0
    %v590 = vadd.f32 0.0, %v589
    %591 = vmatprep.mubr.bf16.mxu0 0
    %592 = vmatmul.mubr.bf16.gmra.mrb[0].mxu0 %v346
    %v593 = vpop.f32.mrb[0].mxu0
    %v594 = vadd.f32 0.0, %v593
    %v595 = vpop.f32.mrb[0].mxu0
    %v596 = vadd.f32 0.0, %v595
    %v597 = vpop.f32.mrb[0].mxu0
    %v598 = vadd.f32 0.0, %v597
    %v599 = vpop.f32.mrb[0].mxu0
    %v600 = vadd.f32 0.0, %v599
    %601 = vmatprep.mubr.bf16.mxu0 0
    %602 = vmatmul.mubr.bf16.gmra.mrb[0].mxu0 %v347
    %v603 = vpop.f32.mrb[0].mxu0
    %v604 = vadd.f32 0.0, %v603
    %v605 = vpop.f32.mrb[0].mxu0
    %v606 = vadd.f32 0.0, %v605
    %v607 = vpop.f32.mrb[0].mxu0
    %v608 = vadd.f32 0.0, %v607
    %v609 = vpop.f32.mrb[0].mxu0
    %v610 = vadd.f32 0.0, %v609
    %611 = vmatprep.mubr.bf16.mxu0 0
    %612 = vmatmul.mubr.bf16.gmra.mrb[0].mxu0 %v348
    %v613 = vpop.f32.mrb[0].mxu0
    %v614 = vadd.f32 0.0, %v613
    %v615 = vpop.f32.mrb[0].mxu0
    %v616 = vadd.f32 0.0, %v615
    %v617 = vpop.f32.mrb[0].mxu0
    %v618 = vadd.f32 0.0, %v617
    %v619 = vpop.f32.mrb[0].mxu0
    %v620 = vadd.f32 0.0, %v619
    %621 = vdwg.mxu0
    %622 = vmatprep.subr.bf16.mxu0 0
    %623 = vmatpush1.bf16.msra.mxu0 %v463
    %624 = vmatprep.subr.bf16.mxu0 0
    %625 = vmatpush1.bf16.msra.mxu0 %v466
    %626 = vmatprep.subr.bf16.mxu0 0
    %627 = vmatpush1.bf16.msra.mxu0 %v469
    %628 = vmatprep.subr.bf16.mxu0 0
    %629 = vmatpush1.bf16.msra.mxu0 %v472
    %630 = vmatprep.subr.bf16.mxu0 0
    %631 = vmatpush1.bf16.msra.mxu0 %v475
    %632 = vmatprep.subr.bf16.mxu0 0
    %633 = vmatpush1.bf16.msra.mxu0 %v478
    %634 = vmatprep.subr.bf16.mxu0 0
    %635 = vmatpush1.bf16.msra.mxu0 %v481
    %636 = vmatprep.subr.bf16.mxu0 0
    %637 = vmatpush1.bf16.msra.mxu0 %v484
    %638 = vmatprep.subr.bf16.mxu0 0
    %639 = vmatpush1.bf16.msra.mxu0 0
    %640 = vmatprep.subr.bf16.mxu0 0
    %641 = vmatpush1.bf16.msra.mxu0 0
    %642 = vmatprep.subr.bf16.mxu0 0
    %643 = vmatpush1.bf16.msra.mxu0 0
    %644 = vmatprep.subr.bf16.mxu0 0
    %645 = vmatpush1.bf16.msra.mxu0 0
    %646 = vmatprep.subr.bf16.mxu0 0
    %647 = vmatpush1.bf16.msra.mxu0 0
    %648 = vmatprep.subr.bf16.mxu0 0
    %649 = vmatpush1.bf16.msra.mxu0 0
    %650 = vmatprep.subr.bf16.mxu0 0
    %651 = vmatpush1.bf16.msra.mxu0 0
    %652 = vmatprep.subr.bf16.mxu0 0
    %653 = vmatpush1.bf16.msra.mxu0 0
    %654 = vmatprep.mubr.bf16.mxu0 0
    %655 = vmatmul.mubr.bf16.gmra.mrb[0].mxu0 %v341
    %v656 = vpop.f32.mrb[0].mxu0
    %v657 = vadd.f32 0.0, %v656
    %v658 = vpop.f32.mrb[0].mxu0
    %v659 = vpop.f32.mrb[0].mxu0
    %v660 = vadd.f32 0.0, %v659
    %v661 = vpop.f32.mrb[0].mxu0
    %662 = vmatprep.mubr.bf16.mxu0 0
    %663 = vmatmul.mubr.bf16.gmra.mrb[0].mxu0 %v342
    %v664 = vpop.f32.mrb[0].mxu0
    %v665 = vadd.f32 0.0, %v664
    %v666 = vpop.f32.mrb[0].mxu0
    %v667 = vpop.f32.mrb[0].mxu0
    %v668 = vadd.f32 0.0, %v667
    %v669 = vpop.f32.mrb[0].mxu0
    %670 = vmatprep.mubr.bf16.mxu0 0
    %671 = vmatmul.mubr.bf16.gmra.mrb[0].mxu0 %v343
    %v672 = vpop.f32.mrb[0].mxu0
    %v673 = vadd.f32 0.0, %v672
    %v674 = vpop.f32.mrb[0].mxu0
    %v675 = vpop.f32.mrb[0].mxu0
    %v676 = vadd.f32 0.0, %v675
    %v677 = vpop.f32.mrb[0].mxu0
    %678 = vmatprep.mubr.bf16.mxu0 0
    %679 = vmatmul.mubr.bf16.gmra.mrb[0].mxu0 %v344
    %v680 = vpop.f32.mrb[0].mxu0
    %v681 = vadd.f32 0.0, %v680
    %v682 = vpop.f32.mrb[0].mxu0
    %v683 = vpop.f32.mrb[0].mxu0
    %v684 = vadd.f32 0.0, %v683
    %v685 = vpop.f32.mrb[0].mxu0
    %686 = vmatprep.mubr.bf16.mxu0 0
    %687 = vmatmul.mubr.bf16.gmra.mrb[0].mxu0 %v345
    %v688 = vpop.f32.mrb[0].mxu0
    %v689 = vadd.f32 0.0, %v688
    %v690 = vpop.f32.mrb[0].mxu0
    %v691 = vpop.f32.mrb[0].mxu0
    %v692 = vadd.f32 0.0, %v691
    %v693 = vpop.f32.mrb[0].mxu0
    %694 = vmatprep.mubr.bf16.mxu0 0
    %695 = vmatmul.mubr.bf16.gmra.mrb[0].mxu0 %v346
    %v696 = vpop.f32.mrb[0].mxu0
    %v697 = vadd.f32 0.0, %v696
    %v698 = vpop.f32.mrb[0].mxu0
    %v699 = vpop.f32.mrb[0].mxu0
    %v700 = vadd.f32 0.0, %v699
    %v701 = vpop.f32.mrb[0].mxu0
    %702 = vmatprep.mubr.bf16.mxu0 0
    %703 = vmatmul.mubr.bf16.gmra.mrb[0].mxu0 %v347
    %v704 = vpop.f32.mrb[0].mxu0
    %v705 = vadd.f32 0.0, %v704
    %v706 = vpop.f32.mrb[0].mxu0
    %v707 = vpop.f32.mrb[0].mxu0
    %v708 = vadd.f32 0.0, %v707
    %v709 = vpop.f32.mrb[0].mxu0
    %710 = vmatprep.mubr.bf16.mxu0 0
    %711 = vmatmul.mubr.bf16.gmra.mrb[0].mxu0 %v348
    %v712 = vpop.f32.mrb[0].mxu0
    %v713 = vadd.f32 0.0, %v712
    %v714 = vpop.f32.mrb[0].mxu0
    %v715 = vpop.f32.mrb[0].mxu0
    %v716 = vadd.f32 0.0, %v715
    %v717 = vpop.f32.mrb[0].mxu0
    %718 = vdwg.mxu0
    %v719 = vmul.f32 %v544, %v546
    %v720 = vmul.f32 %v548, %v550
    %v721 = vmul.f32 %v554, %v556
    %v722 = vmul.f32 %v558, %v560
    %v723 = vmul.f32 %v564, %v566
    %v724 = vmul.f32 %v568, %v570
    %v725 = vmul.f32 %v574, %v576
    %v726 = vmul.f32 %v578, %v580
    %v727 = vmul.f32 %v584, %v586
    %v728 = vmul.f32 %v588, %v590
    %v729 = vmul.f32 %v594, %v596
    %v730 = vmul.f32 %v598, %v600
    %v731 = vmul.f32 %v604, %v606
    %v732 = vmul.f32 %v608, %v610
    %v733 = vmul.f32 %v614, %v616
    %v734 = vmul.f32 %v618, %v620
    %v735 = vld [vmem:[%s3] sm:$0x1]
    %v737 = vlaneseq
    %v738 = vshrl.u32 %v737, 7
    %v739 = vsub.s32 0, %v738
    %v740 = vrot.slane %v735, %v739
    %v742 = vadd.f32 %v719, %v740
    %v743 = vadd.f32 %v720, %v740
    %v744 = vadd.f32 %v721, %v740
    %v745 = vadd.f32 %v722, %v740
    %v746 = vadd.f32 %v723, %v740
    %v747 = vadd.f32 %v724, %v740
    %v748 = vadd.f32 %v725, %v740
    %v749 = vadd.f32 %v726, %v740
    %v750 = vadd.f32 %v727, %v740
    %v751 = vadd.f32 %v728, %v740
    %v752 = vadd.f32 %v729, %v740
    %v753 = vadd.f32 %v730, %v740
    %v754 = vadd.f32 %v731, %v740
    %v755 = vadd.f32 %v732, %v740
    %v756 = vadd.f32 %v733, %v740
    %v757 = vadd.f32 %v734, %v740
    %758 = vmax.xlane.f32.xlu0 %v742
    %v759 = vpop.xlane.xlu0 %758
    %760 = vmax.xlane.f32.xlu0 %v743
    %v761 = vpop.xlane.xlu0 %760
    %762 = vmax.xlane.f32.xlu0 %v744
    %v763 = vpop.xlane.xlu0 %762
    %764 = vmax.xlane.f32.xlu0 %v745
    %v765 = vpop.xlane.xlu0 %764
    %766 = vmax.xlane.f32.xlu0 %v746
    %v767 = vpop.xlane.xlu0 %766
    %768 = vmax.xlane.f32.xlu0 %v747
    %v769 = vpop.xlane.xlu0 %768
    %770 = vmax.xlane.f32.xlu0 %v748
    %v771 = vpop.xlane.xlu0 %770
    %772 = vmax.xlane.f32.xlu0 %v749
    %v773 = vpop.xlane.xlu0 %772
    %774 = vmax.xlane.f32.xlu0 %v750
    %v775 = vpop.xlane.xlu0 %774
    %776 = vmax.xlane.f32.xlu0 %v751
    %v777 = vpop.xlane.xlu0 %776
    %778 = vmax.xlane.f32.xlu0 %v752
    %v779 = vpop.xlane.xlu0 %778
    %780 = vmax.xlane.f32.xlu0 %v753
    %v781 = vpop.xlane.xlu0 %780
    %782 = vmax.xlane.f32.xlu0 %v754
    %v783 = vpop.xlane.xlu0 %782
    %784 = vmax.xlane.f32.xlu0 %v755
    %v785 = vpop.xlane.xlu0 %784
    %786 = vmax.xlane.f32.xlu0 %v756
    %v787 = vpop.xlane.xlu0 %786
    %788 = vmax.xlane.f32.xlu0 %v757
    %v789 = vpop.xlane.xlu0 %788
    %v790 = vsub.f32 %v742, %v759
    %v791 = vsub.f32 %v743, %v761
    %v792 = vsub.f32 %v744, %v763
    %v793 = vsub.f32 %v745, %v765
    %v794 = vsub.f32 %v746, %v767
    %v795 = vsub.f32 %v747, %v769
    %v796 = vsub.f32 %v748, %v771
    %v797 = vsub.f32 %v749, %v773
    %v798 = vsub.f32 %v750, %v775
    %v799 = vsub.f32 %v751, %v777
    %v800 = vsub.f32 %v752, %v779
    %v801 = vsub.f32 %v753, %v781
    %v802 = vsub.f32 %v754, %v783
    %v803 = vsub.f32 %v755, %v785
    %v804 = vsub.f32 %v756, %v787
    %v805 = vsub.f32 %v757, %v789
    %v806 = vmul.f32 %v790, 1.442695
    %v807 = vpow.pop %v806
    %v808 = vmul.f32 %v791, 1.442695
    %v809 = vpow.pop %v808
    %v810 = vmul.f32 %v792, 1.442695
    %v811 = vpow.pop %v810
    %v812 = vmul.f32 %v793, 1.442695
    %v813 = vpow.pop %v812
    %v814 = vmul.f32 %v794, 1.442695
    %v815 = vpow.pop %v814
    %v816 = vmul.f32 %v795, 1.442695
    %v817 = vpow.pop %v816
    %v818 = vmul.f32 %v796, 1.442695
    %v819 = vpow.pop %v818
    %v820 = vmul.f32 %v797, 1.442695
    %v821 = vpow.pop %v820
    %v822 = vmul.f32 %v798, 1.442695
    %v823 = vpow.pop %v822
    %v824 = vmul.f32 %v799, 1.442695
    %v825 = vpow.pop %v824
    %v826 = vmul.f32 %v800, 1.442695
    %v827 = vpow.pop %v826
    %v828 = vmul.f32 %v801, 1.442695
    %v829 = vpow.pop %v828
    %v830 = vmul.f32 %v802, 1.442695
    %v831 = vpow.pop %v830
    %v832 = vmul.f32 %v803, 1.442695
    %v833 = vpow.pop %v832
    %v834 = vmul.f32 %v804, 1.442695
    %v835 = vpow.pop %v834
    %v836 = vmul.f32 %v805, 1.442695
    %v837 = vpow.pop %v836
    %838 = vadd.xlane.f32.xlu0 %v807
    %v839 = vpop.xlane.xlu0 %838
    %840 = vadd.xlane.f32.xlu0 %v809
    %v841 = vpop.xlane.xlu0 %840
    %842 = vadd.xlane.f32.xlu0 %v811
    %v843 = vpop.xlane.xlu0 %842
    %844 = vadd.xlane.f32.xlu0 %v813
    %v845 = vpop.xlane.xlu0 %844
    %846 = vadd.xlane.f32.xlu0 %v815
    %v847 = vpop.xlane.xlu0 %846
    %848 = vadd.xlane.f32.xlu0 %v817
    %v849 = vpop.xlane.xlu0 %848
    %850 = vadd.xlane.f32.xlu0 %v819
    %v851 = vpop.xlane.xlu0 %850
    %852 = vadd.xlane.f32.xlu0 %v821
    %v853 = vpop.xlane.xlu0 %852
    %854 = vadd.xlane.f32.xlu0 %v823
    %v855 = vpop.xlane.xlu0 %854
    %856 = vadd.xlane.f32.xlu0 %v825
    %v857 = vpop.xlane.xlu0 %856
    %858 = vadd.xlane.f32.xlu0 %v827
    %v859 = vpop.xlane.xlu0 %858
    %860 = vadd.xlane.f32.xlu0 %v829
    %v861 = vpop.xlane.xlu0 %860
    %862 = vadd.xlane.f32.xlu0 %v831
    %v863 = vpop.xlane.xlu0 %862
    %864 = vadd.xlane.f32.xlu0 %v833
    %v865 = vpop.xlane.xlu0 %864
    %866 = vadd.xlane.f32.xlu0 %v835
    %v867 = vpop.xlane.xlu0 %866
    %868 = vadd.xlane.f32.xlu0 %v837
    %v869 = vpop.xlane.xlu0 %868
    %v870 = vrcp.pop %v839
    %v871 = vrcp.pop %v841
    %v872 = vrcp.pop %v843
    %v873 = vrcp.pop %v845
    %v874 = vrcp.pop %v847
    %v875 = vrcp.pop %v849
    %v876 = vrcp.pop %v851
    %v877 = vrcp.pop %v853
    %v878 = vrcp.pop %v855
    %v879 = vrcp.pop %v857
    %v880 = vrcp.pop %v859
    %v881 = vrcp.pop %v861
    %v882 = vrcp.pop %v863
    %v883 = vrcp.pop %v865
    %v884 = vrcp.pop %v867
    %v885 = vrcp.pop %v869
    %v886 = vmul.f32 %v807, %v870
    %v887 = vmul.f32 %v809, %v871
    %v888 = vmul.f32 %v811, %v872
    %v889 = vmul.f32 %v813, %v873
    %v890 = vmul.f32 %v815, %v874
    %v891 = vmul.f32 %v817, %v875
    %v892 = vmul.f32 %v819, %v876
    %v893 = vmul.f32 %v821, %v877
    %v894 = vmul.f32 %v823, %v878
    %v895 = vmul.f32 %v825, %v879
    %v896 = vmul.f32 %v827, %v880
    %v897 = vmul.f32 %v829, %v881
    %v898 = vmul.f32 %v831, %v882
    %v899 = vmul.f32 %v833, %v883
    %v900 = vmul.f32 %v835, %v884
    %v901 = vmul.f32 %v837, %v885
    %v902 = vmul.f32 %v886, %v657
    %v903 = vmul.f32 %v887, %v660
    %v904 = vmul.f32 %v888, %v665
    %v905 = vmul.f32 %v889, %v668
    %v906 = vmul.f32 %v890, %v673
    %v907 = vmul.f32 %v891, %v676
    %v908 = vmul.f32 %v892, %v681
    %v909 = vmul.f32 %v893, %v684
    %v910 = vmul.f32 %v894, %v689
    %v911 = vmul.f32 %v895, %v692
    %v912 = vmul.f32 %v896, %v697
    %v913 = vmul.f32 %v897, %v700
    %v914 = vmul.f32 %v898, %v705
    %v915 = vmul.f32 %v899, %v708
    %v916 = vmul.f32 %v900, %v713
    %v917 = vmul.f32 %v901, %v716
    %v918 = vpack.c.bf16 %v903, %v902
    %v919 = vpack.c.bf16 %v905, %v904
    %v920 = vpack.c.bf16 %v907, %v906
    %v921 = vpack.c.bf16 %v909, %v908
    %v922 = vpack.c.bf16 %v911, %v910
    %v923 = vpack.c.bf16 %v913, %v912
    %v924 = vpack.c.bf16 %v915, %v914
    %v925 = vpack.c.bf16 %v917, %v916
    %v926 = vld [vmem:[%s2 + $0xc] sm:$0xff]
    %v927 = vld [vmem:[%s2 + $0x14] sm:$0xf]
    %v928 = vld [vmem:[%s2 + $0x24] sm:$0xff]
    %v929 = vld [vmem:[%s2 + $0x2c] sm:$0xf]
    %v930 = vld [vmem:[%s2 + $0x3c] sm:$0xff]
    %v931 = vld [vmem:[%s2 + $0x44] sm:$0xf]
    %v932 = vld [vmem:[%s2 + $0x54] sm:$0xff]
    %v933 = vld [vmem:[%s2 + $0x5c] sm:$0xf]
    %v934 = vld [vmem:[%s2 + $0x6c] sm:$0xff]
    %v935 = vld [vmem:[%s2 + $0x74] sm:$0xf]
    %v936 = vld [vmem:[%s2 + $0x84] sm:$0xff]
    %v937 = vld [vmem:[%s2 + $0x8c] sm:$0xf]
    %v938 = vld [vmem:[%s2 + $0x9c] sm:$0xff]
    %v939 = vld [vmem:[%s2 + $0xa4] sm:$0xf]
    %v940 = vld [vmem:[%s2 + $0xb4] sm:$0xff]
    %v941 = vld [vmem:[%s2 + $0xbc] sm:$0xf]
    %v942 = vld [vmem:[%s2 + $0xcc] sm:$0xff]
    %v943 = vld [vmem:[%s2 + $0xd4] sm:$0xf]
    %v944 = vld [vmem:[%s2 + $0xe4] sm:$0xff]
    %v945 = vld [vmem:[%s2 + $0xec] sm:$0xf]
    %v946 = vld [vmem:[%s2 + $0xfc] sm:$0xff]
    %v947 = vld [vmem:[%s2 + $0x104] sm:$0xf]
    %v948 = vld [vmem:[%s2 + $0x114] sm:$0xff]
    %v949 = vld [vmem:[%s2 + $0x11c] sm:$0xf]
    %v950 = vld [vmem:[%s2 + $0x12c] sm:$0xff]
    %v951 = vld [vmem:[%s2 + $0x134] sm:$0xf]
    %v952 = vld [vmem:[%s2 + $0x144] sm:$0xff]
    %v953 = vld [vmem:[%s2 + $0x14c] sm:$0xf]
    %v954 = vld [vmem:[%s2 + $0x15c] sm:$0xff]
    %v955 = vld [vmem:[%s2 + $0x164] sm:$0xf]
    %v956 = vld [vmem:[%s2 + $0x174] sm:$0xff]
    %v957 = vld [vmem:[%s2 + $0x17c] sm:$0xf]
    %v990 = vunpack.c.l.b16 %v926
    %v991 = vunpack.c.h.b16 %v926
    %v992 = vunpack.c.l.b16 %v927
    %v993 = vunpack.c.l.b16 %v928
    %v994 = vunpack.c.h.b16 %v928
    %v995 = vunpack.c.l.b16 %v929
    %v996 = vunpack.c.l.b16 %v930
    %v997 = vunpack.c.h.b16 %v930
    %v998 = vunpack.c.l.b16 %v931
    %v999 = vunpack.c.l.b16 %v932
    %v1000 = vunpack.c.h.b16 %v932
    %v1001 = vunpack.c.l.b16 %v933
    %v1002 = vunpack.c.l.b16 %v934
    %v1003 = vunpack.c.h.b16 %v934
    %v1004 = vunpack.c.l.b16 %v935
    %v1005 = vunpack.c.l.b16 %v936
    %v1006 = vunpack.c.h.b16 %v936
    %v1007 = vunpack.c.l.b16 %v937
    %v1008 = vunpack.c.l.b16 %v938
    %v1009 = vunpack.c.h.b16 %v938
    %v1010 = vunpack.c.l.b16 %v939
    %v1011 = vunpack.c.l.b16 %v940
    %v1012 = vunpack.c.h.b16 %v940
    %v1013 = vunpack.c.l.b16 %v941
    %v1014 = vunpack.c.l.b16 %v942
    %v1015 = vunpack.c.h.b16 %v942
    %v1016 = vunpack.c.l.b16 %v943
    %v1017 = vunpack.c.l.b16 %v944
    %v1018 = vunpack.c.h.b16 %v944
    %v1019 = vunpack.c.l.b16 %v945
    %v1020 = vunpack.c.l.b16 %v946
    %v1021 = vunpack.c.h.b16 %v946
    %v1022 = vunpack.c.l.b16 %v947
    %v1023 = vunpack.c.l.b16 %v948
    %v1024 = vunpack.c.h.b16 %v948
    %v1025 = vunpack.c.l.b16 %v949
    %v1026 = vunpack.c.l.b16 %v950
    %v1027 = vunpack.c.h.b16 %v950
    %v1028 = vunpack.c.l.b16 %v951
    %v1029 = vunpack.c.l.b16 %v952
    %v1030 = vunpack.c.h.b16 %v952
    %v1031 = vunpack.c.l.b16 %v953
    %v1032 = vunpack.c.l.b16 %v954
    %v1033 = vunpack.c.h.b16 %v954
    %v1034 = vunpack.c.l.b16 %v955
    %v1035 = vunpack.c.l.b16 %v956
    %v1036 = vunpack.c.h.b16 %v956
    %v1037 = vunpack.c.l.b16 %v957
    %v1038 = vpack.c.b16 %v993, %v990
    %v1039 = vpack.c.b16 %v994, %v991
    %v1040 = vpack.c.b16 %v995, %v992
    %v1041 = vpack.c.b16 %v999, %v996
    %v1042 = vpack.c.b16 %v1000, %v997
    %v1043 = vpack.c.b16 %v1001, %v998
    %v1044 = vpack.c.b16 %v1005, %v1002
    %v1045 = vpack.c.b16 %v1006, %v1003
    %v1046 = vpack.c.b16 %v1007, %v1004
    %v1047 = vpack.c.b16 %v1011, %v1008
    %v1048 = vpack.c.b16 %v1012, %v1009
    %v1049 = vpack.c.b16 %v1013, %v1010
    %v1050 = vpack.c.b16 %v1017, %v1014
    %v1051 = vpack.c.b16 %v1018, %v1015
    %v1052 = vpack.c.b16 %v1019, %v1016
    %v1053 = vpack.c.b16 %v1023, %v1020
    %v1054 = vpack.c.b16 %v1024, %v1021
    %v1055 = vpack.c.b16 %v1025, %v1022
    %v1056 = vpack.c.b16 %v1029, %v1026
    %v1057 = vpack.c.b16 %v1030, %v1027
    %v1058 = vpack.c.b16 %v1031, %v1028
    %v1059 = vpack.c.b16 %v1035, %v1032
    %v1060 = vpack.c.b16 %v1036, %v1033
    %v1061 = vpack.c.b16 %v1037, %v1034
    %1086 = vmatprep.subr.bf16.mxu0 %v1039
    %1087 = vmatpush1.bf16.msra.mxu0 %v1038
    %1088 = vmatprep.subr.bf16.mxu0 %v1042
    %1089 = vmatpush1.bf16.msra.mxu0 %v1041
    %1090 = vmatprep.subr.bf16.mxu0 %v1045
    %1091 = vmatpush1.bf16.msra.mxu0 %v1044
    %1092 = vmatprep.subr.bf16.mxu0 %v1048
    %1093 = vmatpush1.bf16.msra.mxu0 %v1047
    %1094 = vmatprep.subr.bf16.mxu0 %v1051
    %1095 = vmatpush1.bf16.msra.mxu0 %v1050
    %1096 = vmatprep.subr.bf16.mxu0 %v1054
    %1097 = vmatpush1.bf16.msra.mxu0 %v1053
    %1098 = vmatprep.subr.bf16.mxu0 %v1057
    %1099 = vmatpush1.bf16.msra.mxu0 %v1056
    %1100 = vmatprep.subr.bf16.mxu0 %v1060
    %1101 = vmatpush1.bf16.msra.mxu0 %v1059
    %1102 = vmatprep.subr.bf16.mxu0 0
    %1103 = vmatpush1.bf16.msra.mxu0 0
    %1104 = vmatprep.subr.bf16.mxu0 0
    %1105 = vmatpush1.bf16.msra.mxu0 0
    %1106 = vmatprep.subr.bf16.mxu0 0
    %1107 = vmatpush1.bf16.msra.mxu0 0
    %1108 = vmatprep.subr.bf16.mxu0 0
    %1109 = vmatpush1.bf16.msra.mxu0 0
    %1110 = vmatprep.subr.bf16.mxu0 0
    %1111 = vmatpush1.bf16.msra.mxu0 0
    %1112 = vmatprep.subr.bf16.mxu0 0
    %1113 = vmatpush1.bf16.msra.mxu0 0
    %1114 = vmatprep.subr.bf16.mxu0 0
    %1115 = vmatpush1.bf16.msra.mxu0 0
    %1116 = vmatprep.subr.bf16.mxu0 0
    %1117 = vmatpush1.bf16.msra.mxu0 0
    %1118 = vmatprep.mubr.bf16.mxu0 0
    %1119 = vmatmul.mubr.bf16.gmra.mrb[0].mxu0 %v341
    %v1120 = vpop.f32.mrb[0].mxu0
    %v1121 = vadd.f32 0.0, %v1120
    %v1122 = vpop.f32.mrb[0].mxu0
    %v1123 = vadd.f32 0.0, %v1122
    %v1124 = vpop.f32.mrb[0].mxu0
    %v1125 = vadd.f32 0.0, %v1124
    %v1126 = vpop.f32.mrb[0].mxu0
    %v1127 = vadd.f32 0.0, %v1126
    %1128 = vmatprep.mubr.bf16.mxu0 0
    %1129 = vmatmul.mubr.bf16.gmra.mrb[0].mxu0 %v342
    %v1130 = vpop.f32.mrb[0].mxu0
    %v1131 = vadd.f32 0.0, %v1130
    %v1132 = vpop.f32.mrb[0].mxu0
    %v1133 = vadd.f32 0.0, %v1132
    %v1134 = vpop.f32.mrb[0].mxu0
    %v1135 = vadd.f32 0.0, %v1134
    %v1136 = vpop.f32.mrb[0].mxu0
    %v1137 = vadd.f32 0.0, %v1136
    %1138 = vmatprep.mubr.bf16.mxu0 0
    %1139 = vmatmul.mubr.bf16.gmra.mrb[0].mxu0 %v343
    %v1140 = vpop.f32.mrb[0].mxu0
    %v1141 = vadd.f32 0.0, %v1140
    %v1142 = vpop.f32.mrb[0].mxu0
    %v1143 = vadd.f32 0.0, %v1142
    %v1144 = vpop.f32.mrb[0].mxu0
    %v1145 = vadd.f32 0.0, %v1144
    %v1146 = vpop.f32.mrb[0].mxu0
    %v1147 = vadd.f32 0.0, %v1146
    %1148 = vmatprep.mubr.bf16.mxu0 0
    %1149 = vmatmul.mubr.bf16.gmra.mrb[0].mxu0 %v344
    %v1150 = vpop.f32.mrb[0].mxu0
    %v1151 = vadd.f32 0.0, %v1150
    %v1152 = vpop.f32.mrb[0].mxu0
    %v1153 = vadd.f32 0.0, %v1152
    %v1154 = vpop.f32.mrb[0].mxu0
    %v1155 = vadd.f32 0.0, %v1154
    %v1156 = vpop.f32.mrb[0].mxu0
    %v1157 = vadd.f32 0.0, %v1156
    %1158 = vmatprep.mubr.bf16.mxu0 0
    %1159 = vmatmul.mubr.bf16.gmra.mrb[0].mxu0 %v345
    %v1160 = vpop.f32.mrb[0].mxu0
    %v1161 = vadd.f32 0.0, %v1160
    %v1162 = vpop.f32.mrb[0].mxu0
    %v1163 = vadd.f32 0.0, %v1162
    %v1164 = vpop.f32.mrb[0].mxu0
    %v1165 = vadd.f32 0.0, %v1164
    %v1166 = vpop.f32.mrb[0].mxu0
    %v1167 = vadd.f32 0.0, %v1166
    %1168 = vmatprep.mubr.bf16.mxu0 0
    %1169 = vmatmul.mubr.bf16.gmra.mrb[0].mxu0 %v346
    %v1170 = vpop.f32.mrb[0].mxu0
    %v1171 = vadd.f32 0.0, %v1170
    %v1172 = vpop.f32.mrb[0].mxu0
    %v1173 = vadd.f32 0.0, %v1172
    %v1174 = vpop.f32.mrb[0].mxu0
    %v1175 = vadd.f32 0.0, %v1174
    %v1176 = vpop.f32.mrb[0].mxu0
    %v1177 = vadd.f32 0.0, %v1176
    %1178 = vmatprep.mubr.bf16.mxu0 0
    %1179 = vmatmul.mubr.bf16.gmra.mrb[0].mxu0 %v347
    %v1180 = vpop.f32.mrb[0].mxu0
    %v1181 = vadd.f32 0.0, %v1180
    %v1182 = vpop.f32.mrb[0].mxu0
    %v1183 = vadd.f32 0.0, %v1182
    %v1184 = vpop.f32.mrb[0].mxu0
    %v1185 = vadd.f32 0.0, %v1184
    %v1186 = vpop.f32.mrb[0].mxu0
    %v1187 = vadd.f32 0.0, %v1186
    %1188 = vmatprep.mubr.bf16.mxu0 0
    %1189 = vmatmul.mubr.bf16.gmra.mrb[0].mxu0 %v348
    %v1190 = vpop.f32.mrb[0].mxu0
    %v1191 = vadd.f32 0.0, %v1190
    %v1192 = vpop.f32.mrb[0].mxu0
    %v1193 = vadd.f32 0.0, %v1192
    %v1194 = vpop.f32.mrb[0].mxu0
    %v1195 = vadd.f32 0.0, %v1194
    %v1196 = vpop.f32.mrb[0].mxu0
    %v1197 = vadd.f32 0.0, %v1196
    %1198 = vdwg.mxu0
    %1199 = vmatprep.subr.bf16.mxu0 0
    %1200 = vmatpush1.bf16.msra.mxu0 %v1040
    %1201 = vmatprep.subr.bf16.mxu0 0
    %1202 = vmatpush1.bf16.msra.mxu0 %v1043
    %1203 = vmatprep.subr.bf16.mxu0 0
    %1204 = vmatpush1.bf16.msra.mxu0 %v1046
    %1205 = vmatprep.subr.bf16.mxu0 0
    %1206 = vmatpush1.bf16.msra.mxu0 %v1049
    %1207 = vmatprep.subr.bf16.mxu0 0
    %1208 = vmatpush1.bf16.msra.mxu0 %v1052
    %1209 = vmatprep.subr.bf16.mxu0 0
    %1210 = vmatpush1.bf16.msra.mxu0 %v1055
    %1211 = vmatprep.subr.bf16.mxu0 0
    %1212 = vmatpush1.bf16.msra.mxu0 %v1058
    %1213 = vmatprep.subr.bf16.mxu0 0
    %1214 = vmatpush1.bf16.msra.mxu0 %v1061
    %1215 = vmatprep.subr.bf16.mxu0 0
    %1216 = vmatpush1.bf16.msra.mxu0 0
    %1217 = vmatprep.subr.bf16.mxu0 0
    %1218 = vmatpush1.bf16.msra.mxu0 0
    %1219 = vmatprep.subr.bf16.mxu0 0
    %1220 = vmatpush1.bf16.msra.mxu0 0
    %1221 = vmatprep.subr.bf16.mxu0 0
    %1222 = vmatpush1.bf16.msra.mxu0 0
    %1223 = vmatprep.subr.bf16.mxu0 0
    %1224 = vmatpush1.bf16.msra.mxu0 0
    %1225 = vmatprep.subr.bf16.mxu0 0
    %1226 = vmatpush1.bf16.msra.mxu0 0
    %1227 = vmatprep.subr.bf16.mxu0 0
    %1228 = vmatpush1.bf16.msra.mxu0 0
    %1229 = vmatprep.subr.bf16.mxu0 0
    %1230 = vmatpush1.bf16.msra.mxu0 0
    %1231 = vmatprep.mubr.bf16.mxu0 0
    %1232 = vmatmul.mubr.bf16.gmra.mrb[0].mxu0 %v341
    %v1233 = vpop.f32.mrb[0].mxu0
    %v1234 = vadd.f32 0.0, %v1233
    %v1235 = vpop.f32.mrb[0].mxu0
    %v1236 = vpop.f32.mrb[0].mxu0
    %v1237 = vadd.f32 0.0, %v1236
    %v1238 = vpop.f32.mrb[0].mxu0
    %1239 = vmatprep.mubr.bf16.mxu0 0
    %1240 = vmatmul.mubr.bf16.gmra.mrb[0].mxu0 %v342
    %v1241 = vpop.f32.mrb[0].mxu0
    %v1242 = vadd.f32 0.0, %v1241
    %v1243 = vpop.f32.mrb[0].mxu0
    %v1244 = vpop.f32.mrb[0].mxu0
    %v1245 = vadd.f32 0.0, %v1244
    %v1246 = vpop.f32.mrb[0].mxu0
    %1247 = vmatprep.mubr.bf16.mxu0 0
    %1248 = vmatmul.mubr.bf16.gmra.mrb[0].mxu0 %v343
    %v1249 = vpop.f32.mrb[0].mxu0
    %v1250 = vadd.f32 0.0, %v1249
    %v1251 = vpop.f32.mrb[0].mxu0
    %v1252 = vpop.f32.mrb[0].mxu0
    %v1253 = vadd.f32 0.0, %v1252
    %v1254 = vpop.f32.mrb[0].mxu0
    %1255 = vmatprep.mubr.bf16.mxu0 0
    %1256 = vmatmul.mubr.bf16.gmra.mrb[0].mxu0 %v344
    %v1257 = vpop.f32.mrb[0].mxu0
    %v1258 = vadd.f32 0.0, %v1257
    %v1259 = vpop.f32.mrb[0].mxu0
    %v1260 = vpop.f32.mrb[0].mxu0
    %v1261 = vadd.f32 0.0, %v1260
    %v1262 = vpop.f32.mrb[0].mxu0
    %1263 = vmatprep.mubr.bf16.mxu0 0
    %1264 = vmatmul.mubr.bf16.gmra.mrb[0].mxu0 %v345
    %v1265 = vpop.f32.mrb[0].mxu0
    %v1266 = vadd.f32 0.0, %v1265
    %v1267 = vpop.f32.mrb[0].mxu0
    %v1268 = vpop.f32.mrb[0].mxu0
    %v1269 = vadd.f32 0.0, %v1268
    %v1270 = vpop.f32.mrb[0].mxu0
    %1271 = vmatprep.mubr.bf16.mxu0 0
    %1272 = vmatmul.mubr.bf16.gmra.mrb[0].mxu0 %v346
    %v1273 = vpop.f32.mrb[0].mxu0
    %v1274 = vadd.f32 0.0, %v1273
    %v1275 = vpop.f32.mrb[0].mxu0
    %v1276 = vpop.f32.mrb[0].mxu0
    %v1277 = vadd.f32 0.0, %v1276
    %v1278 = vpop.f32.mrb[0].mxu0
    %1279 = vmatprep.mubr.bf16.mxu0 0
    %1280 = vmatmul.mubr.bf16.gmra.mrb[0].mxu0 %v347
    %v1281 = vpop.f32.mrb[0].mxu0
    %v1282 = vadd.f32 0.0, %v1281
    %v1283 = vpop.f32.mrb[0].mxu0
    %v1284 = vpop.f32.mrb[0].mxu0
    %v1285 = vadd.f32 0.0, %v1284
    %v1286 = vpop.f32.mrb[0].mxu0
    %1287 = vmatprep.mubr.bf16.mxu0 0
    %1288 = vmatmul.mubr.bf16.gmra.mrb[0].mxu0 %v348
    %v1289 = vpop.f32.mrb[0].mxu0
    %v1290 = vadd.f32 0.0, %v1289
    %v1291 = vpop.f32.mrb[0].mxu0
    %v1292 = vpop.f32.mrb[0].mxu0
    %v1293 = vadd.f32 0.0, %v1292
    %v1294 = vpop.f32.mrb[0].mxu0
    %1295 = vdwg.mxu0
    %v1296 = vmul.f32 %v1121, %v1123
    %v1297 = vmul.f32 %v1125, %v1127
    %v1298 = vmul.f32 %v1131, %v1133
    %v1299 = vmul.f32 %v1135, %v1137
    %v1300 = vmul.f32 %v1141, %v1143
    %v1301 = vmul.f32 %v1145, %v1147
    %v1302 = vmul.f32 %v1151, %v1153
    %v1303 = vmul.f32 %v1155, %v1157
    %v1304 = vmul.f32 %v1161, %v1163
    %v1305 = vmul.f32 %v1165, %v1167
    %v1306 = vmul.f32 %v1171, %v1173
    %v1307 = vmul.f32 %v1175, %v1177
    %v1308 = vmul.f32 %v1181, %v1183
    %v1309 = vmul.f32 %v1185, %v1187
    %v1310 = vmul.f32 %v1191, %v1193
    %v1311 = vmul.f32 %v1195, %v1197
    %v1312 = vld [vmem:[%s3 + $0x1] sm:$0x1]
    %v1314 = vlaneseq
    %v1315 = vshrl.u32 %v1314, 7
    %v1316 = vsub.s32 0, %v1315
    %v1317 = vrot.slane %v1312, %v1316
    %v1319 = vadd.f32 %v1296, %v1317
    %v1320 = vadd.f32 %v1297, %v1317
    %v1321 = vadd.f32 %v1298, %v1317
    %v1322 = vadd.f32 %v1299, %v1317
    %v1323 = vadd.f32 %v1300, %v1317
    %v1324 = vadd.f32 %v1301, %v1317
    %v1325 = vadd.f32 %v1302, %v1317
    %v1326 = vadd.f32 %v1303, %v1317
    %v1327 = vadd.f32 %v1304, %v1317
    %v1328 = vadd.f32 %v1305, %v1317
    %v1329 = vadd.f32 %v1306, %v1317
    %v1330 = vadd.f32 %v1307, %v1317
    %v1331 = vadd.f32 %v1308, %v1317
    %v1332 = vadd.f32 %v1309, %v1317
    %v1333 = vadd.f32 %v1310, %v1317
    %v1334 = vadd.f32 %v1311, %v1317
    %1335 = vmax.xlane.f32.xlu0 %v1319
    %v1336 = vpop.xlane.xlu0 %1335
    %1337 = vmax.xlane.f32.xlu0 %v1320
    %v1338 = vpop.xlane.xlu0 %1337
    %1339 = vmax.xlane.f32.xlu0 %v1321
    %v1340 = vpop.xlane.xlu0 %1339
    %1341 = vmax.xlane.f32.xlu0 %v1322
    %v1342 = vpop.xlane.xlu0 %1341
    %1343 = vmax.xlane.f32.xlu0 %v1323
    %v1344 = vpop.xlane.xlu0 %1343
    %1345 = vmax.xlane.f32.xlu0 %v1324
    %v1346 = vpop.xlane.xlu0 %1345
    %1347 = vmax.xlane.f32.xlu0 %v1325
    %v1348 = vpop.xlane.xlu0 %1347
    %1349 = vmax.xlane.f32.xlu0 %v1326
    %v1350 = vpop.xlane.xlu0 %1349
    %1351 = vmax.xlane.f32.xlu0 %v1327
    %v1352 = vpop.xlane.xlu0 %1351
    %1353 = vmax.xlane.f32.xlu0 %v1328
    %v1354 = vpop.xlane.xlu0 %1353
    %1355 = vmax.xlane.f32.xlu0 %v1329
    %v1356 = vpop.xlane.xlu0 %1355
    %1357 = vmax.xlane.f32.xlu0 %v1330
    %v1358 = vpop.xlane.xlu0 %1357
    %1359 = vmax.xlane.f32.xlu0 %v1331
    %v1360 = vpop.xlane.xlu0 %1359
    %1361 = vmax.xlane.f32.xlu0 %v1332
    %v1362 = vpop.xlane.xlu0 %1361
    %1363 = vmax.xlane.f32.xlu0 %v1333
    %v1364 = vpop.xlane.xlu0 %1363
    %1365 = vmax.xlane.f32.xlu0 %v1334
    %v1366 = vpop.xlane.xlu0 %1365
    %v1367 = vsub.f32 %v1319, %v1336
    %v1368 = vsub.f32 %v1320, %v1338
    %v1369 = vsub.f32 %v1321, %v1340
    %v1370 = vsub.f32 %v1322, %v1342
    %v1371 = vsub.f32 %v1323, %v1344
    %v1372 = vsub.f32 %v1324, %v1346
    %v1373 = vsub.f32 %v1325, %v1348
    %v1374 = vsub.f32 %v1326, %v1350
    %v1375 = vsub.f32 %v1327, %v1352
    %v1376 = vsub.f32 %v1328, %v1354
    %v1377 = vsub.f32 %v1329, %v1356
    %v1378 = vsub.f32 %v1330, %v1358
    %v1379 = vsub.f32 %v1331, %v1360
    %v1380 = vsub.f32 %v1332, %v1362
    %v1381 = vsub.f32 %v1333, %v1364
    %v1382 = vsub.f32 %v1334, %v1366
    %v1383 = vmul.f32 %v1367, 1.442695
    %v1384 = vpow.pop %v1383
    %v1385 = vmul.f32 %v1368, 1.442695
    %v1386 = vpow.pop %v1385
    %v1387 = vmul.f32 %v1369, 1.442695
    %v1388 = vpow.pop %v1387
    %v1389 = vmul.f32 %v1370, 1.442695
    %v1390 = vpow.pop %v1389
    %v1391 = vmul.f32 %v1371, 1.442695
    %v1392 = vpow.pop %v1391
    %v1393 = vmul.f32 %v1372, 1.442695
    %v1394 = vpow.pop %v1393
    %v1395 = vmul.f32 %v1373, 1.442695
    %v1396 = vpow.pop %v1395
    %v1397 = vmul.f32 %v1374, 1.442695
    %v1398 = vpow.pop %v1397
    %v1399 = vmul.f32 %v1375, 1.442695
    %v1400 = vpow.pop %v1399
    %v1401 = vmul.f32 %v1376, 1.442695
    %v1402 = vpow.pop %v1401
    %v1403 = vmul.f32 %v1377, 1.442695
    %v1404 = vpow.pop %v1403
    %v1405 = vmul.f32 %v1378, 1.442695
    %v1406 = vpow.pop %v1405
    %v1407 = vmul.f32 %v1379, 1.442695
    %v1408 = vpow.pop %v1407
    %v1409 = vmul.f32 %v1380, 1.442695
    %v1410 = vpow.pop %v1409
    %v1411 = vmul.f32 %v1381, 1.442695
    %v1412 = vpow.pop %v1411
    %v1413 = vmul.f32 %v1382, 1.442695
    %v1414 = vpow.pop %v1413
    %1415 = vadd.xlane.f32.xlu0 %v1384
    %v1416 = vpop.xlane.xlu0 %1415
    %1417 = vadd.xlane.f32.xlu0 %v1386
    %v1418 = vpop.xlane.xlu0 %1417
    %1419 = vadd.xlane.f32.xlu0 %v1388
    %v1420 = vpop.xlane.xlu0 %1419
    %1421 = vadd.xlane.f32.xlu0 %v1390
    %v1422 = vpop.xlane.xlu0 %1421
    %1423 = vadd.xlane.f32.xlu0 %v1392
    %v1424 = vpop.xlane.xlu0 %1423
    %1425 = vadd.xlane.f32.xlu0 %v1394
    %v1426 = vpop.xlane.xlu0 %1425
    %1427 = vadd.xlane.f32.xlu0 %v1396
    %v1428 = vpop.xlane.xlu0 %1427
    %1429 = vadd.xlane.f32.xlu0 %v1398
    %v1430 = vpop.xlane.xlu0 %1429
    %1431 = vadd.xlane.f32.xlu0 %v1400
    %v1432 = vpop.xlane.xlu0 %1431
    %1433 = vadd.xlane.f32.xlu0 %v1402
    %v1434 = vpop.xlane.xlu0 %1433
    %1435 = vadd.xlane.f32.xlu0 %v1404
    %v1436 = vpop.xlane.xlu0 %1435
    %1437 = vadd.xlane.f32.xlu0 %v1406
    %v1438 = vpop.xlane.xlu0 %1437
    %1439 = vadd.xlane.f32.xlu0 %v1408
    %v1440 = vpop.xlane.xlu0 %1439
    %1441 = vadd.xlane.f32.xlu0 %v1410
    %v1442 = vpop.xlane.xlu0 %1441
    %1443 = vadd.xlane.f32.xlu0 %v1412
    %v1444 = vpop.xlane.xlu0 %1443
    %1445 = vadd.xlane.f32.xlu0 %v1414
    %v1446 = vpop.xlane.xlu0 %1445
    %v1447 = vrcp.pop %v1416
    %v1448 = vrcp.pop %v1418
    %v1449 = vrcp.pop %v1420
    %v1450 = vrcp.pop %v1422
    %v1451 = vrcp.pop %v1424
    %v1452 = vrcp.pop %v1426
    %v1453 = vrcp.pop %v1428
    %v1454 = vrcp.pop %v1430
    %v1455 = vrcp.pop %v1432
    %v1456 = vrcp.pop %v1434
    %v1457 = vrcp.pop %v1436
    %v1458 = vrcp.pop %v1438
    %v1459 = vrcp.pop %v1440
    %v1460 = vrcp.pop %v1442
    %v1461 = vrcp.pop %v1444
    %v1462 = vrcp.pop %v1446
    %v1463 = vmul.f32 %v1384, %v1447
    %v1464 = vmul.f32 %v1386, %v1448
    %v1465 = vmul.f32 %v1388, %v1449
    %v1466 = vmul.f32 %v1390, %v1450
    %v1467 = vmul.f32 %v1392, %v1451
    %v1468 = vmul.f32 %v1394, %v1452
    %v1469 = vmul.f32 %v1396, %v1453
    %v1470 = vmul.f32 %v1398, %v1454
    %v1471 = vmul.f32 %v1400, %v1455
    %v1472 = vmul.f32 %v1402, %v1456
    %v1473 = vmul.f32 %v1404, %v1457
    %v1474 = vmul.f32 %v1406, %v1458
    %v1475 = vmul.f32 %v1408, %v1459
    %v1476 = vmul.f32 %v1410, %v1460
    %v1477 = vmul.f32 %v1412, %v1461
    %v1478 = vmul.f32 %v1414, %v1462
    %v1479 = vmul.f32 %v1463, %v1234
    %v1480 = vmul.f32 %v1464, %v1237
    %v1481 = vmul.f32 %v1465, %v1242
    %v1482 = vmul.f32 %v1466, %v1245
    %v1483 = vmul.f32 %v1467, %v1250
    %v1484 = vmul.f32 %v1468, %v1253
    %v1485 = vmul.f32 %v1469, %v1258
    %v1486 = vmul.f32 %v1470, %v1261
    %v1487 = vmul.f32 %v1471, %v1266
    %v1488 = vmul.f32 %v1472, %v1269
    %v1489 = vmul.f32 %v1473, %v1274
    %v1490 = vmul.f32 %v1474, %v1277
    %v1491 = vmul.f32 %v1475, %v1282
    %v1492 = vmul.f32 %v1476, %v1285
    %v1493 = vmul.f32 %v1477, %v1290
    %v1494 = vmul.f32 %v1478, %v1293
    %v1495 = vpack.c.bf16 %v1480, %v1479
    %v1496 = vpack.c.bf16 %v1482, %v1481
    %v1497 = vpack.c.bf16 %v1484, %v1483
    %v1498 = vpack.c.bf16 %v1486, %v1485
    %v1499 = vpack.c.bf16 %v1488, %v1487
    %v1500 = vpack.c.bf16 %v1490, %v1489
    %v1501 = vpack.c.bf16 %v1492, %v1491
    %v1502 = vpack.c.bf16 %v1494, %v1493
    %v1503 = vld [vmem:[%s7] sm:$0xff]
    %v1504 = vld [vmem:[%s7 + $0x8] sm:$0xff]
    %v1505 = vld [vmem:[%s7 + $0x10] sm:$0xff]
    %v1506 = vld [vmem:[%s7 + $0x18] sm:$0xff]
    %v1507 = vld [vmem:[%s7 + $0x20] sm:$0xff]
    %v1508 = vld [vmem:[%s7 + $0x28] sm:$0xff]
    %v1509 = vld [vmem:[%s7 + $0x30] sm:$0xff]
    %v1510 = vld [vmem:[%s7 + $0x38] sm:$0xff]
    %v1511 = vld [vmem:[%s7 + $0x40] sm:$0xff]
    %v1512 = vld [vmem:[%s7 + $0x48] sm:$0xff]
    %v1513 = vld [vmem:[%s7 + $0x50] sm:$0xff]
    %v1514 = vld [vmem:[%s7 + $0x58] sm:$0xff]
    %v1515 = vld [vmem:[%s7 + $0x60] sm:$0xff]
    %v1516 = vld [vmem:[%s7 + $0x68] sm:$0xff]
    %v1517 = vld [vmem:[%s7 + $0x70] sm:$0xff]
    %v1518 = vld [vmem:[%s7 + $0x78] sm:$0xff]
    %v1519 = vld [vmem:[#allocation2] sm:$0xff]
    %v1520 = vld [vmem:[#allocation2 + $0x8] sm:$0xff]
    %v1521 = vld [vmem:[#allocation2 + $0x10] sm:$0xff]
    %v1522 = vld [vmem:[#allocation2 + $0x18] sm:$0xff]
    %v1523 = vld [vmem:[#allocation2 + $0x20] sm:$0xff]
    %v1524 = vld [vmem:[#allocation2 + $0x28] sm:$0xff]
    %v1525 = vld [vmem:[#allocation2 + $0x30] sm:$0xff]
    %v1526 = vld [vmem:[#allocation2 + $0x38] sm:$0xff]
    %v1527 = vld [vmem:[#allocation2 + $0x40] sm:$0xff]
    %v1528 = vld [vmem:[#allocation2 + $0x48] sm:$0xff]
    %v1529 = vld [vmem:[#allocation2 + $0x50] sm:$0xff]
    %v1530 = vld [vmem:[#allocation2 + $0x58] sm:$0xff]
    %v1531 = vld [vmem:[#allocation2 + $0x60] sm:$0xff]
    %v1532 = vld [vmem:[#allocation2 + $0x68] sm:$0xff]
    %v1533 = vld [vmem:[#allocation2 + $0x70] sm:$0xff]
    %v1534 = vld [vmem:[#allocation2 + $0x78] sm:$0xff]
    %v1535 = vld [vmem:[#allocation2 + $0x80] sm:$0xff]
    %v1536 = vld [vmem:[#allocation2 + $0x88] sm:$0xff]
    %v1537 = vld [vmem:[#allocation2 + $0x90] sm:$0xff]
    %v1538 = vld [vmem:[#allocation2 + $0x98] sm:$0xff]
    %v1539 = vld [vmem:[#allocation2 + $0xa0] sm:$0xff]
    %v1540 = vld [vmem:[#allocation2 + $0xa8] sm:$0xff]
    %v1541 = vld [vmem:[#allocation2 + $0xb0] sm:$0xff]
    %v1542 = vld [vmem:[#allocation2 + $0xb8] sm:$0xff]
    %v1543 = vld [vmem:[#allocation2 + $0xc0] sm:$0xff]
    %v1544 = vld [vmem:[#allocation2 + $0xc8] sm:$0xff]
    %v1545 = vld [vmem:[#allocation2 + $0xd0] sm:$0xff]
    %v1546 = vld [vmem:[#allocation2 + $0xd8] sm:$0xff]
    %v1547 = vld [vmem:[#allocation2 + $0xe0] sm:$0xff]
    %v1548 = vld [vmem:[#allocation2 + $0xe8] sm:$0xff]
    %v1549 = vld [vmem:[#allocation2 + $0xf0] sm:$0xff]
    %v1550 = vld [vmem:[#allocation2 + $0xf8] sm:$0xff]
    %v1551 = vld [vmem:[#allocation7] sm:$0xf]
    %v1552 = vld [vmem:[#allocation7 + $0x4] sm:$0xf]
    %v1553 = vld [vmem:[#allocation7 + $0x8] sm:$0xf]
    %v1554 = vld [vmem:[#allocation7 + $0xc] sm:$0xf]
    %v1555 = vld [vmem:[#allocation7 + $0x10] sm:$0xf]
    %v1556 = vld [vmem:[#allocation7 + $0x14] sm:$0xf]
    %v1557 = vld [vmem:[#allocation7 + $0x18] sm:$0xf]
    %v1558 = vld [vmem:[#allocation7 + $0x1c] sm:$0xf]
    %v1559 = vld [vmem:[#allocation7 + $0x20] sm:$0xf]
    %v1560 = vld [vmem:[#allocation7 + $0x24] sm:$0xf]
    %v1561 = vld [vmem:[#allocation7 + $0x28] sm:$0xf]
    %v1562 = vld [vmem:[#allocation7 + $0x2c] sm:$0xf]
    %v1563 = vld [vmem:[#allocation7 + $0x30] sm:$0xf]
    %v1564 = vld [vmem:[#allocation7 + $0x34] sm:$0xf]
    %v1565 = vld [vmem:[#allocation7 + $0x38] sm:$0xf]
    %v1566 = vld [vmem:[#allocation7 + $0x3c] sm:$0xf]
    %v1583 = vunpack.c.l.b16 %v1551
    %v1584 = vunpack.c.l.b16 %v1552
    %v1585 = vunpack.c.l.b16 %v1553
    %v1586 = vunpack.c.l.b16 %v1554
    %v1587 = vunpack.c.l.b16 %v1555
    %v1588 = vunpack.c.l.b16 %v1556
    %v1589 = vunpack.c.l.b16 %v1557
    %v1590 = vunpack.c.l.b16 %v1558
    %v1591 = vunpack.c.l.b16 %v1559
    %v1592 = vunpack.c.l.b16 %v1560
    %v1593 = vunpack.c.l.b16 %v1561
    %v1594 = vunpack.c.l.b16 %v1562
    %v1595 = vunpack.c.l.b16 %v1563
    %v1596 = vunpack.c.l.b16 %v1564
    %v1597 = vunpack.c.l.b16 %v1565
    %v1598 = vunpack.c.l.b16 %v1566
    %v1599 = vpack.c.b16 %v1584, %v1583
    %v1600 = vpack.c.b16 %v1586, %v1585
    %v1601 = vpack.c.b16 %v1588, %v1587
    %v1602 = vpack.c.b16 %v1590, %v1589
    %v1603 = vpack.c.b16 %v1592, %v1591
    %v1604 = vpack.c.b16 %v1594, %v1593
    %v1605 = vpack.c.b16 %v1596, %v1595
    %v1606 = vpack.c.b16 %v1598, %v1597
    %1615 = vmatprep.subr.bf16.mxu0 0
    %1616 = vmatpush1.bf16.msra.mxu0 %v918
    %1617 = vmatprep.subr.bf16.mxu0 0
    %1618 = vmatpush1.bf16.msra.mxu0 %v919
    %1619 = vmatprep.subr.bf16.mxu0 0
    %1620 = vmatpush1.bf16.msra.mxu0 %v920
    %1621 = vmatprep.subr.bf16.mxu0 0
    %1622 = vmatpush1.bf16.msra.mxu0 %v921
    %1623 = vmatprep.subr.bf16.mxu0 0
    %1624 = vmatpush1.bf16.msra.mxu0 %v1495
    %1625 = vmatprep.subr.bf16.mxu0 0
    %1626 = vmatpush1.bf16.msra.mxu0 %v1496
    %1627 = vmatprep.subr.bf16.mxu0 0
    %1628 = vmatpush1.bf16.msra.mxu0 %v1497
    %1629 = vmatprep.subr.bf16.mxu0 0
    %1630 = vmatpush1.bf16.msra.mxu0 %v1498
    %1631 = vmatprep.subr.bf16.mxu0 0
    %1632 = vmatpush1.bf16.msra.mxu0 0
    %1633 = vmatprep.subr.bf16.mxu0 0
    %1634 = vmatpush1.bf16.msra.mxu0 0
    %1635 = vmatprep.subr.bf16.mxu0 0
    %1636 = vmatpush1.bf16.msra.mxu0 0
    %1637 = vmatprep.subr.bf16.mxu0 0
    %1638 = vmatpush1.bf16.msra.mxu0 0
    %1639 = vmatprep.subr.bf16.mxu0 0
    %1640 = vmatpush1.bf16.msra.mxu0 0
    %1641 = vmatprep.subr.bf16.mxu0 0
    %1642 = vmatpush1.bf16.msra.mxu0 0
    %1643 = vmatprep.subr.bf16.mxu0 0
    %1644 = vmatpush1.bf16.msra.mxu0 0
    %1645 = vmatprep.subr.bf16.mxu0 0
    %1646 = vmatpush1.bf16.msra.mxu0 0
    %1647 = vmatprep.mubr.bf16.mxu0 0
    %1648 = vmatmul.mubr.bf16.gmra.mrb[0].mxu0 %v1599
    %v1649 = vpop.f32.mrb[0].mxu0
    %v1650 = vadd.f32 0.0, %v1649
    %v1651 = vpop.f32.mrb[0].mxu0
    %v1652 = vpop.f32.mrb[0].mxu0
    %v1653 = vadd.f32 0.0, %v1652
    %v1654 = vpop.f32.mrb[0].mxu0
    %1655 = vmatprep.mubr.bf16.mxu0 0
    %1656 = vmatmul.mubr.bf16.gmra.mrb[0].mxu0 %v1600
    %v1657 = vpop.f32.mrb[0].mxu0
    %v1658 = vadd.f32 0.0, %v1657
    %v1659 = vpop.f32.mrb[0].mxu0
    %v1660 = vpop.f32.mrb[0].mxu0
    %v1661 = vadd.f32 0.0, %v1660
    %v1662 = vpop.f32.mrb[0].mxu0
    %1663 = vmatprep.mubr.bf16.mxu0 0
    %1664 = vmatmul.mubr.bf16.gmra.mrb[0].mxu0 %v1601
    %v1665 = vpop.f32.mrb[0].mxu0
    %v1666 = vadd.f32 0.0, %v1665
    %v1667 = vpop.f32.mrb[0].mxu0
    %v1668 = vpop.f32.mrb[0].mxu0
    %v1669 = vadd.f32 0.0, %v1668
    %v1670 = vpop.f32.mrb[0].mxu0
    %1671 = vmatprep.mubr.bf16.mxu0 0
    %1672 = vmatmul.mubr.bf16.gmra.mrb[0].mxu0 %v1602
    %v1673 = vpop.f32.mrb[0].mxu0
    %v1674 = vadd.f32 0.0, %v1673
    %v1675 = vpop.f32.mrb[0].mxu0
    %v1676 = vpop.f32.mrb[0].mxu0
    %v1677 = vadd.f32 0.0, %v1676
    %v1678 = vpop.f32.mrb[0].mxu0
    %1679 = vmatprep.mubr.bf16.mxu0 0
    %1680 = vmatmul.mubr.bf16.gmra.mrb[0].mxu0 %v1603
    %v1681 = vpop.f32.mrb[0].mxu0
    %v1682 = vadd.f32 0.0, %v1681
    %v1683 = vpop.f32.mrb[0].mxu0
    %v1684 = vpop.f32.mrb[0].mxu0
    %v1685 = vadd.f32 0.0, %v1684
    %v1686 = vpop.f32.mrb[0].mxu0
    %1687 = vmatprep.mubr.bf16.mxu0 0
    %1688 = vmatmul.mubr.bf16.gmra.mrb[0].mxu0 %v1604
    %v1689 = vpop.f32.mrb[0].mxu0
    %v1690 = vadd.f32 0.0, %v1689
    %v1691 = vpop.f32.mrb[0].mxu0
    %v1692 = vpop.f32.mrb[0].mxu0
    %v1693 = vadd.f32 0.0, %v1692
    %v1694 = vpop.f32.mrb[0].mxu0
    %1695 = vmatprep.mubr.bf16.mxu0 0
    %1696 = vmatmul.mubr.bf16.gmra.mrb[0].mxu0 %v1605
    %v1697 = vpop.f32.mrb[0].mxu0
    %v1698 = vadd.f32 0.0, %v1697
    %v1699 = vpop.f32.mrb[0].mxu0
    %v1700 = vpop.f32.mrb[0].mxu0
    %v1701 = vadd.f32 0.0, %v1700
    %v1702 = vpop.f32.mrb[0].mxu0
    %1703 = vmatprep.mubr.bf16.mxu0 0
    %1704 = vmatmul.mubr.bf16.gmra.mrb[0].mxu0 %v1606
    %v1705 = vpop.f32.mrb[0].mxu0
    %v1706 = vadd.f32 0.0, %v1705
    %v1707 = vpop.f32.mrb[0].mxu0
    %v1708 = vpop.f32.mrb[0].mxu0
    %v1709 = vadd.f32 0.0, %v1708
    %v1710 = vpop.f32.mrb[0].mxu0
    %1711 = vdwg.mxu0
    %v1712 = vadd.f32 %v1519, %v1650
    %v1713 = vadd.f32 %v1521, %v1653
    %v1714 = vadd.f32 %v1523, %v1658
    %v1715 = vadd.f32 %v1525, %v1661
    %v1716 = vadd.f32 %v1527, %v1666
    %v1717 = vadd.f32 %v1529, %v1669
    %v1718 = vadd.f32 %v1531, %v1674
    %v1719 = vadd.f32 %v1533, %v1677
    %v1720 = vadd.f32 %v1535, %v1682
    %v1721 = vadd.f32 %v1537, %v1685
    %v1722 = vadd.f32 %v1539, %v1690
    %v1723 = vadd.f32 %v1541, %v1693
    %v1724 = vadd.f32 %v1543, %v1698
    %v1725 = vadd.f32 %v1545, %v1701
    %v1726 = vadd.f32 %v1547, %v1706
    %v1727 = vadd.f32 %v1549, %v1709
    %1729 = vset.pattern.permute.xlu0 0
    %1730 = vperm.xlu0 %1729, %v1503
    %v1731 = vpop.permute.xlu0 %1730
    %1734 = vset.pattern.permute.xlu0 0
    %1735 = vperm.xlu0 %1734, %v1504
    %v1736 = vpop.permute.xlu0 %1735
    %1739 = vset.pattern.permute.xlu0 0
    %1740 = vperm.xlu0 %1739, %v1505
    %v1741 = vpop.permute.xlu0 %1740
    %1744 = vset.pattern.permute.xlu0 0
    %1745 = vperm.xlu0 %1744, %v1506
    %v1746 = vpop.permute.xlu0 %1745
    %1749 = vset.pattern.permute.xlu0 0
    %1750 = vperm.xlu0 %1749, %v1507
    %v1751 = vpop.permute.xlu0 %1750
    %1754 = vset.pattern.permute.xlu0 0
    %1755 = vperm.xlu0 %1754, %v1508
    %v1756 = vpop.permute.xlu0 %1755
    %1759 = vset.pattern.permute.xlu0 0
    %1760 = vperm.xlu0 %1759, %v1509
    %v1761 = vpop.permute.xlu0 %1760
    %1764 = vset.pattern.permute.xlu0 0
    %1765 = vperm.xlu0 %1764, %v1510
    %v1766 = vpop.permute.xlu0 %1765
    %1769 = vset.pattern.permute.xlu0 0
    %1770 = vperm.xlu0 %1769, %v1511
    %v1771 = vpop.permute.xlu0 %1770
    %1774 = vset.pattern.permute.xlu0 0
    %1775 = vperm.xlu0 %1774, %v1512
    %v1776 = vpop.permute.xlu0 %1775
    %1779 = vset.pattern.permute.xlu0 0
    %1780 = vperm.xlu0 %1779, %v1513
    %v1781 = vpop.permute.xlu0 %1780
    %1784 = vset.pattern.permute.xlu0 0
    %1785 = vperm.xlu0 %1784, %v1514
    %v1786 = vpop.permute.xlu0 %1785
    %1789 = vset.pattern.permute.xlu0 0
    %1790 = vperm.xlu0 %1789, %v1515
    %v1791 = vpop.permute.xlu0 %1790
    %1794 = vset.pattern.permute.xlu0 0
    %1795 = vperm.xlu0 %1794, %v1516
    %v1796 = vpop.permute.xlu0 %1795
    %1799 = vset.pattern.permute.xlu0 0
    %1800 = vperm.xlu0 %1799, %v1517
    %v1801 = vpop.permute.xlu0 %1800
    %1804 = vset.pattern.permute.xlu0 0
    %1805 = vperm.xlu0 %1804, %v1518
    %v1806 = vpop.permute.xlu0 %1805
    %v1808 = vadd.f32 %v1712, %v1731
    %v1809 = vadd.f32 %v1713, %v1736
    %v1810 = vadd.f32 %v1714, %v1741
    %v1811 = vadd.f32 %v1715, %v1746
    %v1812 = vadd.f32 %v1716, %v1751
    %v1813 = vadd.f32 %v1717, %v1756
    %v1814 = vadd.f32 %v1718, %v1761
    %v1815 = vadd.f32 %v1719, %v1766
    %v1816 = vadd.f32 %v1720, %v1771
    %v1817 = vadd.f32 %v1721, %v1776
    %v1818 = vadd.f32 %v1722, %v1781
    %v1819 = vadd.f32 %v1723, %v1786
    %v1820 = vadd.f32 %v1724, %v1791
    %v1821 = vadd.f32 %v1725, %v1796
    %v1822 = vadd.f32 %v1726, %v1801
    %v1823 = vadd.f32 %v1727, %v1806
    %1824 = vmatprep.subr.bf16.mxu0 0
    %1825 = vmatpush1.bf16.msra.mxu0 %v922
    %1826 = vmatprep.subr.bf16.mxu0 0
    %1827 = vmatpush1.bf16.msra.mxu0 %v923
    %1828 = vmatprep.subr.bf16.mxu0 0
    %1829 = vmatpush1.bf16.msra.mxu0 %v924
    %1830 = vmatprep.subr.bf16.mxu0 0
    %1831 = vmatpush1.bf16.msra.mxu0 %v925
    %1832 = vmatprep.subr.bf16.mxu0 0
    %1833 = vmatpush1.bf16.msra.mxu0 %v1499
    %1834 = vmatprep.subr.bf16.mxu0 0
    %1835 = vmatpush1.bf16.msra.mxu0 %v1500
    %1836 = vmatprep.subr.bf16.mxu0 0
    %1837 = vmatpush1.bf16.msra.mxu0 %v1501
    %1838 = vmatprep.subr.bf16.mxu0 0
    %1839 = vmatpush1.bf16.msra.mxu0 %v1502
    %1840 = vmatprep.subr.bf16.mxu0 0
    %1841 = vmatpush1.bf16.msra.mxu0 0
    %1842 = vmatprep.subr.bf16.mxu0 0
    %1843 = vmatpush1.bf16.msra.mxu0 0
    %1844 = vmatprep.subr.bf16.mxu0 0
    %1845 = vmatpush1.bf16.msra.mxu0 0
    %1846 = vmatprep.subr.bf16.mxu0 0
    %1847 = vmatpush1.bf16.msra.mxu0 0
    %1848 = vmatprep.subr.bf16.mxu0 0
    %1849 = vmatpush1.bf16.msra.mxu0 0
    %1850 = vmatprep.subr.bf16.mxu0 0
    %1851 = vmatpush1.bf16.msra.mxu0 0
    %1852 = vmatprep.subr.bf16.mxu0 0
    %1853 = vmatpush1.bf16.msra.mxu0 0
    %1854 = vmatprep.subr.bf16.mxu0 0
    %1855 = vmatpush1.bf16.msra.mxu0 0
    %1856 = vmatprep.mubr.bf16.mxu0 0
    %1857 = vmatmul.mubr.bf16.gmra.mrb[0].mxu0 %v1599
    %v1858 = vpop.f32.mrb[0].mxu0
    %v1859 = vadd.f32 0.0, %v1858
    %v1860 = vpop.f32.mrb[0].mxu0
    %v1861 = vpop.f32.mrb[0].mxu0
    %v1862 = vadd.f32 0.0, %v1861
    %v1863 = vpop.f32.mrb[0].mxu0
    %1864 = vmatprep.mubr.bf16.mxu0 0
    %1865 = vmatmul.mubr.bf16.gmra.mrb[0].mxu0 %v1600
    %v1866 = vpop.f32.mrb[0].mxu0
    %v1867 = vadd.f32 0.0, %v1866
    %v1868 = vpop.f32.mrb[0].mxu0
    %v1869 = vpop.f32.mrb[0].mxu0
    %v1870 = vadd.f32 0.0, %v1869
    %v1871 = vpop.f32.mrb[0].mxu0
    %1872 = vmatprep.mubr.bf16.mxu0 0
    %1873 = vmatmul.mubr.bf16.gmra.mrb[0].mxu0 %v1601
    %v1874 = vpop.f32.mrb[0].mxu0
    %v1875 = vadd.f32 0.0, %v1874
    %v1876 = vpop.f32.mrb[0].mxu0
    %v1877 = vpop.f32.mrb[0].mxu0
    %v1878 = vadd.f32 0.0, %v1877
    %v1879 = vpop.f32.mrb[0].mxu0
    %1880 = vmatprep.mubr.bf16.mxu0 0
    %1881 = vmatmul.mubr.bf16.gmra.mrb[0].mxu0 %v1602
    %v1882 = vpop.f32.mrb[0].mxu0
    %v1883 = vadd.f32 0.0, %v1882
    %v1884 = vpop.f32.mrb[0].mxu0
    %v1885 = vpop.f32.mrb[0].mxu0
    %v1886 = vadd.f32 0.0, %v1885
    %v1887 = vpop.f32.mrb[0].mxu0
    %1888 = vmatprep.mubr.bf16.mxu0 0
    %1889 = vmatmul.mubr.bf16.gmra.mrb[0].mxu0 %v1603
    %v1890 = vpop.f32.mrb[0].mxu0
    %v1891 = vadd.f32 0.0, %v1890
    %v1892 = vpop.f32.mrb[0].mxu0
    %v1893 = vpop.f32.mrb[0].mxu0
    %v1894 = vadd.f32 0.0, %v1893
    %v1895 = vpop.f32.mrb[0].mxu0
    %1896 = vmatprep.mubr.bf16.mxu0 0
    %1897 = vmatmul.mubr.bf16.gmra.mrb[0].mxu0 %v1604
    %v1898 = vpop.f32.mrb[0].mxu0
    %v1899 = vadd.f32 0.0, %v1898
    %v1900 = vpop.f32.mrb[0].mxu0
    %v1901 = vpop.f32.mrb[0].mxu0
    %v1902 = vadd.f32 0.0, %v1901
    %v1903 = vpop.f32.mrb[0].mxu0
    %1904 = vmatprep.mubr.bf16.mxu0 0
    %1905 = vmatmul.mubr.bf16.gmra.mrb[0].mxu0 %v1605
    %v1906 = vpop.f32.mrb[0].mxu0
    %v1907 = vadd.f32 0.0, %v1906
    %v1908 = vpop.f32.mrb[0].mxu0
    %v1909 = vpop.f32.mrb[0].mxu0
    %v1910 = vadd.f32 0.0, %v1909
    %v1911 = vpop.f32.mrb[0].mxu0
    %1912 = vmatprep.mubr.bf16.mxu0 0
    %1913 = vmatmul.mubr.bf16.gmra.mrb[0].mxu0 %v1606
    %v1914 = vpop.f32.mrb[0].mxu0
    %v1915 = vadd.f32 0.0, %v1914
    %v1916 = vpop.f32.mrb[0].mxu0
    %v1917 = vpop.f32.mrb[0].mxu0
    %v1918 = vadd.f32 0.0, %v1917
    %v1919 = vpop.f32.mrb[0].mxu0
    %1920 = vdwg.mxu0
    %v1921 = vadd.f32 %v1520, %v1859
    %v1922 = vadd.f32 %v1522, %v1862
    %v1923 = vadd.f32 %v1524, %v1867
    %v1924 = vadd.f32 %v1526, %v1870
    %v1925 = vadd.f32 %v1528, %v1875
    %v1926 = vadd.f32 %v1530, %v1878
    %v1927 = vadd.f32 %v1532, %v1883
    %v1928 = vadd.f32 %v1534, %v1886
    %v1929 = vadd.f32 %v1536, %v1891
    %v1930 = vadd.f32 %v1538, %v1894
    %v1931 = vadd.f32 %v1540, %v1899
    %v1932 = vadd.f32 %v1542, %v1902
    %v1933 = vadd.f32 %v1544, %v1907
    %v1934 = vadd.f32 %v1546, %v1910
    %v1935 = vadd.f32 %v1548, %v1915
    %v1936 = vadd.f32 %v1550, %v1918
    %v1937 = vadd.f32 %v1921, %v1731
    %v1938 = vadd.f32 %v1922, %v1736
    %v1939 = vadd.f32 %v1923, %v1741
    %v1940 = vadd.f32 %v1924, %v1746
    %v1941 = vadd.f32 %v1925, %v1751
    %v1942 = vadd.f32 %v1926, %v1756
    %v1943 = vadd.f32 %v1927, %v1761
    %v1944 = vadd.f32 %v1928, %v1766
    %v1945 = vadd.f32 %v1929, %v1771
    %v1946 = vadd.f32 %v1930, %v1776
    %v1947 = vadd.f32 %v1931, %v1781
    %v1948 = vadd.f32 %v1932, %v1786
    %v1949 = vadd.f32 %v1933, %v1791
    %v1950 = vadd.f32 %v1934, %v1796
    %v1951 = vadd.f32 %v1935, %v1801
    %v1952 = vadd.f32 %v1936, %v1806
    %v1953 = vadd.f32 %v1808, %v1809
    %v1954 = vadd.f32 %v1953, %v1810
    %v1955 = vadd.f32 %v1954, %v1811
    %v1956 = vadd.f32 %v1955, %v1812
    %v1957 = vadd.f32 %v1956, %v1813
    %v1958 = vadd.f32 %v1957, %v1814
    %v1959 = vadd.f32 %v1958, %v1815
    %v1960 = vadd.f32 %v1959, %v1816
    %v1961 = vadd.f32 %v1960, %v1817
    %v1962 = vadd.f32 %v1961, %v1818
    %v1963 = vadd.f32 %v1962, %v1819
    %v1964 = vadd.f32 %v1963, %v1820
    %v1965 = vadd.f32 %v1964, %v1821
    %v1966 = vadd.f32 %v1965, %v1822
    %v1967 = vadd.f32 %v1966, %v1823
    %v1968 = vrot.slane %v1967, 4
    %v1969 = vadd.f32 %v1967, %v1968
    %v1970 = vrot.slane %v1969, 2
    %v1971 = vadd.f32 %v1969, %v1970
    %v1972 = vrot.slane %v1971, 1
    %v1973 = vadd.f32 %v1971, %v1972
    %v1974 = vadd.f32 %v1937, %v1938
    %v1975 = vadd.f32 %v1974, %v1939
    %v1976 = vadd.f32 %v1975, %v1940
    %v1977 = vadd.f32 %v1976, %v1941
    %v1978 = vadd.f32 %v1977, %v1942
    %v1979 = vadd.f32 %v1978, %v1943
    %v1980 = vadd.f32 %v1979, %v1944
    %v1981 = vadd.f32 %v1980, %v1945
    %v1982 = vadd.f32 %v1981, %v1946
    %v1983 = vadd.f32 %v1982, %v1947
    %v1984 = vadd.f32 %v1983, %v1948
    %v1985 = vadd.f32 %v1984, %v1949
    %v1986 = vadd.f32 %v1985, %v1950
    %v1987 = vadd.f32 %v1986, %v1951
    %v1988 = vadd.f32 %v1987, %v1952
    %v1989 = vrot.slane %v1988, 4
    %v1990 = vadd.f32 %v1988, %v1989
    %v1991 = vrot.slane %v1990, 2
    %v1992 = vadd.f32 %v1990, %v1991
    %v1993 = vrot.slane %v1992, 1
    %v1994 = vadd.f32 %v1992, %v1993
    %v1995 = vmul.f32 %v1973, 0.010204081
    %v1996 = vmul.f32 %v1994, 0.010204081
    %v1997 = vmul.f32 %v1808, %v1808
    %v1998 = vmul.f32 %v1937, %v1937
    %v1999 = vmul.f32 %v1809, %v1809
    %v2000 = vmul.f32 %v1938, %v1938
    %v2001 = vmul.f32 %v1810, %v1810
    %v2002 = vmul.f32 %v1939, %v1939
    %v2003 = vmul.f32 %v1811, %v1811
    %v2004 = vmul.f32 %v1940, %v1940
    %v2005 = vmul.f32 %v1812, %v1812
    %v2006 = vmul.f32 %v1941, %v1941
    %v2007 = vmul.f32 %v1813, %v1813
    %v2008 = vmul.f32 %v1942, %v1942
    %v2009 = vmul.f32 %v1814, %v1814
    %v2010 = vmul.f32 %v1943, %v1943
    %v2011 = vmul.f32 %v1815, %v1815
    %v2012 = vmul.f32 %v1944, %v1944
    %v2013 = vmul.f32 %v1816, %v1816
    %v2014 = vmul.f32 %v1945, %v1945
    %v2015 = vmul.f32 %v1817, %v1817
    %v2016 = vmul.f32 %v1946, %v1946
    %v2017 = vmul.f32 %v1818, %v1818
    %v2018 = vmul.f32 %v1947, %v1947
    %v2019 = vmul.f32 %v1819, %v1819
    %v2020 = vmul.f32 %v1948, %v1948
    %v2021 = vmul.f32 %v1820, %v1820
    %v2022 = vmul.f32 %v1949, %v1949
    %v2023 = vmul.f32 %v1821, %v1821
    %v2024 = vmul.f32 %v1950, %v1950
    %v2025 = vmul.f32 %v1822, %v1822
    %v2026 = vmul.f32 %v1951, %v1951
    %v2027 = vmul.f32 %v1823, %v1823
    %v2028 = vmul.f32 %v1952, %v1952
    %v2029 = vadd.f32 %v1997, %v1999
    %v2030 = vadd.f32 %v2029, %v2001
    %v2031 = vadd.f32 %v2030, %v2003
    %v2032 = vadd.f32 %v2031, %v2005
    %v2033 = vadd.f32 %v2032, %v2007
    %v2034 = vadd.f32 %v2033, %v2009
    %v2035 = vadd.f32 %v2034, %v2011
    %v2036 = vadd.f32 %v2035, %v2013
    %v2037 = vadd.f32 %v2036, %v2015
    %v2038 = vadd.f32 %v2037, %v2017
    %v2039 = vadd.f32 %v2038, %v2019
    %v2040 = vadd.f32 %v2039, %v2021
    %v2041 = vadd.f32 %v2040, %v2023
    %v2042 = vadd.f32 %v2041, %v2025
    %v2043 = vadd.f32 %v2042, %v2027
    %v2044 = vrot.slane %v2043, 4
    %v2045 = vadd.f32 %v2043, %v2044
    %v2046 = vrot.slane %v2045, 2
    %v2047 = vadd.f32 %v2045, %v2046
    %v2048 = vrot.slane %v2047, 1
    %v2049 = vadd.f32 %v2047, %v2048
    %v2050 = vadd.f32 %v1998, %v2000
    %v2051 = vadd.f32 %v2050, %v2002
    %v2052 = vadd.f32 %v2051, %v2004
    %v2053 = vadd.f32 %v2052, %v2006
    %v2054 = vadd.f32 %v2053, %v2008
    %v2055 = vadd.f32 %v2054, %v2010
    %v2056 = vadd.f32 %v2055, %v2012
    %v2057 = vadd.f32 %v2056, %v2014
    %v2058 = vadd.f32 %v2057, %v2016
    %v2059 = vadd.f32 %v2058, %v2018
    %v2060 = vadd.f32 %v2059, %v2020
    %v2061 = vadd.f32 %v2060, %v2022
    %v2062 = vadd.f32 %v2061, %v2024
    %v2063 = vadd.f32 %v2062, %v2026
    %v2064 = vadd.f32 %v2063, %v2028
    %v2065 = vrot.slane %v2064, 4
    %v2066 = vadd.f32 %v2064, %v2065
    %v2067 = vrot.slane %v2066, 2
    %v2068 = vadd.f32 %v2066, %v2067
    %v2069 = vrot.slane %v2068, 1
    %v2070 = vadd.f32 %v2068, %v2069
    %v2071 = vmul.f32 %v2049, 0.010204081
    %v2072 = vmul.f32 %v2070, 0.010204081
    %v2073 = vmul.f32 %v1995, %v1995
    %v2074 = vmul.f32 %v1996, %v1996
    %v2075 = vsub.f32 %v2071, %v2073
    %v2076 = vsub.f32 %v2072, %v2074
    %v2077 = vsub.f32 %v1808, %v1995
    %v2078 = vsub.f32 %v1937, %v1996
    %v2079 = vsub.f32 %v1809, %v1995
    %v2080 = vsub.f32 %v1938, %v1996
    %v2081 = vsub.f32 %v1810, %v1995
    %v2082 = vsub.f32 %v1939, %v1996
    %v2083 = vsub.f32 %v1811, %v1995
    %v2084 = vsub.f32 %v1940, %v1996
    %v2085 = vsub.f32 %v1812, %v1995
    %v2086 = vsub.f32 %v1941, %v1996
    %v2087 = vsub.f32 %v1813, %v1995
    %v2088 = vsub.f32 %v1942, %v1996
    %v2089 = vsub.f32 %v1814, %v1995
    %v2090 = vsub.f32 %v1943, %v1996
    %v2091 = vsub.f32 %v1815, %v1995
    %v2092 = vsub.f32 %v1944, %v1996
    %v2093 = vsub.f32 %v1816, %v1995
    %v2094 = vsub.f32 %v1945, %v1996
    %v2095 = vsub.f32 %v1817, %v1995
    %v2096 = vsub.f32 %v1946, %v1996
    %v2097 = vsub.f32 %v1818, %v1995
    %v2098 = vsub.f32 %v1947, %v1996
    %v2099 = vsub.f32 %v1819, %v1995
    %v2100 = vsub.f32 %v1948, %v1996
    %v2101 = vsub.f32 %v1820, %v1995
    %v2102 = vsub.f32 %v1949, %v1996
    %v2103 = vsub.f32 %v1821, %v1995
    %v2104 = vsub.f32 %v1950, %v1996
    %v2105 = vsub.f32 %v1822, %v1995
    %v2106 = vsub.f32 %v1951, %v1996
    %v2107 = vsub.f32 %v1823, %v1995
    %v2108 = vsub.f32 %v1952, %v1996
    %v2109 = vadd.f32 %v2075, 1e-05
    %v2110 = vadd.f32 %v2076, 1e-05
    %v2111 = vrsqrt.pop %v2109
    %v2112 = vrsqrt.pop %v2110
    %v2113 = vmul.f32 %v2077, %v2111
    %v2114 = vmul.f32 %v2078, %v2112
    %v2115 = vmul.f32 %v2079, %v2111
    %v2116 = vmul.f32 %v2080, %v2112
    %v2117 = vmul.f32 %v2081, %v2111
    %v2118 = vmul.f32 %v2082, %v2112
    %v2119 = vmul.f32 %v2083, %v2111
    %v2120 = vmul.f32 %v2084, %v2112
    %v2121 = vmul.f32 %v2085, %v2111
    %v2122 = vmul.f32 %v2086, %v2112
    %v2123 = vmul.f32 %v2087, %v2111
    %v2124 = vmul.f32 %v2088, %v2112
    %v2125 = vmul.f32 %v2089, %v2111
    %v2126 = vmul.f32 %v2090, %v2112
    %v2127 = vmul.f32 %v2091, %v2111
    %v2128 = vmul.f32 %v2092, %v2112
    %v2129 = vmul.f32 %v2093, %v2111
    %v2130 = vmul.f32 %v2094, %v2112
    %v2131 = vmul.f32 %v2095, %v2111
    %v2132 = vmul.f32 %v2096, %v2112
    %v2133 = vmul.f32 %v2097, %v2111
    %v2134 = vmul.f32 %v2098, %v2112
    %v2135 = vmul.f32 %v2099, %v2111
    %v2136 = vmul.f32 %v2100, %v2112
    %v2137 = vmul.f32 %v2101, %v2111
    %v2138 = vmul.f32 %v2102, %v2112
    %v2139 = vmul.f32 %v2103, %v2111
    %v2140 = vmul.f32 %v2104, %v2112
    %v2141 = vmul.f32 %v2105, %v2111
    %v2142 = vmul.f32 %v2106, %v2112
    %v2143 = vmul.f32 %v2107, %v2111
    %v2144 = vmul.f32 %v2108, %v2112
    %2145 = vset.pattern.permute.xlu0 1
    %2146 = vperm.xlu0 %2145, %v1503
    %v2147 = vpop.permute.xlu0 %2146
    %2149 = vset.pattern.permute.xlu0 1
    %2150 = vperm.xlu0 %2149, %v1504
    %v2151 = vpop.permute.xlu0 %2150
    %2153 = vset.pattern.permute.xlu0 1
    %2154 = vperm.xlu0 %2153, %v1505
    %v2155 = vpop.permute.xlu0 %2154
    %2157 = vset.pattern.permute.xlu0 1
    %2158 = vperm.xlu0 %2157, %v1506
    %v2159 = vpop.permute.xlu0 %2158
    %2161 = vset.pattern.permute.xlu0 1
    %2162 = vperm.xlu0 %2161, %v1507
    %v2163 = vpop.permute.xlu0 %2162
    %2165 = vset.pattern.permute.xlu0 1
    %2166 = vperm.xlu0 %2165, %v1508
    %v2167 = vpop.permute.xlu0 %2166
    %2169 = vset.pattern.permute.xlu0 1
    %2170 = vperm.xlu0 %2169, %v1509
    %v2171 = vpop.permute.xlu0 %2170
    %2173 = vset.pattern.permute.xlu0 1
    %2174 = vperm.xlu0 %2173, %v1510
    %v2175 = vpop.permute.xlu0 %2174
    %2177 = vset.pattern.permute.xlu0 1
    %2178 = vperm.xlu0 %2177, %v1511
    %v2179 = vpop.permute.xlu0 %2178
    %2181 = vset.pattern.permute.xlu0 1
    %2182 = vperm.xlu0 %2181, %v1512
    %v2183 = vpop.permute.xlu0 %2182
    %2185 = vset.pattern.permute.xlu0 1
    %2186 = vperm.xlu0 %2185, %v1513
    %v2187 = vpop.permute.xlu0 %2186
    %2189 = vset.pattern.permute.xlu0 1
    %2190 = vperm.xlu0 %2189, %v1514
    %v2191 = vpop.permute.xlu0 %2190
    %2193 = vset.pattern.permute.xlu0 1
    %2194 = vperm.xlu0 %2193, %v1515
    %v2195 = vpop.permute.xlu0 %2194
    %2197 = vset.pattern.permute.xlu0 1
    %2198 = vperm.xlu0 %2197, %v1516
    %v2199 = vpop.permute.xlu0 %2198
    %2201 = vset.pattern.permute.xlu0 1
    %2202 = vperm.xlu0 %2201, %v1517
    %v2203 = vpop.permute.xlu0 %2202
    %2205 = vset.pattern.permute.xlu0 1
    %2206 = vperm.xlu0 %2205, %v1518
    %v2207 = vpop.permute.xlu0 %2206
    %v2209 = vmul.f32 %v2113, %v2147
    %v2210 = vmul.f32 %v2114, %v2147
    %v2211 = vmul.f32 %v2115, %v2151
    %v2212 = vmul.f32 %v2116, %v2151
    %v2213 = vmul.f32 %v2117, %v2155
    %v2214 = vmul.f32 %v2118, %v2155
    %v2215 = vmul.f32 %v2119, %v2159
    %v2216 = vmul.f32 %v2120, %v2159
    %v2217 = vmul.f32 %v2121, %v2163
    %v2218 = vmul.f32 %v2122, %v2163
    %v2219 = vmul.f32 %v2123, %v2167
    %v2220 = vmul.f32 %v2124, %v2167
    %v2221 = vmul.f32 %v2125, %v2171
    %v2222 = vmul.f32 %v2126, %v2171
    %v2223 = vmul.f32 %v2127, %v2175
    %v2224 = vmul.f32 %v2128, %v2175
    %v2225 = vmul.f32 %v2129, %v2179
    %v2226 = vmul.f32 %v2130, %v2179
    %v2227 = vmul.f32 %v2131, %v2183
    %v2228 = vmul.f32 %v2132, %v2183
    %v2229 = vmul.f32 %v2133, %v2187
    %v2230 = vmul.f32 %v2134, %v2187
    %v2231 = vmul.f32 %v2135, %v2191
    %v2232 = vmul.f32 %v2136, %v2191
    %v2233 = vmul.f32 %v2137, %v2195
    %v2234 = vmul.f32 %v2138, %v2195
    %v2235 = vmul.f32 %v2139, %v2199
    %v2236 = vmul.f32 %v2140, %v2199
    %v2237 = vmul.f32 %v2141, %v2203
    %v2238 = vmul.f32 %v2142, %v2203
    %v2239 = vmul.f32 %v2143, %v2207
    %v2240 = vmul.f32 %v2144, %v2207
    %2241 = vset.pattern.permute.xlu0 2
    %2242 = vperm.xlu0 %2241, %v1503
    %v2243 = vpop.permute.xlu0 %2242
    %2245 = vset.pattern.permute.xlu0 2
    %2246 = vperm.xlu0 %2245, %v1504
    %v2247 = vpop.permute.xlu0 %2246
    %2249 = vset.pattern.permute.xlu0 2
    %2250 = vperm.xlu0 %2249, %v1505
    %v2251 = vpop.permute.xlu0 %2250
    %2253 = vset.pattern.permute.xlu0 2
    %2254 = vperm.xlu0 %2253, %v1506
    %v2255 = vpop.permute.xlu0 %2254
    %2257 = vset.pattern.permute.xlu0 2
    %2258 = vperm.xlu0 %2257, %v1507
    %v2259 = vpop.permute.xlu0 %2258
    %2261 = vset.pattern.permute.xlu0 2
    %2262 = vperm.xlu0 %2261, %v1508
    %v2263 = vpop.permute.xlu0 %2262
    %2265 = vset.pattern.permute.xlu0 2
    %2266 = vperm.xlu0 %2265, %v1509
    %v2267 = vpop.permute.xlu0 %2266
    %2269 = vset.pattern.permute.xlu0 2
    %2270 = vperm.xlu0 %2269, %v1510
    %v2271 = vpop.permute.xlu0 %2270
    %2273 = vset.pattern.permute.xlu0 2
    %2274 = vperm.xlu0 %2273, %v1511
    %v2275 = vpop.permute.xlu0 %2274
    %2277 = vset.pattern.permute.xlu0 2
    %2278 = vperm.xlu0 %2277, %v1512
    %v2279 = vpop.permute.xlu0 %2278
    %2281 = vset.pattern.permute.xlu0 2
    %2282 = vperm.xlu0 %2281, %v1513
    %v2283 = vpop.permute.xlu0 %2282
    %2285 = vset.pattern.permute.xlu0 2
    %2286 = vperm.xlu0 %2285, %v1514
    %v2287 = vpop.permute.xlu0 %2286
    %2289 = vset.pattern.permute.xlu0 2
    %2290 = vperm.xlu0 %2289, %v1515
    %v2291 = vpop.permute.xlu0 %2290
    %2293 = vset.pattern.permute.xlu0 2
    %2294 = vperm.xlu0 %2293, %v1516
    %v2295 = vpop.permute.xlu0 %2294
    %2297 = vset.pattern.permute.xlu0 2
    %2298 = vperm.xlu0 %2297, %v1517
    %v2299 = vpop.permute.xlu0 %2298
    %2301 = vset.pattern.permute.xlu0 2
    %2302 = vperm.xlu0 %2301, %v1518
    %v2303 = vpop.permute.xlu0 %2302
    %v2305 = vadd.f32 %v2209, %v2243
    %v2306 = vadd.f32 %v2210, %v2243
    %v2307 = vadd.f32 %v2211, %v2247
    %v2308 = vadd.f32 %v2212, %v2247
    %v2309 = vadd.f32 %v2213, %v2251
    %v2310 = vadd.f32 %v2214, %v2251
    %v2311 = vadd.f32 %v2215, %v2255
    %v2312 = vadd.f32 %v2216, %v2255
    %v2313 = vadd.f32 %v2217, %v2259
    %v2314 = vadd.f32 %v2218, %v2259
    %v2315 = vadd.f32 %v2219, %v2263
    %v2316 = vadd.f32 %v2220, %v2263
    %v2317 = vadd.f32 %v2221, %v2267
    %v2318 = vadd.f32 %v2222, %v2267
    %v2319 = vadd.f32 %v2223, %v2271
    %v2320 = vadd.f32 %v2224, %v2271
    %v2321 = vadd.f32 %v2225, %v2275
    %v2322 = vadd.f32 %v2226, %v2275
    %v2323 = vadd.f32 %v2227, %v2279
    %v2324 = vadd.f32 %v2228, %v2279
    %v2325 = vadd.f32 %v2229, %v2283
    %v2326 = vadd.f32 %v2230, %v2283
    %v2327 = vadd.f32 %v2231, %v2287
    %v2328 = vadd.f32 %v2232, %v2287
    %v2329 = vadd.f32 %v2233, %v2291
    %v2330 = vadd.f32 %v2234, %v2291
    %v2331 = vadd.f32 %v2235, %v2295
    %v2332 = vadd.f32 %v2236, %v2295
    %v2333 = vadd.f32 %v2237, %v2299
    %v2334 = vadd.f32 %v2238, %v2299
    %v2335 = vadd.f32 %v2239, %v2303
    %v2336 = vadd.f32 %v2240, %v2303
    %v2337 = vpack.c.bf16 %v2307, %v2305
    %v2338 = vpack.c.bf16 %v2308, %v2306
    %v2339 = vpack.c.bf16 %v2311, %v2309
    %v2340 = vpack.c.bf16 %v2312, %v2310
    %v2341 = vpack.c.bf16 %v2315, %v2313
    %v2342 = vpack.c.bf16 %v2316, %v2314
    %v2343 = vpack.c.bf16 %v2319, %v2317
    %v2344 = vpack.c.bf16 %v2320, %v2318
    %v2345 = vpack.c.bf16 %v2323, %v2321
    %v2346 = vpack.c.bf16 %v2324, %v2322
    %v2347 = vpack.c.bf16 %v2327, %v2325
    %v2348 = vpack.c.bf16 %v2328, %v2326
    %v2349 = vpack.c.bf16 %v2331, %v2329
    %v2350 = vpack.c.bf16 %v2332, %v2330
    %v2351 = vpack.c.bf16 %v2335, %v2333
    %v2352 = vpack.c.bf16 %v2336, %v2334
    %v2353 = vld [vmem:[%s5] sm:$0xf]
    %v2354 = vld [vmem:[%s5 + $0x4] sm:$0xf]
    %v2355 = vld [vmem:[%s5 + $0x8] sm:$0xf]
    %v2356 = vld [vmem:[%s5 + $0xc] sm:$0xf]
    %v2357 = vld [vmem:[%s5 + $0x10] sm:$0xf]
    %v2358 = vld [vmem:[%s5 + $0x14] sm:$0xf]
    %v2359 = vld [vmem:[%s5 + $0x18] sm:$0xf]
    %v2360 = vld [vmem:[%s5 + $0x1c] sm:$0xf]
    %v2361 = vld [vmem:[%s5 + $0x20] sm:$0xf]
    %v2362 = vld [vmem:[%s5 + $0x24] sm:$0xf]
    %v2363 = vld [vmem:[%s5 + $0x28] sm:$0xf]
    %v2364 = vld [vmem:[%s5 + $0x2c] sm:$0xf]
    %v2365 = vld [vmem:[%s5 + $0x30] sm:$0xf]
    %v2366 = vld [vmem:[%s5 + $0x34] sm:$0xf]
    %v2367 = vld [vmem:[%s5 + $0x38] sm:$0xf]
    %v2368 = vld [vmem:[%s5 + $0x3c] sm:$0xf]
    %v2369 = vld [vmem:[%s5 + $0x40] sm:$0xf]
    %v2370 = vld [vmem:[%s5 + $0x44] sm:$0xf]
    %v2371 = vld [vmem:[%s5 + $0x48] sm:$0xf]
    %v2372 = vld [vmem:[%s5 + $0x4c] sm:$0xf]
    %v2373 = vld [vmem:[%s5 + $0x50] sm:$0xf]
    %v2374 = vld [vmem:[%s5 + $0x54] sm:$0xf]
    %v2375 = vld [vmem:[%s5 + $0x58] sm:$0xf]
    %v2376 = vld [vmem:[%s5 + $0x5c] sm:$0xf]
    %v2377 = vld [vmem:[%s5 + $0x60] sm:$0xf]
    %v2378 = vld [vmem:[%s5 + $0x64] sm:$0xf]
    %v2379 = vld [vmem:[%s5 + $0x68] sm:$0xf]
    %v2380 = vld [vmem:[%s5 + $0x6c] sm:$0xf]
    %v2381 = vld [vmem:[%s5 + $0x70] sm:$0xf]
    %v2382 = vld [vmem:[%s5 + $0x74] sm:$0xf]
    %v2383 = vld [vmem:[%s5 + $0x78] sm:$0xf]
    %v2384 = vld [vmem:[%s5 + $0x7c] sm:$0xf]
    %v2385 = vld [vmem:[%s5 + $0x80] sm:$0xf]
    %v2386 = vld [vmem:[%s5 + $0x84] sm:$0xf]
    %v2387 = vld [vmem:[%s5 + $0x88] sm:$0xf]
    %v2388 = vld [vmem:[%s5 + $0x8c] sm:$0xf]
    %v2389 = vld [vmem:[%s5 + $0x90] sm:$0xf]
    %v2390 = vld [vmem:[%s5 + $0x94] sm:$0xf]
    %v2391 = vld [vmem:[%s5 + $0x98] sm:$0xf]
    %v2392 = vld [vmem:[%s5 + $0x9c] sm:$0xf]
    %v2393 = vld [vmem:[%s5 + $0xa0] sm:$0xf]
    %v2394 = vld [vmem:[%s5 + $0xa4] sm:$0xf]
    %v2395 = vld [vmem:[%s5 + $0xa8] sm:$0xf]
    %v2396 = vld [vmem:[%s5 + $0xac] sm:$0xf]
    %v2397 = vld [vmem:[%s5 + $0xb0] sm:$0xf]
    %v2398 = vld [vmem:[%s5 + $0xb4] sm:$0xf]
    %v2399 = vld [vmem:[%s5 + $0xb8] sm:$0xf]
    %v2400 = vld [vmem:[%s5 + $0xbc] sm:$0xf]
    %v2401 = vld [vmem:[%s5 + $0xc0] sm:$0xf]
    %v2402 = vld [vmem:[%s5 + $0xc4] sm:$0xf]
    %v2453 = vunpack.c.l.b16 %v2353
    %v2454 = vunpack.c.l.b16 %v2354
    %v2455 = vunpack.c.l.b16 %v2355
    %v2456 = vunpack.c.l.b16 %v2356
    %v2457 = vunpack.c.l.b16 %v2357
    %v2458 = vunpack.c.l.b16 %v2358
    %v2459 = vunpack.c.l.b16 %v2359
    %v2460 = vunpack.c.l.b16 %v2360
    %v2461 = vunpack.c.l.b16 %v2361
    %v2462 = vunpack.c.l.b16 %v2362
    %v2463 = vunpack.c.l.b16 %v2363
    %v2464 = vunpack.c.l.b16 %v2364
    %v2465 = vunpack.c.l.b16 %v2365
    %v2466 = vunpack.c.l.b16 %v2366
    %v2467 = vunpack.c.l.b16 %v2367
    %v2468 = vunpack.c.l.b16 %v2368
    %v2469 = vunpack.c.l.b16 %v2369
    %v2470 = vunpack.c.l.b16 %v2370
    %v2471 = vunpack.c.l.b16 %v2371
    %v2472 = vunpack.c.l.b16 %v2372
    %v2473 = vunpack.c.l.b16 %v2373
    %v2474 = vunpack.c.l.b16 %v2374
    %v2475 = vunpack.c.l.b16 %v2375
    %v2476 = vunpack.c.l.b16 %v2376
    %v2477 = vunpack.c.l.b16 %v2377
    %v2478 = vunpack.c.l.b16 %v2378
    %v2479 = vunpack.c.l.b16 %v2379
    %v2480 = vunpack.c.l.b16 %v2380
    %v2481 = vunpack.c.l.b16 %v2381
    %v2482 = vunpack.c.l.b16 %v2382
    %v2483 = vunpack.c.l.b16 %v2383
    %v2484 = vunpack.c.l.b16 %v2384
    %v2485 = vunpack.c.l.b16 %v2385
    %v2486 = vunpack.c.l.b16 %v2386
    %v2487 = vunpack.c.l.b16 %v2387
    %v2488 = vunpack.c.l.b16 %v2388
    %v2489 = vunpack.c.l.b16 %v2389
    %v2490 = vunpack.c.l.b16 %v2390
    %v2491 = vunpack.c.l.b16 %v2391
    %v2492 = vunpack.c.l.b16 %v2392
    %v2493 = vunpack.c.l.b16 %v2393
    %v2494 = vunpack.c.l.b16 %v2394
    %v2495 = vunpack.c.l.b16 %v2395
    %v2496 = vunpack.c.l.b16 %v2396
    %v2497 = vunpack.c.l.b16 %v2397
    %v2498 = vunpack.c.l.b16 %v2398
    %v2499 = vunpack.c.l.b16 %v2399
    %v2500 = vunpack.c.l.b16 %v2400
    %v2501 = vunpack.c.l.b16 %v2401
    %v2502 = vunpack.c.l.b16 %v2402
    %v2503 = vpack.c.b16 %v2454, %v2453
    %v2504 = vpack.c.b16 %v2456, %v2455
    %v2505 = vpack.c.b16 %v2458, %v2457
    %v2506 = vpack.c.b16 %v2460, %v2459
    %v2507 = vpack.c.b16 %v2462, %v2461
    %v2508 = vpack.c.b16 %v2464, %v2463
    %v2509 = vpack.c.b16 %v2466, %v2465
    %v2510 = vpack.c.b16 %v2468, %v2467
    %v2511 = vpack.c.b16 %v2470, %v2469
    %v2512 = vpack.c.b16 %v2472, %v2471
    %v2513 = vpack.c.b16 %v2474, %v2473
    %v2514 = vpack.c.b16 %v2476, %v2475
    %v2515 = vpack.c.b16 %v2478, %v2477
    %v2516 = vpack.c.b16 %v2480, %v2479
    %v2517 = vpack.c.b16 %v2482, %v2481
    %v2518 = vpack.c.b16 %v2484, %v2483
    %v2519 = vpack.c.b16 %v2486, %v2485
    %v2520 = vpack.c.b16 %v2488, %v2487
    %v2521 = vpack.c.b16 %v2490, %v2489
    %v2522 = vpack.c.b16 %v2492, %v2491
    %v2523 = vpack.c.b16 %v2494, %v2493
    %v2524 = vpack.c.b16 %v2496, %v2495
    %v2525 = vpack.c.b16 %v2498, %v2497
    %v2526 = vpack.c.b16 %v2500, %v2499
    %v2527 = vpack.c.b16 %v2502, %v2501
    %2553 = vmatprep.subr.bf16.mxu0 %v2338
    %2554 = vmatpush1.bf16.msra.mxu0 %v2337
    %2555 = vmatprep.subr.bf16.mxu0 %v2340
    %2556 = vmatpush1.bf16.msra.mxu0 %v2339
    %2557 = vmatprep.subr.bf16.mxu0 %v2342
    %2558 = vmatpush1.bf16.msra.mxu0 %v2341
    %2559 = vmatprep.subr.bf16.mxu0 %v2344
    %2560 = vmatpush1.bf16.msra.mxu0 %v2343
    %2561 = vmatprep.subr.bf16.mxu0 %v2346
    %2562 = vmatpush1.bf16.msra.mxu0 %v2345
    %2563 = vmatprep.subr.bf16.mxu0 %v2348
    %2564 = vmatpush1.bf16.msra.mxu0 %v2347
    %2565 = vmatprep.subr.bf16.mxu0 %v2350
    %2566 = vmatpush1.bf16.msra.mxu0 %v2349
    %2567 = vmatprep.subr.bf16.mxu0 %v2352
    %2568 = vmatpush1.bf16.msra.mxu0 %v2351
    %2569 = vmatprep.subr.bf16.mxu0 0
    %2570 = vmatpush1.bf16.msra.mxu0 0
    %2571 = vmatprep.subr.bf16.mxu0 0
    %2572 = vmatpush1.bf16.msra.mxu0 0
    %2573 = vmatprep.subr.bf16.mxu0 0
    %2574 = vmatpush1.bf16.msra.mxu0 0
    %2575 = vmatprep.subr.bf16.mxu0 0
    %2576 = vmatpush1.bf16.msra.mxu0 0
    %2577 = vmatprep.subr.bf16.mxu0 0
    %2578 = vmatpush1.bf16.msra.mxu0 0
    %2579 = vmatprep.subr.bf16.mxu0 0
    %2580 = vmatpush1.bf16.msra.mxu0 0
    %2581 = vmatprep.subr.bf16.mxu0 0
    %2582 = vmatpush1.bf16.msra.mxu0 0
    %2583 = vmatprep.subr.bf16.mxu0 0
    %2584 = vmatpush1.bf16.msra.mxu0 0
    %2585 = vmatprep.mubr.bf16.mxu0 0
    %2586 = vmatmul.mubr.bf16.gmra.mrb[0].mxu0 %v2503
    %v2587 = vpop.f32.mrb[0].mxu0
    %v2588 = vadd.f32 0.0, %v2587
    %v2589 = vpop.f32.mrb[0].mxu0
    %v2590 = vadd.f32 0.0, %v2589
    %v2591 = vpop.f32.mrb[0].mxu0
    %v2592 = vadd.f32 0.0, %v2591
    %v2593 = vpop.f32.mrb[0].mxu0
    %v2594 = vadd.f32 0.0, %v2593
    %2595 = vmatprep.mubr.bf16.mxu0 0
    %2596 = vmatmul.mubr.bf16.gmra.mrb[0].mxu0 %v2504
    %v2597 = vpop.f32.mrb[0].mxu0
    %v2598 = vadd.f32 0.0, %v2597
    %v2599 = vpop.f32.mrb[0].mxu0
    %v2600 = vadd.f32 0.0, %v2599
    %v2601 = vpop.f32.mrb[0].mxu0
    %v2602 = vadd.f32 0.0, %v2601
    %v2603 = vpop.f32.mrb[0].mxu0
    %v2604 = vadd.f32 0.0, %v2603
    %2605 = vmatprep.mubr.bf16.mxu0 0
    %2606 = vmatmul.mubr.bf16.gmra.mrb[0].mxu0 %v2505
    %v2607 = vpop.f32.mrb[0].mxu0
    %v2608 = vadd.f32 0.0, %v2607
    %v2609 = vpop.f32.mrb[0].mxu0
    %v2610 = vadd.f32 0.0, %v2609
    %v2611 = vpop.f32.mrb[0].mxu0
    %v2612 = vadd.f32 0.0, %v2611
    %v2613 = vpop.f32.mrb[0].mxu0
    %v2614 = vadd.f32 0.0, %v2613
    %2615 = vmatprep.mubr.bf16.mxu0 0
    %2616 = vmatmul.mubr.bf16.gmra.mrb[0].mxu0 %v2506
    %v2617 = vpop.f32.mrb[0].mxu0
    %v2618 = vadd.f32 0.0, %v2617
    %v2619 = vpop.f32.mrb[0].mxu0
    %v2620 = vadd.f32 0.0, %v2619
    %v2621 = vpop.f32.mrb[0].mxu0
    %v2622 = vadd.f32 0.0, %v2621
    %v2623 = vpop.f32.mrb[0].mxu0
    %v2624 = vadd.f32 0.0, %v2623
    %2625 = vmatprep.mubr.bf16.mxu0 0
    %2626 = vmatmul.mubr.bf16.gmra.mrb[0].mxu0 %v2507
    %v2627 = vpop.f32.mrb[0].mxu0
    %v2628 = vadd.f32 0.0, %v2627
    %v2629 = vpop.f32.mrb[0].mxu0
    %v2630 = vadd.f32 0.0, %v2629
    %v2631 = vpop.f32.mrb[0].mxu0
    %v2632 = vadd.f32 0.0, %v2631
    %v2633 = vpop.f32.mrb[0].mxu0
    %v2634 = vadd.f32 0.0, %v2633
    %2635 = vmatprep.mubr.bf16.mxu0 0
    %2636 = vmatmul.mubr.bf16.gmra.mrb[0].mxu0 %v2508
    %v2637 = vpop.f32.mrb[0].mxu0
    %v2638 = vadd.f32 0.0, %v2637
    %v2639 = vpop.f32.mrb[0].mxu0
    %v2640 = vadd.f32 0.0, %v2639
    %v2641 = vpop.f32.mrb[0].mxu0
    %v2642 = vadd.f32 0.0, %v2641
    %v2643 = vpop.f32.mrb[0].mxu0
    %v2644 = vadd.f32 0.0, %v2643
    %2645 = vmatprep.mubr.bf16.mxu0 0
    %2646 = vmatmul.mubr.bf16.gmra.mrb[0].mxu0 %v2509
    %v2647 = vpop.f32.mrb[0].mxu0
    %v2648 = vadd.f32 0.0, %v2647
    %v2649 = vpop.f32.mrb[0].mxu0
    %v2650 = vadd.f32 0.0, %v2649
    %v2651 = vpop.f32.mrb[0].mxu0
    %v2652 = vadd.f32 0.0, %v2651
    %v2653 = vpop.f32.mrb[0].mxu0
    %v2654 = vadd.f32 0.0, %v2653
    %2655 = vmatprep.mubr.bf16.mxu0 0
    %2656 = vmatmul.mubr.bf16.gmra.mrb[0].mxu0 %v2510
    %v2657 = vpop.f32.mrb[0].mxu0
    %v2658 = vadd.f32 0.0, %v2657
    %v2659 = vpop.f32.mrb[0].mxu0
    %v2660 = vadd.f32 0.0, %v2659
    %v2661 = vpop.f32.mrb[0].mxu0
    %v2662 = vadd.f32 0.0, %v2661
    %v2663 = vpop.f32.mrb[0].mxu0
    %v2664 = vadd.f32 0.0, %v2663
    %2665 = vmatprep.mubr.bf16.mxu0 0
    %2666 = vmatmul.mubr.bf16.gmra.mrb[0].mxu0 %v2511
    %v2667 = vpop.f32.mrb[0].mxu0
    %v2668 = vadd.f32 0.0, %v2667
    %v2669 = vpop.f32.mrb[0].mxu0
    %v2670 = vadd.f32 0.0, %v2669
    %v2671 = vpop.f32.mrb[0].mxu0
    %v2672 = vadd.f32 0.0, %v2671
    %v2673 = vpop.f32.mrb[0].mxu0
    %v2674 = vadd.f32 0.0, %v2673
    %2675 = vmatprep.mubr.bf16.mxu0 0
    %2676 = vmatmul.mubr.bf16.gmra.mrb[0].mxu0 %v2512
    %v2677 = vpop.f32.mrb[0].mxu0
    %v2678 = vadd.f32 0.0, %v2677
    %v2679 = vpop.f32.mrb[0].mxu0
    %v2680 = vadd.f32 0.0, %v2679
    %v2681 = vpop.f32.mrb[0].mxu0
    %v2682 = vadd.f32 0.0, %v2681
    %v2683 = vpop.f32.mrb[0].mxu0
    %v2684 = vadd.f32 0.0, %v2683
    %2685 = vmatprep.mubr.bf16.mxu0 0
    %2686 = vmatmul.mubr.bf16.gmra.mrb[0].mxu0 %v2513
    %v2687 = vpop.f32.mrb[0].mxu0
    %v2688 = vadd.f32 0.0, %v2687
    %v2689 = vpop.f32.mrb[0].mxu0
    %v2690 = vadd.f32 0.0, %v2689
    %v2691 = vpop.f32.mrb[0].mxu0
    %v2692 = vadd.f32 0.0, %v2691
    %v2693 = vpop.f32.mrb[0].mxu0
    %v2694 = vadd.f32 0.0, %v2693
    %2695 = vmatprep.mubr.bf16.mxu0 0
    %2696 = vmatmul.mubr.bf16.gmra.mrb[0].mxu0 %v2514
    %v2697 = vpop.f32.mrb[0].mxu0
    %v2698 = vadd.f32 0.0, %v2697
    %v2699 = vpop.f32.mrb[0].mxu0
    %v2700 = vadd.f32 0.0, %v2699
    %v2701 = vpop.f32.mrb[0].mxu0
    %v2702 = vadd.f32 0.0, %v2701
    %v2703 = vpop.f32.mrb[0].mxu0
    %v2704 = vadd.f32 0.0, %v2703
    %2705 = vmatprep.mubr.bf16.mxu0 0
    %2706 = vmatmul.mubr.bf16.gmra.mrb[0].mxu0 %v2515
    %v2707 = vpop.f32.mrb[0].mxu0
    %v2708 = vadd.f32 0.0, %v2707
    %v2709 = vpop.f32.mrb[0].mxu0
    %v2710 = vadd.f32 0.0, %v2709
    %v2711 = vpop.f32.mrb[0].mxu0
    %v2712 = vadd.f32 0.0, %v2711
    %v2713 = vpop.f32.mrb[0].mxu0
    %v2714 = vadd.f32 0.0, %v2713
    %2715 = vmatprep.mubr.bf16.mxu0 0
    %2716 = vmatmul.mubr.bf16.gmra.mrb[0].mxu0 %v2516
    %v2717 = vpop.f32.mrb[0].mxu0
    %v2718 = vadd.f32 0.0, %v2717
    %v2719 = vpop.f32.mrb[0].mxu0
    %v2720 = vadd.f32 0.0, %v2719
    %v2721 = vpop.f32.mrb[0].mxu0
    %v2722 = vadd.f32 0.0, %v2721
    %v2723 = vpop.f32.mrb[0].mxu0
    %v2724 = vadd.f32 0.0, %v2723
    %2725 = vmatprep.mubr.bf16.mxu0 0
    %2726 = vmatmul.mubr.bf16.gmra.mrb[0].mxu0 %v2517
    %v2727 = vpop.f32.mrb[0].mxu0
    %v2728 = vadd.f32 0.0, %v2727
    %v2729 = vpop.f32.mrb[0].mxu0
    %v2730 = vadd.f32 0.0, %v2729
    %v2731 = vpop.f32.mrb[0].mxu0
    %v2732 = vadd.f32 0.0, %v2731
    %v2733 = vpop.f32.mrb[0].mxu0
    %v2734 = vadd.f32 0.0, %v2733
    %2735 = vmatprep.mubr.bf16.mxu0 0
    %2736 = vmatmul.mubr.bf16.gmra.mrb[0].mxu0 %v2518
    %v2737 = vpop.f32.mrb[0].mxu0
    %v2738 = vadd.f32 0.0, %v2737
    %v2739 = vpop.f32.mrb[0].mxu0
    %v2740 = vadd.f32 0.0, %v2739
    %v2741 = vpop.f32.mrb[0].mxu0
    %v2742 = vadd.f32 0.0, %v2741
    %v2743 = vpop.f32.mrb[0].mxu0
    %v2744 = vadd.f32 0.0, %v2743
    %2745 = vmatprep.mubr.bf16.mxu0 0
    %2746 = vmatmul.mubr.bf16.gmra.mrb[0].mxu0 %v2519
    %v2747 = vpop.f32.mrb[0].mxu0
    %v2748 = vadd.f32 0.0, %v2747
    %v2749 = vpop.f32.mrb[0].mxu0
    %v2750 = vadd.f32 0.0, %v2749
    %v2751 = vpop.f32.mrb[0].mxu0
    %v2752 = vadd.f32 0.0, %v2751
    %v2753 = vpop.f32.mrb[0].mxu0
    %v2754 = vadd.f32 0.0, %v2753
    %2755 = vmatprep.mubr.bf16.mxu0 0
    %2756 = vmatmul.mubr.bf16.gmra.mrb[0].mxu0 %v2520
    %v2757 = vpop.f32.mrb[0].mxu0
    %v2758 = vadd.f32 0.0, %v2757
    %v2759 = vpop.f32.mrb[0].mxu0
    %v2760 = vadd.f32 0.0, %v2759
    %v2761 = vpop.f32.mrb[0].mxu0
    %v2762 = vadd.f32 0.0, %v2761
    %v2763 = vpop.f32.mrb[0].mxu0
    %v2764 = vadd.f32 0.0, %v2763
    %2765 = vmatprep.mubr.bf16.mxu0 0
    %2766 = vmatmul.mubr.bf16.gmra.mrb[0].mxu0 %v2521
    %v2767 = vpop.f32.mrb[0].mxu0
    %v2768 = vadd.f32 0.0, %v2767
    %v2769 = vpop.f32.mrb[0].mxu0
    %v2770 = vadd.f32 0.0, %v2769
    %v2771 = vpop.f32.mrb[0].mxu0
    %v2772 = vadd.f32 0.0, %v2771
    %v2773 = vpop.f32.mrb[0].mxu0
    %v2774 = vadd.f32 0.0, %v2773
    %2775 = vmatprep.mubr.bf16.mxu0 0
    %2776 = vmatmul.mubr.bf16.gmra.mrb[0].mxu0 %v2522
    %v2777 = vpop.f32.mrb[0].mxu0
    %v2778 = vadd.f32 0.0, %v2777
    %v2779 = vpop.f32.mrb[0].mxu0
    %v2780 = vadd.f32 0.0, %v2779
    %v2781 = vpop.f32.mrb[0].mxu0
    %v2782 = vadd.f32 0.0, %v2781
    %v2783 = vpop.f32.mrb[0].mxu0
    %v2784 = vadd.f32 0.0, %v2783
    %2785 = vmatprep.mubr.bf16.mxu0 0
    %2786 = vmatmul.mubr.bf16.gmra.mrb[0].mxu0 %v2523
    %v2787 = vpop.f32.mrb[0].mxu0
    %v2788 = vadd.f32 0.0, %v2787
    %v2789 = vpop.f32.mrb[0].mxu0
    %v2790 = vadd.f32 0.0, %v2789
    %v2791 = vpop.f32.mrb[0].mxu0
    %v2792 = vadd.f32 0.0, %v2791
    %v2793 = vpop.f32.mrb[0].mxu0
    %v2794 = vadd.f32 0.0, %v2793
    %2795 = vmatprep.mubr.bf16.mxu0 0
    %2796 = vmatmul.mubr.bf16.gmra.mrb[0].mxu0 %v2524
    %v2797 = vpop.f32.mrb[0].mxu0
    %v2798 = vadd.f32 0.0, %v2797
    %v2799 = vpop.f32.mrb[0].mxu0
    %v2800 = vadd.f32 0.0, %v2799
    %v2801 = vpop.f32.mrb[0].mxu0
    %v2802 = vadd.f32 0.0, %v2801
    %v2803 = vpop.f32.mrb[0].mxu0
    %v2804 = vadd.f32 0.0, %v2803
    %2805 = vmatprep.mubr.bf16.mxu0 0
    %2806 = vmatmul.mubr.bf16.gmra.mrb[0].mxu0 %v2525
    %v2807 = vpop.f32.mrb[0].mxu0
    %v2808 = vadd.f32 0.0, %v2807
    %v2809 = vpop.f32.mrb[0].mxu0
    %v2810 = vadd.f32 0.0, %v2809
    %v2811 = vpop.f32.mrb[0].mxu0
    %v2812 = vadd.f32 0.0, %v2811
    %v2813 = vpop.f32.mrb[0].mxu0
    %v2814 = vadd.f32 0.0, %v2813
    %2815 = vmatprep.mubr.bf16.mxu0 0
    %2816 = vmatmul.mubr.bf16.gmra.mrb[0].mxu0 %v2526
    %v2817 = vpop.f32.mrb[0].mxu0
    %v2818 = vadd.f32 0.0, %v2817
    %v2819 = vpop.f32.mrb[0].mxu0
    %v2820 = vadd.f32 0.0, %v2819
    %v2821 = vpop.f32.mrb[0].mxu0
    %v2822 = vadd.f32 0.0, %v2821
    %v2823 = vpop.f32.mrb[0].mxu0
    %v2824 = vadd.f32 0.0, %v2823
    %2825 = vmatprep.mubr.bf16.mxu0 0
    %2826 = vmatmul.mubr.bf16.gmra.mrb[0].mxu0 %v2527
    %v2827 = vpop.f32.mrb[0].mxu0
    %v2828 = vadd.f32 0.0, %v2827
    %v2829 = vpop.f32.mrb[0].mxu0
    %v2830 = vadd.f32 0.0, %v2829
    %v2831 = vpop.f32.mrb[0].mxu0
    %v2832 = vadd.f32 0.0, %v2831
    %v2833 = vpop.f32.mrb[0].mxu0
    %v2834 = vadd.f32 0.0, %v2833
    %2835 = vdwg.mxu0
    %v2836 = vmul.f32 %v2588, 0.5
    %v2837 = vmul.f32 %v2590, 0.5
    %v2838 = vmul.f32 %v2592, 0.5
    %v2839 = vmul.f32 %v2594, 0.5
    %v2840 = vmul.f32 %v2598, 0.5
    %v2841 = vmul.f32 %v2600, 0.5
    %v2842 = vmul.f32 %v2602, 0.5
    %v2843 = vmul.f32 %v2604, 0.5
    %v2844 = vmul.f32 %v2608, 0.5
    %v2845 = vmul.f32 %v2610, 0.5
    %v2846 = vmul.f32 %v2612, 0.5
    %v2847 = vmul.f32 %v2614, 0.5
    %v2848 = vmul.f32 %v2618, 0.5
    %v2849 = vmul.f32 %v2620, 0.5
    %v2850 = vmul.f32 %v2622, 0.5
    %v2851 = vmul.f32 %v2624, 0.5
    %v2852 = vmul.f32 %v2628, 0.5
    %v2853 = vmul.f32 %v2630, 0.5
    %v2854 = vmul.f32 %v2632, 0.5
    %v2855 = vmul.f32 %v2634, 0.5
    %v2856 = vmul.f32 %v2638, 0.5
    %v2857 = vmul.f32 %v2640, 0.5
    %v2858 = vmul.f32 %v2642, 0.5
    %v2859 = vmul.f32 %v2644, 0.5
    %v2860 = vmul.f32 %v2648, 0.5
    %v2861 = vmul.f32 %v2650, 0.5
    %v2862 = vmul.f32 %v2652, 0.5
    %v2863 = vmul.f32 %v2654, 0.5
    %v2864 = vmul.f32 %v2658, 0.5
    %v2865 = vmul.f32 %v2660, 0.5
    %v2866 = vmul.f32 %v2662, 0.5
    %v2867 = vmul.f32 %v2664, 0.5
    %v2868 = vmul.f32 %v2668, 0.5
    %v2869 = vmul.f32 %v2670, 0.5
    %v2870 = vmul.f32 %v2672, 0.5
    %v2871 = vmul.f32 %v2674, 0.5
    %v2872 = vmul.f32 %v2678, 0.5
    %v2873 = vmul.f32 %v2680, 0.5
    %v2874 = vmul.f32 %v2682, 0.5
    %v2875 = vmul.f32 %v2684, 0.5
    %v2876 = vmul.f32 %v2688, 0.5
    %v2877 = vmul.f32 %v2690, 0.5
    %v2878 = vmul.f32 %v2692, 0.5
    %v2879 = vmul.f32 %v2694, 0.5
    %v2880 = vmul.f32 %v2698, 0.5
    %v2881 = vmul.f32 %v2700, 0.5
    %v2882 = vmul.f32 %v2702, 0.5
    %v2883 = vmul.f32 %v2704, 0.5
    %v2884 = vmul.f32 %v2708, 0.5
    %v2885 = vmul.f32 %v2710, 0.5
    %v2886 = vmul.f32 %v2712, 0.5
    %v2887 = vmul.f32 %v2714, 0.5
    %v2888 = vmul.f32 %v2718, 0.5
    %v2889 = vmul.f32 %v2720, 0.5
    %v2890 = vmul.f32 %v2722, 0.5
    %v2891 = vmul.f32 %v2724, 0.5
    %v2892 = vmul.f32 %v2728, 0.5
    %v2893 = vmul.f32 %v2730, 0.5
    %v2894 = vmul.f32 %v2732, 0.5
    %v2895 = vmul.f32 %v2734, 0.5
    %v2896 = vmul.f32 %v2738, 0.5
    %v2897 = vmul.f32 %v2740, 0.5
    %v2898 = vmul.f32 %v2742, 0.5
    %v2899 = vmul.f32 %v2744, 0.5
    %v2900 = vmul.f32 %v2748, 0.5
    %v2901 = vmul.f32 %v2750, 0.5
    %v2902 = vmul.f32 %v2752, 0.5
    %v2903 = vmul.f32 %v2754, 0.5
    %v2904 = vmul.f32 %v2758, 0.5
    %v2905 = vmul.f32 %v2760, 0.5
    %v2906 = vmul.f32 %v2762, 0.5
    %v2907 = vmul.f32 %v2764, 0.5
    %v2908 = vmul.f32 %v2768, 0.5
    %v2909 = vmul.f32 %v2770, 0.5
    %v2910 = vmul.f32 %v2772, 0.5
    %v2911 = vmul.f32 %v2774, 0.5
    %v2912 = vmul.f32 %v2778, 0.5
    %v2913 = vmul.f32 %v2780, 0.5
    %v2914 = vmul.f32 %v2782, 0.5
    %v2915 = vmul.f32 %v2784, 0.5
    %v2916 = vmul.f32 %v2788, 0.5
    %v2917 = vmul.f32 %v2790, 0.5
    %v2918 = vmul.f32 %v2792, 0.5
    %v2919 = vmul.f32 %v2794, 0.5
    %v2920 = vmul.f32 %v2798, 0.5
    %v2921 = vmul.f32 %v2800, 0.5
    %v2922 = vmul.f32 %v2802, 0.5
    %v2923 = vmul.f32 %v2804, 0.5
    %v2924 = vmul.f32 %v2808, 0.5
    %v2925 = vmul.f32 %v2810, 0.5
    %v2926 = vmul.f32 %v2812, 0.5
    %v2927 = vmul.f32 %v2814, 0.5
    %v2928 = vmul.f32 %v2818, 0.5
    %v2929 = vmul.f32 %v2820, 0.5
    %v2930 = vmul.f32 %v2822, 0.5
    %v2931 = vmul.f32 %v2824, 0.5
    %v2932 = vmul.f32 %v2828, 0.5
    %v2933 = vmul.f32 %v2830, 0.5
    %v2934 = vmul.f32 %v2832, 0.5
    %v2935 = vmul.f32 %v2834, 0.5
    %v2936 = vmul.f32 %v2588, 0.044715
    %v2937 = vmul.f32 %v2590, 0.044715
    %v2938 = vmul.f32 %v2592, 0.044715
    %v2939 = vmul.f32 %v2594, 0.044715
    %v2940 = vmul.f32 %v2598, 0.044715
    %v2941 = vmul.f32 %v2600, 0.044715
    %v2942 = vmul.f32 %v2602, 0.044715
    %v2943 = vmul.f32 %v2604, 0.044715
    %v2944 = vmul.f32 %v2608, 0.044715
    %v2945 = vmul.f32 %v2610, 0.044715
    %v2946 = vmul.f32 %v2612, 0.044715
    %v2947 = vmul.f32 %v2614, 0.044715
    %v2948 = vmul.f32 %v2618, 0.044715
    %v2949 = vmul.f32 %v2620, 0.044715
    %v2950 = vmul.f32 %v2622, 0.044715
    %v2951 = vmul.f32 %v2624, 0.044715
    %v2952 = vmul.f32 %v2628, 0.044715
    %v2953 = vmul.f32 %v2630, 0.044715
    %v2954 = vmul.f32 %v2632, 0.044715
    %v2955 = vmul.f32 %v2634, 0.044715
    %v2956 = vmul.f32 %v2638, 0.044715
    %v2957 = vmul.f32 %v2640, 0.044715
    %v2958 = vmul.f32 %v2642, 0.044715
    %v2959 = vmul.f32 %v2644, 0.044715
    %v2960 = vmul.f32 %v2648, 0.044715
    %v2961 = vmul.f32 %v2650, 0.044715
    %v2962 = vmul.f32 %v2652, 0.044715
    %v2963 = vmul.f32 %v2654, 0.044715
    %v2964 = vmul.f32 %v2658, 0.044715
    %v2965 = vmul.f32 %v2660, 0.044715
    %v2966 = vmul.f32 %v2662, 0.044715
    %v2967 = vmul.f32 %v2664, 0.044715
    %v2968 = vmul.f32 %v2668, 0.044715
    %v2969 = vmul.f32 %v2670, 0.044715
    %v2970 = vmul.f32 %v2672, 0.044715
    %v2971 = vmul.f32 %v2674, 0.044715
    %v2972 = vmul.f32 %v2678, 0.044715
    %v2973 = vmul.f32 %v2680, 0.044715
    %v2974 = vmul.f32 %v2682, 0.044715
    %v2975 = vmul.f32 %v2684, 0.044715
    %v2976 = vmul.f32 %v2688, 0.044715
    %v2977 = vmul.f32 %v2690, 0.044715
    %v2978 = vmul.f32 %v2692, 0.044715
    %v2979 = vmul.f32 %v2694, 0.044715
    %v2980 = vmul.f32 %v2698, 0.044715
    %v2981 = vmul.f32 %v2700, 0.044715
    %v2982 = vmul.f32 %v2702, 0.044715
    %v2983 = vmul.f32 %v2704, 0.044715
    %v2984 = vmul.f32 %v2708, 0.044715
    %v2985 = vmul.f32 %v2710, 0.044715
    %v2986 = vmul.f32 %v2712, 0.044715
    %v2987 = vmul.f32 %v2714, 0.044715
    %v2988 = vmul.f32 %v2718, 0.044715
    %v2989 = vmul.f32 %v2720, 0.044715
    %v2990 = vmul.f32 %v2722, 0.044715
    %v2991 = vmul.f32 %v2724, 0.044715
    %v2992 = vmul.f32 %v2728, 0.044715
    %v2993 = vmul.f32 %v2730, 0.044715
    %v2994 = vmul.f32 %v2732, 0.044715
    %v2995 = vmul.f32 %v2734, 0.044715
    %v2996 = vmul.f32 %v2738, 0.044715
    %v2997 = vmul.f32 %v2740, 0.044715
    %v2998 = vmul.f32 %v2742, 0.044715
    %v2999 = vmul.f32 %v2744, 0.044715
    %v3000 = vmul.f32 %v2748, 0.044715
    %v3001 = vmul.f32 %v2750, 0.044715
    %v3002 = vmul.f32 %v2752, 0.044715
    %v3003 = vmul.f32 %v2754, 0.044715
    %v3004 = vmul.f32 %v2758, 0.044715
    %v3005 = vmul.f32 %v2760, 0.044715
    %v3006 = vmul.f32 %v2762, 0.044715
    %v3007 = vmul.f32 %v2764, 0.044715
    %v3008 = vmul.f32 %v2768, 0.044715
    %v3009 = vmul.f32 %v2770, 0.044715
    %v3010 = vmul.f32 %v2772, 0.044715
    %v3011 = vmul.f32 %v2774, 0.044715
    %v3012 = vmul.f32 %v2778, 0.044715
    %v3013 = vmul.f32 %v2780, 0.044715
    %v3014 = vmul.f32 %v2782, 0.044715
    %v3015 = vmul.f32 %v2784, 0.044715
    %v3016 = vmul.f32 %v2788, 0.044715
    %v3017 = vmul.f32 %v2790, 0.044715
    %v3018 = vmul.f32 %v2792, 0.044715
    %v3019 = vmul.f32 %v2794, 0.044715
    %v3020 = vmul.f32 %v2798, 0.044715
    %v3021 = vmul.f32 %v2800, 0.044715
    %v3022 = vmul.f32 %v2802, 0.044715
    %v3023 = vmul.f32 %v2804, 0.044715
    %v3024 = vmul.f32 %v2808, 0.044715
    %v3025 = vmul.f32 %v2810, 0.044715
    %v3026 = vmul.f32 %v2812, 0.044715
    %v3027 = vmul.f32 %v2814, 0.044715
    %v3028 = vmul.f32 %v2818, 0.044715
    %v3029 = vmul.f32 %v2820, 0.044715
    %v3030 = vmul.f32 %v2822, 0.044715
    %v3031 = vmul.f32 %v2824, 0.044715
    %v3032 = vmul.f32 %v2828, 0.044715
    %v3033 = vmul.f32 %v2830, 0.044715
    %v3034 = vmul.f32 %v2832, 0.044715
    %v3035 = vmul.f32 %v2834, 0.044715
    %v3036 = vmul.f32 %v2936, %v2588
    %v3037 = vmul.f32 %v2937, %v2590
    %v3038 = vmul.f32 %v2938, %v2592
    %v3039 = vmul.f32 %v2939, %v2594
    %v3040 = vmul.f32 %v2940, %v2598
    %v3041 = vmul.f32 %v2941, %v2600
    %v3042 = vmul.f32 %v2942, %v2602
    %v3043 = vmul.f32 %v2943, %v2604
    %v3044 = vmul.f32 %v2944, %v2608
    %v3045 = vmul.f32 %v2945, %v2610
    %v3046 = vmul.f32 %v2946, %v2612
    %v3047 = vmul.f32 %v2947, %v2614
    %v3048 = vmul.f32 %v2948, %v2618
    %v3049 = vmul.f32 %v2949, %v2620
    %v3050 = vmul.f32 %v2950, %v2622
    %v3051 = vmul.f32 %v2951, %v2624
    %v3052 = vmul.f32 %v2952, %v2628
    %v3053 = vmul.f32 %v2953, %v2630
    %v3054 = vmul.f32 %v2954, %v2632
    %v3055 = vmul.f32 %v2955, %v2634
    %v3056 = vmul.f32 %v2956, %v2638
    %v3057 = vmul.f32 %v2957, %v2640
    %v3058 = vmul.f32 %v2958, %v2642
    %v3059 = vmul.f32 %v2959, %v2644
    %v3060 = vmul.f32 %v2960, %v2648
    %v3061 = vmul.f32 %v2961, %v2650
    %v3062 = vmul.f32 %v2962, %v2652
    %v3063 = vmul.f32 %v2963, %v2654
    %v3064 = vmul.f32 %v2964, %v2658
    %v3065 = vmul.f32 %v2965, %v2660
    %v3066 = vmul.f32 %v2966, %v2662
    %v3067 = vmul.f32 %v2967, %v2664
    %v3068 = vmul.f32 %v2968, %v2668
    %v3069 = vmul.f32 %v2969, %v2670
    %v3070 = vmul.f32 %v2970, %v2672
    %v3071 = vmul.f32 %v2971, %v2674
    %v3072 = vmul.f32 %v2972, %v2678
    %v3073 = vmul.f32 %v2973, %v2680
    %v3074 = vmul.f32 %v2974, %v2682
    %v3075 = vmul.f32 %v2975, %v2684
    %v3076 = vmul.f32 %v2976, %v2688
    %v3077 = vmul.f32 %v2977, %v2690
    %v3078 = vmul.f32 %v2978, %v2692
    %v3079 = vmul.f32 %v2979, %v2694
    %v3080 = vmul.f32 %v2980, %v2698
    %v3081 = vmul.f32 %v2981, %v2700
    %v3082 = vmul.f32 %v2982, %v2702
    %v3083 = vmul.f32 %v2983, %v2704
    %v3084 = vmul.f32 %v2984, %v2708
    %v3085 = vmul.f32 %v2985, %v2710
    %v3086 = vmul.f32 %v2986, %v2712
    %v3087 = vmul.f32 %v2987, %v2714
    %v3088 = vmul.f32 %v2988, %v2718
    %v3089 = vmul.f32 %v2989, %v2720
    %v3090 = vmul.f32 %v2990, %v2722
    %v3091 = vmul.f32 %v2991, %v2724
    %v3092 = vmul.f32 %v2992, %v2728
    %v3093 = vmul.f32 %v2993, %v2730
    %v3094 = vmul.f32 %v2994, %v2732
    %v3095 = vmul.f32 %v2995, %v2734
    %v3096 = vmul.f32 %v2996, %v2738
    %v3097 = vmul.f32 %v2997, %v2740
    %v3098 = vmul.f32 %v2998, %v2742
    %v3099 = vmul.f32 %v2999, %v2744
    %v3100 = vmul.f32 %v3000, %v2748
    %v3101 = vmul.f32 %v3001, %v2750
    %v3102 = vmul.f32 %v3002, %v2752
    %v3103 = vmul.f32 %v3003, %v2754
    %v3104 = vmul.f32 %v3004, %v2758
    %v3105 = vmul.f32 %v3005, %v2760
    %v3106 = vmul.f32 %v3006, %v2762
    %v3107 = vmul.f32 %v3007, %v2764
    %v3108 = vmul.f32 %v3008, %v2768
    %v3109 = vmul.f32 %v3009, %v2770
    %v3110 = vmul.f32 %v3010, %v2772
    %v3111 = vmul.f32 %v3011, %v2774
    %v3112 = vmul.f32 %v3012, %v2778
    %v3113 = vmul.f32 %v3013, %v2780
    %v3114 = vmul.f32 %v3014, %v2782
    %v3115 = vmul.f32 %v3015, %v2784
    %v3116 = vmul.f32 %v3016, %v2788
    %v3117 = vmul.f32 %v3017, %v2790
    %v3118 = vmul.f32 %v3018, %v2792
    %v3119 = vmul.f32 %v3019, %v2794
    %v3120 = vmul.f32 %v3020, %v2798
    %v3121 = vmul.f32 %v3021, %v2800
    %v3122 = vmul.f32 %v3022, %v2802
    %v3123 = vmul.f32 %v3023, %v2804
    %v3124 = vmul.f32 %v3024, %v2808
    %v3125 = vmul.f32 %v3025, %v2810
    %v3126 = vmul.f32 %v3026, %v2812
    %v3127 = vmul.f32 %v3027, %v2814
    %v3128 = vmul.f32 %v3028, %v2818
    %v3129 = vmul.f32 %v3029, %v2820
    %v3130 = vmul.f32 %v3030, %v2822
    %v3131 = vmul.f32 %v3031, %v2824
    %v3132 = vmul.f32 %v3032, %v2828
    %v3133 = vmul.f32 %v3033, %v2830
    %v3134 = vmul.f32 %v3034, %v2832
    %v3135 = vmul.f32 %v3035, %v2834
    %v3136 = vmul.f32 %v3036, %v2588
    %v3137 = vmul.f32 %v3037, %v2590
    %v3138 = vmul.f32 %v3038, %v2592
    %v3139 = vmul.f32 %v3039, %v2594
    %v3140 = vmul.f32 %v3040, %v2598
    %v3141 = vmul.f32 %v3041, %v2600
    %v3142 = vmul.f32 %v3042, %v2602
    %v3143 = vmul.f32 %v3043, %v2604
    %v3144 = vmul.f32 %v3044, %v2608
    %v3145 = vmul.f32 %v3045, %v2610
    %v3146 = vmul.f32 %v3046, %v2612
    %v3147 = vmul.f32 %v3047, %v2614
    %v3148 = vmul.f32 %v3048, %v2618
    %v3149 = vmul.f32 %v3049, %v2620
    %v3150 = vmul.f32 %v3050, %v2622
    %v3151 = vmul.f32 %v3051, %v2624
    %v3152 = vmul.f32 %v3052, %v2628
    %v3153 = vmul.f32 %v3053, %v2630
    %v3154 = vmul.f32 %v3054, %v2632
    %v3155 = vmul.f32 %v3055, %v2634
    %v3156 = vmul.f32 %v3056, %v2638
    %v3157 = vmul.f32 %v3057, %v2640
    %v3158 = vmul.f32 %v3058, %v2642
    %v3159 = vmul.f32 %v3059, %v2644
    %v3160 = vmul.f32 %v3060, %v2648
    %v3161 = vmul.f32 %v3061, %v2650
    %v3162 = vmul.f32 %v3062, %v2652
    %v3163 = vmul.f32 %v3063, %v2654
    %v3164 = vmul.f32 %v3064, %v2658
    %v3165 = vmul.f32 %v3065, %v2660
    %v3166 = vmul.f32 %v3066, %v2662
    %v3167 = vmul.f32 %v3067, %v2664
    %v3168 = vmul.f32 %v3068, %v2668
    %v3169 = vmul.f32 %v3069, %v2670
    %v3170 = vmul.f32 %v3070, %v2672
    %v3171 = vmul.f32 %v3071, %v2674
    %v3172 = vmul.f32 %v3072, %v2678
    %v3173 = vmul.f32 %v3073, %v2680
    %v3174 = vmul.f32 %v3074, %v2682
    %v3175 = vmul.f32 %v3075, %v2684
    %v3176 = vmul.f32 %v3076, %v2688
    %v3177 = vmul.f32 %v3077, %v2690
    %v3178 = vmul.f32 %v3078, %v2692
    %v3179 = vmul.f32 %v3079, %v2694
    %v3180 = vmul.f32 %v3080, %v2698
    %v3181 = vmul.f32 %v3081, %v2700
    %v3182 = vmul.f32 %v3082, %v2702
    %v3183 = vmul.f32 %v3083, %v2704
    %v3184 = vmul.f32 %v3084, %v2708
    %v3185 = vmul.f32 %v3085, %v2710
    %v3186 = vmul.f32 %v3086, %v2712
    %v3187 = vmul.f32 %v3087, %v2714
    %v3188 = vmul.f32 %v3088, %v2718
    %v3189 = vmul.f32 %v3089, %v2720
    %v3190 = vmul.f32 %v3090, %v2722
    %v3191 = vmul.f32 %v3091, %v2724
    %v3192 = vmul.f32 %v3092, %v2728
    %v3193 = vmul.f32 %v3093, %v2730
    %v3194 = vmul.f32 %v3094, %v2732
    %v3195 = vmul.f32 %v3095, %v2734
    %v3196 = vmul.f32 %v3096, %v2738
    %v3197 = vmul.f32 %v3097, %v2740
    %v3198 = vmul.f32 %v3098, %v2742
    %v3199 = vmul.f32 %v3099, %v2744
    %v3200 = vmul.f32 %v3100, %v2748
    %v3201 = vmul.f32 %v3101, %v2750
    %v3202 = vmul.f32 %v3102, %v2752
    %v3203 = vmul.f32 %v3103, %v2754
    %v3204 = vmul.f32 %v3104, %v2758
    %v3205 = vmul.f32 %v3105, %v2760
    %v3206 = vmul.f32 %v3106, %v2762
    %v3207 = vmul.f32 %v3107, %v2764
    %v3208 = vmul.f32 %v3108, %v2768
    %v3209 = vmul.f32 %v3109, %v2770
    %v3210 = vmul.f32 %v3110, %v2772
    %v3211 = vmul.f32 %v3111, %v2774
    %v3212 = vmul.f32 %v3112, %v2778
    %v3213 = vmul.f32 %v3113, %v2780
    %v3214 = vmul.f32 %v3114, %v2782
    %v3215 = vmul.f32 %v3115, %v2784
    %v3216 = vmul.f32 %v3116, %v2788
    %v3217 = vmul.f32 %v3117, %v2790
    %v3218 = vmul.f32 %v3118, %v2792
    %v3219 = vmul.f32 %v3119, %v2794
    %v3220 = vmul.f32 %v3120, %v2798
    %v3221 = vmul.f32 %v3121, %v2800
    %v3222 = vmul.f32 %v3122, %v2802
    %v3223 = vmul.f32 %v3123, %v2804
    %v3224 = vmul.f32 %v3124, %v2808
    %v3225 = vmul.f32 %v3125, %v2810
    %v3226 = vmul.f32 %v3126, %v2812
    %v3227 = vmul.f32 %v3127, %v2814
    %v3228 = vmul.f32 %v3128, %v2818
    %v3229 = vmul.f32 %v3129, %v2820
    %v3230 = vmul.f32 %v3130, %v2822
    %v3231 = vmul.f32 %v3131, %v2824
    %v3232 = vmul.f32 %v3132, %v2828
    %v3233 = vmul.f32 %v3133, %v2830
    %v3234 = vmul.f32 %v3134, %v2832
    %v3235 = vmul.f32 %v3135, %v2834
    %v3236 = vadd.f32 %v2588, %v3136
    %v3237 = vadd.f32 %v2590, %v3137
    %v3238 = vadd.f32 %v2592, %v3138
    %v3239 = vadd.f32 %v2594, %v3139
    %v3240 = vadd.f32 %v2598, %v3140
    %v3241 = vadd.f32 %v2600, %v3141
    %v3242 = vadd.f32 %v2602, %v3142
    %v3243 = vadd.f32 %v2604, %v3143
    %v3244 = vadd.f32 %v2608, %v3144
    %v3245 = vadd.f32 %v2610, %v3145
    %v3246 = vadd.f32 %v2612, %v3146
    %v3247 = vadd.f32 %v2614, %v3147
    %v3248 = vadd.f32 %v2618, %v3148
    %v3249 = vadd.f32 %v2620, %v3149
    %v3250 = vadd.f32 %v2622, %v3150
    %v3251 = vadd.f32 %v2624, %v3151
    %v3252 = vadd.f32 %v2628, %v3152
    %v3253 = vadd.f32 %v2630, %v3153
    %v3254 = vadd.f32 %v2632, %v3154
    %v3255 = vadd.f32 %v2634, %v3155
    %v3256 = vadd.f32 %v2638, %v3156
    %v3257 = vadd.f32 %v2640, %v3157
    %v3258 = vadd.f32 %v2642, %v3158
    %v3259 = vadd.f32 %v2644, %v3159
    %v3260 = vadd.f32 %v2648, %v3160
    %v3261 = vadd.f32 %v2650, %v3161
    %v3262 = vadd.f32 %v2652, %v3162
    %v3263 = vadd.f32 %v2654, %v3163
    %v3264 = vadd.f32 %v2658, %v3164
    %v3265 = vadd.f32 %v2660, %v3165
    %v3266 = vadd.f32 %v2662, %v3166
    %v3267 = vadd.f32 %v2664, %v3167
    %v3268 = vadd.f32 %v2668, %v3168
    %v3269 = vadd.f32 %v2670, %v3169
    %v3270 = vadd.f32 %v2672, %v3170
    %v3271 = vadd.f32 %v2674, %v3171
    %v3272 = vadd.f32 %v2678, %v3172
    %v3273 = vadd.f32 %v2680, %v3173
    %v3274 = vadd.f32 %v2682, %v3174
    %v3275 = vadd.f32 %v2684, %v3175
    %v3276 = vadd.f32 %v2688, %v3176
    %v3277 = vadd.f32 %v2690, %v3177
    %v3278 = vadd.f32 %v2692, %v3178
    %v3279 = vadd.f32 %v2694, %v3179
    %v3280 = vadd.f32 %v2698, %v3180
    %v3281 = vadd.f32 %v2700, %v3181
    %v3282 = vadd.f32 %v2702, %v3182
    %v3283 = vadd.f32 %v2704, %v3183
    %v3284 = vadd.f32 %v2708, %v3184
    %v3285 = vadd.f32 %v2710, %v3185
    %v3286 = vadd.f32 %v2712, %v3186
    %v3287 = vadd.f32 %v2714, %v3187
    %v3288 = vadd.f32 %v2718, %v3188
    %v3289 = vadd.f32 %v2720, %v3189
    %v3290 = vadd.f32 %v2722, %v3190
    %v3291 = vadd.f32 %v2724, %v3191
    %v3292 = vadd.f32 %v2728, %v3192
    %v3293 = vadd.f32 %v2730, %v3193
    %v3294 = vadd.f32 %v2732, %v3194
    %v3295 = vadd.f32 %v2734, %v3195
    %v3296 = vadd.f32 %v2738, %v3196
    %v3297 = vadd.f32 %v2740, %v3197
    %v3298 = vadd.f32 %v2742, %v3198
    %v3299 = vadd.f32 %v2744, %v3199
    %v3300 = vadd.f32 %v2748, %v3200
    %v3301 = vadd.f32 %v2750, %v3201
    %v3302 = vadd.f32 %v2752, %v3202
    %v3303 = vadd.f32 %v2754, %v3203
    %v3304 = vadd.f32 %v2758, %v3204
    %v3305 = vadd.f32 %v2760, %v3205
    %v3306 = vadd.f32 %v2762, %v3206
    %v3307 = vadd.f32 %v2764, %v3207
    %v3308 = vadd.f32 %v2768, %v3208
    %v3309 = vadd.f32 %v2770, %v3209
    %v3310 = vadd.f32 %v2772, %v3210
    %v3311 = vadd.f32 %v2774, %v3211
    %v3312 = vadd.f32 %v2778, %v3212
    %v3313 = vadd.f32 %v2780, %v3213
    %v3314 = vadd.f32 %v2782, %v3214
    %v3315 = vadd.f32 %v2784, %v3215
    %v3316 = vadd.f32 %v2788, %v3216
    %v3317 = vadd.f32 %v2790, %v3217
    %v3318 = vadd.f32 %v2792, %v3218
    %v3319 = vadd.f32 %v2794, %v3219
    %v3320 = vadd.f32 %v2798, %v3220
    %v3321 = vadd.f32 %v2800, %v3221
    %v3322 = vadd.f32 %v2802, %v3222
    %v3323 = vadd.f32 %v2804, %v3223
    %v3324 = vadd.f32 %v2808, %v3224
    %v3325 = vadd.f32 %v2810, %v3225
    %v3326 = vadd.f32 %v2812, %v3226
    %v3327 = vadd.f32 %v2814, %v3227
    %v3328 = vadd.f32 %v2818, %v3228
    %v3329 = vadd.f32 %v2820, %v3229
    %v3330 = vadd.f32 %v2822, %v3230
    %v3331 = vadd.f32 %v2824, %v3231
    %v3332 = vadd.f32 %v2828, %v3232
    %v3333 = vadd.f32 %v2830, %v3233
    %v3334 = vadd.f32 %v2832, %v3234
    %v3335 = vadd.f32 %v2834, %v3235
    %v3336 = vmul.f32 %v3236, 0.7978846
    %v3337 = vmul.f32 %v3237, 0.7978846
    %v3338 = vmul.f32 %v3238, 0.7978846
    %v3339 = vmul.f32 %v3239, 0.7978846
    %v3340 = vmul.f32 %v3240, 0.7978846
    %v3341 = vmul.f32 %v3241, 0.7978846
    %v3342 = vmul.f32 %v3242, 0.7978846
    %v3343 = vmul.f32 %v3243, 0.7978846
    %v3344 = vmul.f32 %v3244, 0.7978846
    %v3345 = vmul.f32 %v3245, 0.7978846
    %v3346 = vmul.f32 %v3246, 0.7978846
    %v3347 = vmul.f32 %v3247, 0.7978846
    %v3348 = vmul.f32 %v3248, 0.7978846
    %v3349 = vmul.f32 %v3249, 0.7978846
    %v3350 = vmul.f32 %v3250, 0.7978846
    %v3351 = vmul.f32 %v3251, 0.7978846
    %v3352 = vmul.f32 %v3252, 0.7978846
    %v3353 = vmul.f32 %v3253, 0.7978846
    %v3354 = vmul.f32 %v3254, 0.7978846
    %v3355 = vmul.f32 %v3255, 0.7978846
    %v3356 = vmul.f32 %v3256, 0.7978846
    %v3357 = vmul.f32 %v3257, 0.7978846
    %v3358 = vmul.f32 %v3258, 0.7978846
    %v3359 = vmul.f32 %v3259, 0.7978846
    %v3360 = vmul.f32 %v3260, 0.7978846
    %v3361 = vmul.f32 %v3261, 0.7978846
    %v3362 = vmul.f32 %v3262, 0.7978846
    %v3363 = vmul.f32 %v3263, 0.7978846
    %v3364 = vmul.f32 %v3264, 0.7978846
    %v3365 = vmul.f32 %v3265, 0.7978846
    %v3366 = vmul.f32 %v3266, 0.7978846
    %v3367 = vmul.f32 %v3267, 0.7978846
    %v3368 = vmul.f32 %v3268, 0.7978846
    %v3369 = vmul.f32 %v3269, 0.7978846
    %v3370 = vmul.f32 %v3270, 0.7978846
    %v3371 = vmul.f32 %v3271, 0.7978846
    %v3372 = vmul.f32 %v3272, 0.7978846
    %v3373 = vmul.f32 %v3273, 0.7978846
    %v3374 = vmul.f32 %v3274, 0.7978846
    %v3375 = vmul.f32 %v3275, 0.7978846
    %v3376 = vmul.f32 %v3276, 0.7978846
    %v3377 = vmul.f32 %v3277, 0.7978846
    %v3378 = vmul.f32 %v3278, 0.7978846
    %v3379 = vmul.f32 %v3279, 0.7978846
    %v3380 = vmul.f32 %v3280, 0.7978846
    %v3381 = vmul.f32 %v3281, 0.7978846
    %v3382 = vmul.f32 %v3282, 0.7978846
    %v3383 = vmul.f32 %v3283, 0.7978846
    %v3384 = vmul.f32 %v3284, 0.7978846
    %v3385 = vmul.f32 %v3285, 0.7978846
    %v3386 = vmul.f32 %v3286, 0.7978846
    %v3387 = vmul.f32 %v3287, 0.7978846
    %v3388 = vmul.f32 %v3288, 0.7978846
    %v3389 = vmul.f32 %v3289, 0.7978846
    %v3390 = vmul.f32 %v3290, 0.7978846
    %v3391 = vmul.f32 %v3291, 0.7978846
    %v3392 = vmul.f32 %v3292, 0.7978846
    %v3393 = vmul.f32 %v3293, 0.7978846
    %v3394 = vmul.f32 %v3294, 0.7978846
    %v3395 = vmul.f32 %v3295, 0.7978846
    %v3396 = vmul.f32 %v3296, 0.7978846
    %v3397 = vmul.f32 %v3297, 0.7978846
    %v3398 = vmul.f32 %v3298, 0.7978846
    %v3399 = vmul.f32 %v3299, 0.7978846
    %v3400 = vmul.f32 %v3300, 0.7978846
    %v3401 = vmul.f32 %v3301, 0.7978846
    %v3402 = vmul.f32 %v3302, 0.7978846
    %v3403 = vmul.f32 %v3303, 0.7978846
    %v3404 = vmul.f32 %v3304, 0.7978846
    %v3405 = vmul.f32 %v3305, 0.7978846
    %v3406 = vmul.f32 %v3306, 0.7978846
    %v3407 = vmul.f32 %v3307, 0.7978846
    %v3408 = vmul.f32 %v3308, 0.7978846
    %v3409 = vmul.f32 %v3309, 0.7978846
    %v3410 = vmul.f32 %v3310, 0.7978846
    %v3411 = vmul.f32 %v3311, 0.7978846
    %v3412 = vmul.f32 %v3312, 0.7978846
    %v3413 = vmul.f32 %v3313, 0.7978846
    %v3414 = vmul.f32 %v3314, 0.7978846
    %v3415 = vmul.f32 %v3315, 0.7978846
    %v3416 = vmul.f32 %v3316, 0.7978846
    %v3417 = vmul.f32 %v3317, 0.7978846
    %v3418 = vmul.f32 %v3318, 0.7978846
    %v3419 = vmul.f32 %v3319, 0.7978846
    %v3420 = vmul.f32 %v3320, 0.7978846
    %v3421 = vmul.f32 %v3321, 0.7978846
    %v3422 = vmul.f32 %v3322, 0.7978846
    %v3423 = vmul.f32 %v3323, 0.7978846
    %v3424 = vmul.f32 %v3324, 0.7978846
    %v3425 = vmul.f32 %v3325, 0.7978846
    %v3426 = vmul.f32 %v3326, 0.7978846
    %v3427 = vmul.f32 %v3327, 0.7978846
    %v3428 = vmul.f32 %v3328, 0.7978846
    %v3429 = vmul.f32 %v3329, 0.7978846
    %v3430 = vmul.f32 %v3330, 0.7978846
    %v3431 = vmul.f32 %v3331, 0.7978846
    %v3432 = vmul.f32 %v3332, 0.7978846
    %v3433 = vmul.f32 %v3333, 0.7978846
    %v3434 = vmul.f32 %v3334, 0.7978846
    %v3435 = vmul.f32 %v3335, 0.7978846
    %v3436 = vtanh.pop %v3336
    %v3437 = vtanh.pop %v3337
    %v3438 = vtanh.pop %v3338
    %v3439 = vtanh.pop %v3339
    %v3440 = vtanh.pop %v3340
    %v3441 = vtanh.pop %v3341
    %v3442 = vtanh.pop %v3342
    %v3443 = vtanh.pop %v3343
    %v3444 = vtanh.pop %v3344
    %v3445 = vtanh.pop %v3345
    %v3446 = vtanh.pop %v3346
    %v3447 = vtanh.pop %v3347
    %v3448 = vtanh.pop %v3348
    %v3449 = vtanh.pop %v3349
    %v3450 = vtanh.pop %v3350
    %v3451 = vtanh.pop %v3351
    %v3452 = vtanh.pop %v3352
    %v3453 = vtanh.pop %v3353
    %v3454 = vtanh.pop %v3354
    %v3455 = vtanh.pop %v3355
    %v3456 = vtanh.pop %v3356
    %v3457 = vtanh.pop %v3357
    %v3458 = vtanh.pop %v3358
    %v3459 = vtanh.pop %v3359
    %v3460 = vtanh.pop %v3360
    %v3461 = vtanh.pop %v3361
    %v3462 = vtanh.pop %v3362
    %v3463 = vtanh.pop %v3363
    %v3464 = vtanh.pop %v3364
    %v3465 = vtanh.pop %v3365
    %v3466 = vtanh.pop %v3366
    %v3467 = vtanh.pop %v3367
    %v3468 = vtanh.pop %v3368
    %v3469 = vtanh.pop %v3369
    %v3470 = vtanh.pop %v3370
    %v3471 = vtanh.pop %v3371
    %v3472 = vtanh.pop %v3372
    %v3473 = vtanh.pop %v3373
    %v3474 = vtanh.pop %v3374
    %v3475 = vtanh.pop %v3375
    %v3476 = vtanh.pop %v3376
    %v3477 = vtanh.pop %v3377
    %v3478 = vtanh.pop %v3378
    %v3479 = vtanh.pop %v3379
    %v3480 = vtanh.pop %v3380
    %v3481 = vtanh.pop %v3381
    %v3482 = vtanh.pop %v3382
    %v3483 = vtanh.pop %v3383
    %v3484 = vtanh.pop %v3384
    %v3485 = vtanh.pop %v3385
    %v3486 = vtanh.pop %v3386
    %v3487 = vtanh.pop %v3387
    %v3488 = vtanh.pop %v3388
    %v3489 = vtanh.pop %v3389
    %v3490 = vtanh.pop %v3390
    %v3491 = vtanh.pop %v3391
    %v3492 = vtanh.pop %v3392
    %v3493 = vtanh.pop %v3393
    %v3494 = vtanh.pop %v3394
    %v3495 = vtanh.pop %v3395
    %v3496 = vtanh.pop %v3396
    %v3497 = vtanh.pop %v3397
    %v3498 = vtanh.pop %v3398
    %v3499 = vtanh.pop %v3399
    %v3500 = vtanh.pop %v3400
    %v3501 = vtanh.pop %v3401
    %v3502 = vtanh.pop %v3402
    %v3503 = vtanh.pop %v3403
    %v3504 = vtanh.pop %v3404
    %v3505 = vtanh.pop %v3405
    %v3506 = vtanh.pop %v3406
    %v3507 = vtanh.pop %v3407
    %v3508 = vtanh.pop %v3408
    %v3509 = vtanh.pop %v3409
    %v3510 = vtanh.pop %v3410
    %v3511 = vtanh.pop %v3411
    %v3512 = vtanh.pop %v3412
    %v3513 = vtanh.pop %v3413
    %v3514 = vtanh.pop %v3414
    %v3515 = vtanh.pop %v3415
    %v3516 = vtanh.pop %v3416
    %v3517 = vtanh.pop %v3417
    %v3518 = vtanh.pop %v3418
    %v3519 = vtanh.pop %v3419
    %v3520 = vtanh.pop %v3420
    %v3521 = vtanh.pop %v3421
    %v3522 = vtanh.pop %v3422
    %v3523 = vtanh.pop %v3423
    %v3524 = vtanh.pop %v3424
    %v3525 = vtanh.pop %v3425
    %v3526 = vtanh.pop %v3426
    %v3527 = vtanh.pop %v3427
    %v3528 = vtanh.pop %v3428
    %v3529 = vtanh.pop %v3429
    %v3530 = vtanh.pop %v3430
    %v3531 = vtanh.pop %v3431
    %v3532 = vtanh.pop %v3432
    %v3533 = vtanh.pop %v3433
    %v3534 = vtanh.pop %v3434
    %v3535 = vtanh.pop %v3435
    %v3536 = vadd.f32 %v3436, 1.0
    %v3537 = vadd.f32 %v3437, 1.0
    %v3538 = vadd.f32 %v3438, 1.0
    %v3539 = vadd.f32 %v3439, 1.0
    %v3540 = vadd.f32 %v3440, 1.0
    %v3541 = vadd.f32 %v3441, 1.0
    %v3542 = vadd.f32 %v3442, 1.0
    %v3543 = vadd.f32 %v3443, 1.0
    %v3544 = vadd.f32 %v3444, 1.0
    %v3545 = vadd.f32 %v3445, 1.0
    %v3546 = vadd.f32 %v3446, 1.0
    %v3547 = vadd.f32 %v3447, 1.0
    %v3548 = vadd.f32 %v3448, 1.0
    %v3549 = vadd.f32 %v3449, 1.0
    %v3550 = vadd.f32 %v3450, 1.0
    %v3551 = vadd.f32 %v3451, 1.0
    %v3552 = vadd.f32 %v3452, 1.0
    %v3553 = vadd.f32 %v3453, 1.0
    %v3554 = vadd.f32 %v3454, 1.0
    %v3555 = vadd.f32 %v3455, 1.0
    %v3556 = vadd.f32 %v3456, 1.0
    %v3557 = vadd.f32 %v3457, 1.0
    %v3558 = vadd.f32 %v3458, 1.0
    %v3559 = vadd.f32 %v3459, 1.0
    %v3560 = vadd.f32 %v3460, 1.0
    %v3561 = vadd.f32 %v3461, 1.0
    %v3562 = vadd.f32 %v3462, 1.0
    %v3563 = vadd.f32 %v3463, 1.0
    %v3564 = vadd.f32 %v3464, 1.0
    %v3565 = vadd.f32 %v3465, 1.0
    %v3566 = vadd.f32 %v3466, 1.0
    %v3567 = vadd.f32 %v3467, 1.0
    %v3568 = vadd.f32 %v3468, 1.0
    %v3569 = vadd.f32 %v3469, 1.0
    %v3570 = vadd.f32 %v3470, 1.0
    %v3571 = vadd.f32 %v3471, 1.0
    %v3572 = vadd.f32 %v3472, 1.0
    %v3573 = vadd.f32 %v3473, 1.0
    %v3574 = vadd.f32 %v3474, 1.0
    %v3575 = vadd.f32 %v3475, 1.0
    %v3576 = vadd.f32 %v3476, 1.0
    %v3577 = vadd.f32 %v3477, 1.0
    %v3578 = vadd.f32 %v3478, 1.0
    %v3579 = vadd.f32 %v3479, 1.0
    %v3580 = vadd.f32 %v3480, 1.0
    %v3581 = vadd.f32 %v3481, 1.0
    %v3582 = vadd.f32 %v3482, 1.0
    %v3583 = vadd.f32 %v3483, 1.0
    %v3584 = vadd.f32 %v3484, 1.0
    %v3585 = vadd.f32 %v3485, 1.0
    %v3586 = vadd.f32 %v3486, 1.0
    %v3587 = vadd.f32 %v3487, 1.0
    %v3588 = vadd.f32 %v3488, 1.0
    %v3589 = vadd.f32 %v3489, 1.0
    %v3590 = vadd.f32 %v3490, 1.0
    %v3591 = vadd.f32 %v3491, 1.0
    %v3592 = vadd.f32 %v3492, 1.0
    %v3593 = vadd.f32 %v3493, 1.0
    %v3594 = vadd.f32 %v3494, 1.0
    %v3595 = vadd.f32 %v3495, 1.0
    %v3596 = vadd.f32 %v3496, 1.0
    %v3597 = vadd.f32 %v3497, 1.0
    %v3598 = vadd.f32 %v3498, 1.0
    %v3599 = vadd.f32 %v3499, 1.0
    %v3600 = vadd.f32 %v3500, 1.0
    %v3601 = vadd.f32 %v3501, 1.0
    %v3602 = vadd.f32 %v3502, 1.0
    %v3603 = vadd.f32 %v3503, 1.0
    %v3604 = vadd.f32 %v3504, 1.0
    %v3605 = vadd.f32 %v3505, 1.0
    %v3606 = vadd.f32 %v3506, 1.0
    %v3607 = vadd.f32 %v3507, 1.0
    %v3608 = vadd.f32 %v3508, 1.0
    %v3609 = vadd.f32 %v3509, 1.0
    %v3610 = vadd.f32 %v3510, 1.0
    %v3611 = vadd.f32 %v3511, 1.0
    %v3612 = vadd.f32 %v3512, 1.0
    %v3613 = vadd.f32 %v3513, 1.0
    %v3614 = vadd.f32 %v3514, 1.0
    %v3615 = vadd.f32 %v3515, 1.0
    %v3616 = vadd.f32 %v3516, 1.0
    %v3617 = vadd.f32 %v3517, 1.0
    %v3618 = vadd.f32 %v3518, 1.0
    %v3619 = vadd.f32 %v3519, 1.0
    %v3620 = vadd.f32 %v3520, 1.0
    %v3621 = vadd.f32 %v3521, 1.0
    %v3622 = vadd.f32 %v3522, 1.0
    %v3623 = vadd.f32 %v3523, 1.0
    %v3624 = vadd.f32 %v3524, 1.0
    %v3625 = vadd.f32 %v3525, 1.0
    %v3626 = vadd.f32 %v3526, 1.0
    %v3627 = vadd.f32 %v3527, 1.0
    %v3628 = vadd.f32 %v3528, 1.0
    %v3629 = vadd.f32 %v3529, 1.0
    %v3630 = vadd.f32 %v3530, 1.0
    %v3631 = vadd.f32 %v3531, 1.0
    %v3632 = vadd.f32 %v3532, 1.0
    %v3633 = vadd.f32 %v3533, 1.0
    %v3634 = vadd.f32 %v3534, 1.0
    %v3635 = vadd.f32 %v3535, 1.0
    %v3636 = vmul.f32 %v2836, %v3536
    %v3637 = vmul.f32 %v2837, %v3537
    %v3638 = vmul.f32 %v2838, %v3538
    %v3639 = vmul.f32 %v2839, %v3539
    %v3640 = vmul.f32 %v2840, %v3540
    %v3641 = vmul.f32 %v2841, %v3541
    %v3642 = vmul.f32 %v2842, %v3542
    %v3643 = vmul.f32 %v2843, %v3543
    %v3644 = vmul.f32 %v2844, %v3544
    %v3645 = vmul.f32 %v2845, %v3545
    %v3646 = vmul.f32 %v2846, %v3546
    %v3647 = vmul.f32 %v2847, %v3547
    %v3648 = vmul.f32 %v2848, %v3548
    %v3649 = vmul.f32 %v2849, %v3549
    %v3650 = vmul.f32 %v2850, %v3550
    %v3651 = vmul.f32 %v2851, %v3551
    %v3652 = vmul.f32 %v2852, %v3552
    %v3653 = vmul.f32 %v2853, %v3553
    %v3654 = vmul.f32 %v2854, %v3554
    %v3655 = vmul.f32 %v2855, %v3555
    %v3656 = vmul.f32 %v2856, %v3556
    %v3657 = vmul.f32 %v2857, %v3557
    %v3658 = vmul.f32 %v2858, %v3558
    %v3659 = vmul.f32 %v2859, %v3559
    %v3660 = vmul.f32 %v2860, %v3560
    %v3661 = vmul.f32 %v2861, %v3561
    %v3662 = vmul.f32 %v2862, %v3562
    %v3663 = vmul.f32 %v2863, %v3563
    %v3664 = vmul.f32 %v2864, %v3564
    %v3665 = vmul.f32 %v2865, %v3565
    %v3666 = vmul.f32 %v2866, %v3566
    %v3667 = vmul.f32 %v2867, %v3567
    %v3668 = vmul.f32 %v2868, %v3568
    %v3669 = vmul.f32 %v2869, %v3569
    %v3670 = vmul.f32 %v2870, %v3570
    %v3671 = vmul.f32 %v2871, %v3571
    %v3672 = vmul.f32 %v2872, %v3572
    %v3673 = vmul.f32 %v2873, %v3573
    %v3674 = vmul.f32 %v2874, %v3574
    %v3675 = vmul.f32 %v2875, %v3575
    %v3676 = vmul.f32 %v2876, %v3576
    %v3677 = vmul.f32 %v2877, %v3577
    %v3678 = vmul.f32 %v2878, %v3578
    %v3679 = vmul.f32 %v2879, %v3579
    %v3680 = vmul.f32 %v2880, %v3580
    %v3681 = vmul.f32 %v2881, %v3581
    %v3682 = vmul.f32 %v2882, %v3582
    %v3683 = vmul.f32 %v2883, %v3583
    %v3684 = vmul.f32 %v2884, %v3584
    %v3685 = vmul.f32 %v2885, %v3585
    %v3686 = vmul.f32 %v2886, %v3586
    %v3687 = vmul.f32 %v2887, %v3587
    %v3688 = vmul.f32 %v2888, %v3588
    %v3689 = vmul.f32 %v2889, %v3589
    %v3690 = vmul.f32 %v2890, %v3590
    %v3691 = vmul.f32 %v2891, %v3591
    %v3692 = vmul.f32 %v2892, %v3592
    %v3693 = vmul.f32 %v2893, %v3593
    %v3694 = vmul.f32 %v2894, %v3594
    %v3695 = vmul.f32 %v2895, %v3595
    %v3696 = vmul.f32 %v2896, %v3596
    %v3697 = vmul.f32 %v2897, %v3597
    %v3698 = vmul.f32 %v2898, %v3598
    %v3699 = vmul.f32 %v2899, %v3599
    %v3700 = vmul.f32 %v2900, %v3600
    %v3701 = vmul.f32 %v2901, %v3601
    %v3702 = vmul.f32 %v2902, %v3602
    %v3703 = vmul.f32 %v2903, %v3603
    %v3704 = vmul.f32 %v2904, %v3604
    %v3705 = vmul.f32 %v2905, %v3605
    %v3706 = vmul.f32 %v2906, %v3606
    %v3707 = vmul.f32 %v2907, %v3607
    %v3708 = vmul.f32 %v2908, %v3608
    %v3709 = vmul.f32 %v2909, %v3609
    %v3710 = vmul.f32 %v2910, %v3610
    %v3711 = vmul.f32 %v2911, %v3611
    %v3712 = vmul.f32 %v2912, %v3612
    %v3713 = vmul.f32 %v2913, %v3613
    %v3714 = vmul.f32 %v2914, %v3614
    %v3715 = vmul.f32 %v2915, %v3615
    %v3716 = vmul.f32 %v2916, %v3616
    %v3717 = vmul.f32 %v2917, %v3617
    %v3718 = vmul.f32 %v2918, %v3618
    %v3719 = vmul.f32 %v2919, %v3619
    %v3720 = vmul.f32 %v2920, %v3620
    %v3721 = vmul.f32 %v2921, %v3621
    %v3722 = vmul.f32 %v2922, %v3622
    %v3723 = vmul.f32 %v2923, %v3623
    %v3724 = vmul.f32 %v2924, %v3624
    %v3725 = vmul.f32 %v2925, %v3625
    %v3726 = vmul.f32 %v2926, %v3626
    %v3727 = vmul.f32 %v2927, %v3627
    %v3728 = vmul.f32 %v2928, %v3628
    %v3729 = vmul.f32 %v2929, %v3629
    %v3730 = vmul.f32 %v2930, %v3630
    %v3731 = vmul.f32 %v2931, %v3631
    %v3732 = vmul.f32 %v2932, %v3632
    %v3733 = vmul.f32 %v2933, %v3633
    %v3734 = vmul.f32 %v2934, %v3634
    %v3735 = vmul.f32 %v2935, %v3635
    %v3736 = vld [vmem:[%s6] sm:$0xff]
    %v3737 = vld [vmem:[%s6 + $0x8] sm:$0xff]
    %v3738 = vld [vmem:[%s6 + $0x10] sm:$0xff]
    %v3739 = vld [vmem:[%s6 + $0x18] sm:$0xff]
    %v3740 = vld [vmem:[%s6 + $0x20] sm:$0xff]
    %v3741 = vld [vmem:[%s6 + $0x28] sm:$0xff]
    %v3742 = vld [vmem:[%s6 + $0x30] sm:$0xff]
    %v3743 = vld [vmem:[%s6 + $0x38] sm:$0xff]
    %v3744 = vld [vmem:[%s6 + $0x40] sm:$0xff]
    %v3745 = vld [vmem:[%s6 + $0x48] sm:$0xff]
    %v3746 = vld [vmem:[%s6 + $0x50] sm:$0xff]
    %v3747 = vld [vmem:[%s6 + $0x58] sm:$0xff]
    %v3748 = vld [vmem:[%s6 + $0x60] sm:$0xff]
    %v3749 = vld [vmem:[%s6 + $0x68] sm:$0xff]
    %v3750 = vld [vmem:[%s6 + $0x70] sm:$0xff]
    %v3751 = vld [vmem:[%s6 + $0x78] sm:$0xff]
    %v3752 = vld [vmem:[%s6 + $0x80] sm:$0xff]
    %v3753 = vld [vmem:[%s6 + $0x88] sm:$0xff]
    %v3754 = vld [vmem:[%s6 + $0x90] sm:$0xff]
    %v3755 = vld [vmem:[%s6 + $0x98] sm:$0xff]
    %v3756 = vld [vmem:[%s6 + $0xa0] sm:$0xff]
    %v3757 = vld [vmem:[%s6 + $0xa8] sm:$0xff]
    %v3758 = vld [vmem:[%s6 + $0xb0] sm:$0xff]
    %v3759 = vld [vmem:[%s6 + $0xb8] sm:$0xff]
    %v3760 = vld [vmem:[%s6 + $0xc0] sm:$0xff]
    %v3761 = vld [vmem:[%s6 + $0xc8] sm:$0xff]
    %v3762 = vld [vmem:[%s6 + $0xd0] sm:$0xff]
    %v3763 = vld [vmem:[%s6 + $0xd8] sm:$0xff]
    %v3764 = vld [vmem:[%s6 + $0xe0] sm:$0xff]
    %v3765 = vld [vmem:[%s6 + $0xe8] sm:$0xff]
    %v3766 = vld [vmem:[%s6 + $0xf0] sm:$0xff]
    %v3767 = vld [vmem:[%s6 + $0xf8] sm:$0xff]
    %v3768 = vpack.c.bf16 %v3638, %v3636
    %v3769 = vpack.c.bf16 %v3639, %v3637
    %v3770 = vpack.c.bf16 %v3642, %v3640
    %v3771 = vpack.c.bf16 %v3643, %v3641
    %v3772 = vpack.c.bf16 %v3646, %v3644
    %v3773 = vpack.c.bf16 %v3647, %v3645
    %v3774 = vpack.c.bf16 %v3650, %v3648
    %v3775 = vpack.c.bf16 %v3651, %v3649
    %v3776 = vpack.c.bf16 %v3654, %v3652
    %v3777 = vpack.c.bf16 %v3655, %v3653
    %v3778 = vpack.c.bf16 %v3658, %v3656
    %v3779 = vpack.c.bf16 %v3659, %v3657
    %v3780 = vpack.c.bf16 %v3662, %v3660
    %v3781 = vpack.c.bf16 %v3663, %v3661
    %v3782 = vpack.c.bf16 %v3666, %v3664
    %v3783 = vpack.c.bf16 %v3667, %v3665
    %v3784 = vpack.c.bf16 %v3670, %v3668
    %v3785 = vpack.c.bf16 %v3671, %v3669
    %v3786 = vpack.c.bf16 %v3674, %v3672
    %v3787 = vpack.c.bf16 %v3675, %v3673
    %v3788 = vpack.c.bf16 %v3678, %v3676
    %v3789 = vpack.c.bf16 %v3679, %v3677
    %v3790 = vpack.c.bf16 %v3682, %v3680
    %v3791 = vpack.c.bf16 %v3683, %v3681
    %v3792 = vpack.c.bf16 %v3686, %v3684
    %v3793 = vpack.c.bf16 %v3687, %v3685
    %v3794 = vpack.c.bf16 %v3690, %v3688
    %v3795 = vpack.c.bf16 %v3691, %v3689
    %v3796 = vpack.c.bf16 %v3694, %v3692
    %v3797 = vpack.c.bf16 %v3695, %v3693
    %v3798 = vpack.c.bf16 %v3698, %v3696
    %v3799 = vpack.c.bf16 %v3699, %v3697
    %v3800 = vpack.c.bf16 %v3702, %v3700
    %v3801 = vpack.c.bf16 %v3703, %v3701
    %v3802 = vpack.c.bf16 %v3706, %v3704
    %v3803 = vpack.c.bf16 %v3707, %v3705
    %v3804 = vpack.c.bf16 %v3710, %v3708
    %v3805 = vpack.c.bf16 %v3711, %v3709
    %v3806 = vpack.c.bf16 %v3714, %v3712
    %v3807 = vpack.c.bf16 %v3715, %v3713
    %v3808 = vpack.c.bf16 %v3718, %v3716
    %v3809 = vpack.c.bf16 %v3719, %v3717
    %v3810 = vpack.c.bf16 %v3722, %v3720
    %v3811 = vpack.c.bf16 %v3723, %v3721
    %v3812 = vpack.c.bf16 %v3726, %v3724
    %v3813 = vpack.c.bf16 %v3727, %v3725
    %v3814 = vpack.c.bf16 %v3730, %v3728
    %v3815 = vpack.c.bf16 %v3731, %v3729
    %v3816 = vpack.c.bf16 %v3734, %v3732
    %v3817 = vpack.c.bf16 %v3735, %v3733
    %3818 = vset.pattern.permute.xlu0 3
    %3819 = vperm.xlu0 %3818, %v1503
    %v3820 = vpop.permute.xlu0 %3819
    %3822 = vset.pattern.permute.xlu0 3
    %3823 = vperm.xlu0 %3822, %v1504
    %v3824 = vpop.permute.xlu0 %3823
    %3826 = vset.pattern.permute.xlu0 3
    %3827 = vperm.xlu0 %3826, %v1505
    %v3828 = vpop.permute.xlu0 %3827
    %3830 = vset.pattern.permute.xlu0 3
    %3831 = vperm.xlu0 %3830, %v1506
    %v3832 = vpop.permute.xlu0 %3831
    %3834 = vset.pattern.permute.xlu0 3
    %3835 = vperm.xlu0 %3834, %v1507
    %v3836 = vpop.permute.xlu0 %3835
    %3838 = vset.pattern.permute.xlu0 3
    %3839 = vperm.xlu0 %3838, %v1508
    %v3840 = vpop.permute.xlu0 %3839
    %3842 = vset.pattern.permute.xlu0 3
    %3843 = vperm.xlu0 %3842, %v1509
    %v3844 = vpop.permute.xlu0 %3843
    %3846 = vset.pattern.permute.xlu0 3
    %3847 = vperm.xlu0 %3846, %v1510
    %v3848 = vpop.permute.xlu0 %3847
    %3850 = vset.pattern.permute.xlu0 3
    %3851 = vperm.xlu0 %3850, %v1511
    %v3852 = vpop.permute.xlu0 %3851
    %3854 = vset.pattern.permute.xlu0 3
    %3855 = vperm.xlu0 %3854, %v1512
    %v3856 = vpop.permute.xlu0 %3855
    %3858 = vset.pattern.permute.xlu0 3
    %3859 = vperm.xlu0 %3858, %v1513
    %v3860 = vpop.permute.xlu0 %3859
    %3862 = vset.pattern.permute.xlu0 3
    %3863 = vperm.xlu0 %3862, %v1514
    %v3864 = vpop.permute.xlu0 %3863
    %3866 = vset.pattern.permute.xlu0 3
    %3867 = vperm.xlu0 %3866, %v1515
    %v3868 = vpop.permute.xlu0 %3867
    %3870 = vset.pattern.permute.xlu0 3
    %3871 = vperm.xlu0 %3870, %v1516
    %v3872 = vpop.permute.xlu0 %3871
    %3874 = vset.pattern.permute.xlu0 3
    %3875 = vperm.xlu0 %3874, %v1517
    %v3876 = vpop.permute.xlu0 %3875
    %3878 = vset.pattern.permute.xlu0 3
    %3879 = vperm.xlu0 %3878, %v1518
    %v3880 = vpop.permute.xlu0 %3879
    %v3914 = vunpack.c.l.b16 %v3736
    %v3915 = vunpack.c.h.b16 %v3736
    %v3916 = vunpack.c.l.b16 %v3737
    %v3917 = vunpack.c.h.b16 %v3737
    %v3918 = vunpack.c.l.b16 %v3738
    %v3919 = vunpack.c.h.b16 %v3738
    %v3920 = vunpack.c.l.b16 %v3739
    %v3921 = vunpack.c.h.b16 %v3739
    %v3922 = vunpack.c.l.b16 %v3740
    %v3923 = vunpack.c.h.b16 %v3740
    %v3924 = vunpack.c.l.b16 %v3741
    %v3925 = vunpack.c.h.b16 %v3741
    %v3926 = vunpack.c.l.b16 %v3742
    %v3927 = vunpack.c.h.b16 %v3742
    %v3928 = vunpack.c.l.b16 %v3743
    %v3929 = vunpack.c.h.b16 %v3743
    %v3930 = vunpack.c.l.b16 %v3744
    %v3931 = vunpack.c.h.b16 %v3744
    %v3932 = vunpack.c.l.b16 %v3745
    %v3933 = vunpack.c.h.b16 %v3745
    %v3934 = vunpack.c.l.b16 %v3746
    %v3935 = vunpack.c.h.b16 %v3746
    %v3936 = vunpack.c.l.b16 %v3747
    %v3937 = vunpack.c.h.b16 %v3747
    %v3938 = vunpack.c.l.b16 %v3748
    %v3939 = vunpack.c.h.b16 %v3748
    %v3940 = vunpack.c.l.b16 %v3749
    %v3941 = vunpack.c.h.b16 %v3749
    %v3942 = vunpack.c.l.b16 %v3750
    %v3943 = vunpack.c.h.b16 %v3750
    %v3944 = vunpack.c.l.b16 %v3751
    %v3945 = vunpack.c.h.b16 %v3751
    %v3946 = vunpack.c.l.b16 %v3752
    %v3947 = vunpack.c.h.b16 %v3752
    %v3948 = vunpack.c.l.b16 %v3753
    %v3949 = vunpack.c.h.b16 %v3753
    %v3950 = vunpack.c.l.b16 %v3754
    %v3951 = vunpack.c.h.b16 %v3754
    %v3952 = vunpack.c.l.b16 %v3755
    %v3953 = vunpack.c.h.b16 %v3755
    %v3954 = vunpack.c.l.b16 %v3756
    %v3955 = vunpack.c.h.b16 %v3756
    %v3956 = vunpack.c.l.b16 %v3757
    %v3957 = vunpack.c.h.b16 %v3757
    %v3958 = vunpack.c.l.b16 %v3758
    %v3959 = vunpack.c.h.b16 %v3758
    %v3960 = vunpack.c.l.b16 %v3759
    %v3961 = vunpack.c.h.b16 %v3759
    %v3962 = vunpack.c.l.b16 %v3760
    %v3963 = vunpack.c.h.b16 %v3760
    %v3964 = vunpack.c.l.b16 %v3761
    %v3965 = vunpack.c.h.b16 %v3761
    %v3966 = vunpack.c.l.b16 %v3762
    %v3967 = vunpack.c.h.b16 %v3762
    %v3968 = vunpack.c.l.b16 %v3763
    %v3969 = vunpack.c.h.b16 %v3763
    %v3970 = vunpack.c.l.b16 %v3764
    %v3971 = vunpack.c.h.b16 %v3764
    %v3972 = vunpack.c.l.b16 %v3765
    %v3973 = vunpack.c.h.b16 %v3765
    %v3974 = vunpack.c.l.b16 %v3766
    %v3975 = vunpack.c.h.b16 %v3766
    %v3976 = vunpack.c.l.b16 %v3767
    %v3977 = vunpack.c.h.b16 %v3767
    %v3978 = vpack.c.b16 %v3918, %v3914
    %v3979 = vpack.c.b16 %v3919, %v3915
    %v3980 = vpack.c.b16 %v3920, %v3916
    %v3981 = vpack.c.b16 %v3921, %v3917
    %v3982 = vpack.c.b16 %v3926, %v3922
    %v3983 = vpack.c.b16 %v3927, %v3923
    %v3984 = vpack.c.b16 %v3928, %v3924
    %v3985 = vpack.c.b16 %v3929, %v3925
    %v3986 = vpack.c.b16 %v3934, %v3930
    %v3987 = vpack.c.b16 %v3935, %v3931
    %v3988 = vpack.c.b16 %v3936, %v3932
    %v3989 = vpack.c.b16 %v3937, %v3933
    %v3990 = vpack.c.b16 %v3942, %v3938
    %v3991 = vpack.c.b16 %v3943, %v3939
    %v3992 = vpack.c.b16 %v3944, %v3940
    %v3993 = vpack.c.b16 %v3945, %v3941
    %v3994 = vpack.c.b16 %v3950, %v3946
    %v3995 = vpack.c.b16 %v3951, %v3947
    %v3996 = vpack.c.b16 %v3952, %v3948
    %v3997 = vpack.c.b16 %v3953, %v3949
    %v3998 = vpack.c.b16 %v3958, %v3954
    %v3999 = vpack.c.b16 %v3959, %v3955
    %v4000 = vpack.c.b16 %v3960, %v3956
    %v4001 = vpack.c.b16 %v3961, %v3957
    %v4002 = vpack.c.b16 %v3966, %v3962
    %v4003 = vpack.c.b16 %v3967, %v3963
    %v4004 = vpack.c.b16 %v3968, %v3964
    %v4005 = vpack.c.b16 %v3969, %v3965
    %v4006 = vpack.c.b16 %v3974, %v3970
    %v4007 = vpack.c.b16 %v3975, %v3971
    %v4008 = vpack.c.b16 %v3976, %v3972
    %v4009 = vpack.c.b16 %v3977, %v3973
    %vm4034 = vcmask 130048
    %v4036 = vsel %vm4034, %v3981, 0
    %v4039 = vsel %vm4034, %v3985, 0
    %v4042 = vsel %vm4034, %v3989, 0
    %v4045 = vsel %vm4034, %v3993, 0
    %v4048 = vsel %vm4034, %v3997, 0
    %v4051 = vsel %vm4034, %v4001, 0
    %v4054 = vsel %vm4034, %v4005, 0
    %v4057 = vsel %vm4034, %v4009, 0
    %4059 = vmatprep.subr.bf16.mxu0 %v3769
    %4060 = vmatpush1.bf16.msra.mxu0 %v3768
    %4061 = vmatprep.subr.bf16.mxu0 %v3771
    %4062 = vmatpush1.bf16.msra.mxu0 %v3770
    %4063 = vmatprep.subr.bf16.mxu0 %v3773
    %4064 = vmatpush1.bf16.msra.mxu0 %v3772
    %4065 = vmatprep.subr.bf16.mxu0 %v3775
    %4066 = vmatpush1.bf16.msra.mxu0 %v3774
    %4067 = vmatprep.subr.bf16.mxu0 %v3777
    %4068 = vmatpush1.bf16.msra.mxu0 %v3776
    %4069 = vmatprep.subr.bf16.mxu0 %v3779
    %4070 = vmatpush1.bf16.msra.mxu0 %v3778
    %4071 = vmatprep.subr.bf16.mxu0 %v3781
    %4072 = vmatpush1.bf16.msra.mxu0 %v3780
    %4073 = vmatprep.subr.bf16.mxu0 %v3783
    %4074 = vmatpush1.bf16.msra.mxu0 %v3782
    %4075 = vmatprep.subr.bf16.mxu0 %v3785
    %4076 = vmatpush1.bf16.msra.mxu0 %v3784
    %4077 = vmatprep.subr.bf16.mxu0 %v3787
    %4078 = vmatpush1.bf16.msra.mxu0 %v3786
    %4079 = vmatprep.subr.bf16.mxu0 %v3789
    %4080 = vmatpush1.bf16.msra.mxu0 %v3788
    %4081 = vmatprep.subr.bf16.mxu0 %v3791
    %4082 = vmatpush1.bf16.msra.mxu0 %v3790
    %4083 = vmatprep.subr.bf16.mxu0 %v3793
    %4084 = vmatpush1.bf16.msra.mxu0 %v3792
    %4085 = vmatprep.subr.bf16.mxu0 %v3795
    %4086 = vmatpush1.bf16.msra.mxu0 %v3794
    %4087 = vmatprep.subr.bf16.mxu0 %v3797
    %4088 = vmatpush1.bf16.msra.mxu0 %v3796
    %4089 = vmatprep.subr.bf16.mxu0 %v3799
    %4090 = vmatpush1.bf16.msra.mxu0 %v3798
    %4091 = vmatprep.mubr.bf16.mxu0 %v3979
    %4092 = vmatmul.mubr.bf16.gmra.mrb[0].mxu0 %v3978
    %v4093 = vpop.f32.mrb[0].mxu0
    %v4094 = vadd.f32 %v3820, %v4093
    %v4095 = vpop.f32.mrb[0].mxu0
    %v4096 = vadd.f32 %v3820, %v4095
    %v4097 = vpop.f32.mrb[0].mxu0
    %v4098 = vadd.f32 %v3824, %v4097
    %v4099 = vpop.f32.mrb[0].mxu0
    %v4100 = vadd.f32 %v3824, %v4099
    %4101 = vmatprep.mubr.bf16.mxu0 %v3983
    %4102 = vmatmul.mubr.bf16.gmra.mrb[0].mxu0 %v3982
    %v4103 = vpop.f32.mrb[0].mxu0
    %v4104 = vadd.f32 %v3828, %v4103
    %v4105 = vpop.f32.mrb[0].mxu0
    %v4106 = vadd.f32 %v3828, %v4105
    %v4107 = vpop.f32.mrb[0].mxu0
    %v4108 = vadd.f32 %v3832, %v4107
    %v4109 = vpop.f32.mrb[0].mxu0
    %v4110 = vadd.f32 %v3832, %v4109
    %4111 = vmatprep.mubr.bf16.mxu0 %v3987
    %4112 = vmatmul.mubr.bf16.gmra.mrb[0].mxu0 %v3986
    %v4113 = vpop.f32.mrb[0].mxu0
    %v4114 = vadd.f32 %v3836, %v4113
    %v4115 = vpop.f32.mrb[0].mxu0
    %v4116 = vadd.f32 %v3836, %v4115
    %v4117 = vpop.f32.mrb[0].mxu0
    %v4118 = vadd.f32 %v3840, %v4117
    %v4119 = vpop.f32.mrb[0].mxu0
    %v4120 = vadd.f32 %v3840, %v4119
    %4121 = vmatprep.mubr.bf16.mxu0 %v3991
    %4122 = vmatmul.mubr.bf16.gmra.mrb[0].mxu0 %v3990
    %v4123 = vpop.f32.mrb[0].mxu0
    %v4124 = vadd.f32 %v3844, %v4123
    %v4125 = vpop.f32.mrb[0].mxu0
    %v4126 = vadd.f32 %v3844, %v4125
    %v4127 = vpop.f32.mrb[0].mxu0
    %v4128 = vadd.f32 %v3848, %v4127
    %v4129 = vpop.f32.mrb[0].mxu0
    %v4130 = vadd.f32 %v3848, %v4129
    %4131 = vmatprep.mubr.bf16.mxu0 %v3995
    %4132 = vmatmul.mubr.bf16.gmra.mrb[0].mxu0 %v3994
    %v4133 = vpop.f32.mrb[0].mxu0
    %v4134 = vadd.f32 %v3852, %v4133
    %v4135 = vpop.f32.mrb[0].mxu0
    %v4136 = vadd.f32 %v3852, %v4135
    %v4137 = vpop.f32.mrb[0].mxu0
    %v4138 = vadd.f32 %v3856, %v4137
    %v4139 = vpop.f32.mrb[0].mxu0
    %v4140 = vadd.f32 %v3856, %v4139
    %4141 = vmatprep.mubr.bf16.mxu0 %v3999
    %4142 = vmatmul.mubr.bf16.gmra.mrb[0].mxu0 %v3998
    %v4143 = vpop.f32.mrb[0].mxu0
    %v4144 = vadd.f32 %v3860, %v4143
    %v4145 = vpop.f32.mrb[0].mxu0
    %v4146 = vadd.f32 %v3860, %v4145
    %v4147 = vpop.f32.mrb[0].mxu0
    %v4148 = vadd.f32 %v3864, %v4147
    %v4149 = vpop.f32.mrb[0].mxu0
    %v4150 = vadd.f32 %v3864, %v4149
    %4151 = vmatprep.mubr.bf16.mxu0 %v4003
    %4152 = vmatmul.mubr.bf16.gmra.mrb[0].mxu0 %v4002
    %v4153 = vpop.f32.mrb[0].mxu0
    %v4154 = vadd.f32 %v3868, %v4153
    %v4155 = vpop.f32.mrb[0].mxu0
    %v4156 = vadd.f32 %v3868, %v4155
    %v4157 = vpop.f32.mrb[0].mxu0
    %v4158 = vadd.f32 %v3872, %v4157
    %v4159 = vpop.f32.mrb[0].mxu0
    %v4160 = vadd.f32 %v3872, %v4159
    %4161 = vmatprep.mubr.bf16.mxu0 %v4007
    %4162 = vmatmul.mubr.bf16.gmra.mrb[0].mxu0 %v4006
    %v4163 = vpop.f32.mrb[0].mxu0
    %v4164 = vadd.f32 %v3876, %v4163
    %v4165 = vpop.f32.mrb[0].mxu0
    %v4166 = vadd.f32 %v3876, %v4165
    %v4167 = vpop.f32.mrb[0].mxu0
    %v4168 = vadd.f32 %v3880, %v4167
    %v4169 = vpop.f32.mrb[0].mxu0
    %v4170 = vadd.f32 %v3880, %v4169
    %4171 = vdwg.mxu0
    %4172 = vmatprep.subr.bf16.mxu0 %v3801
    %4173 = vmatpush1.bf16.msra.mxu0 %v3800
    %4174 = vmatprep.subr.bf16.mxu0 %v3803
    %4175 = vmatpush1.bf16.msra.mxu0 %v3802
    %4176 = vmatprep.subr.bf16.mxu0 %v3805
    %4177 = vmatpush1.bf16.msra.mxu0 %v3804
    %4178 = vmatprep.subr.bf16.mxu0 %v3807
    %4179 = vmatpush1.bf16.msra.mxu0 %v3806
    %4180 = vmatprep.subr.bf16.mxu0 %v3809
    %4181 = vmatpush1.bf16.msra.mxu0 %v3808
    %4182 = vmatprep.subr.bf16.mxu0 %v3811
    %4183 = vmatpush1.bf16.msra.mxu0 %v3810
    %4184 = vmatprep.subr.bf16.mxu0 %v3813
    %4185 = vmatpush1.bf16.msra.mxu0 %v3812
    %4186 = vmatprep.subr.bf16.mxu0 %v3815
    %4187 = vmatpush1.bf16.msra.mxu0 %v3814
    %4188 = vmatprep.subr.bf16.mxu0 %v3817
    %4189 = vmatpush1.bf16.msra.mxu0 %v3816
    %4190 = vmatprep.subr.bf16.mxu0 0
    %4191 = vmatpush1.bf16.msra.mxu0 0
    %4192 = vmatprep.subr.bf16.mxu0 0
    %4193 = vmatpush1.bf16.msra.mxu0 0
    %4194 = vmatprep.subr.bf16.mxu0 0
    %4195 = vmatpush1.bf16.msra.mxu0 0
    %4196 = vmatprep.subr.bf16.mxu0 0
    %4197 = vmatpush1.bf16.msra.mxu0 0
    %4198 = vmatprep.subr.bf16.mxu0 0
    %4199 = vmatpush1.bf16.msra.mxu0 0
    %4200 = vmatprep.subr.bf16.mxu0 0
    %4201 = vmatpush1.bf16.msra.mxu0 0
    %4202 = vmatprep.subr.bf16.mxu0 0
    %4203 = vmatpush1.bf16.msra.mxu0 0
    %4204 = vmatprep.mubr.bf16.mxu0 %v4036
    %4205 = vmatmul.mubr.bf16.gmra.mrb[0].mxu0 %v3980
    %v4206 = vpop.f32.mrb[0].mxu0
    %v4207 = vadd.f32 %v4094, %v4206
    %v4208 = vpop.f32.mrb[0].mxu0
    %v4209 = vadd.f32 %v4096, %v4208
    %v4210 = vpop.f32.mrb[0].mxu0
    %v4211 = vadd.f32 %v4098, %v4210
    %v4212 = vpop.f32.mrb[0].mxu0
    %v4213 = vadd.f32 %v4100, %v4212
    %4214 = vmatprep.mubr.bf16.mxu0 %v4039
    %4215 = vmatmul.mubr.bf16.gmra.mrb[0].mxu0 %v3984
    %v4216 = vpop.f32.mrb[0].mxu0
    %v4217 = vadd.f32 %v4104, %v4216
    %v4218 = vpop.f32.mrb[0].mxu0
    %v4219 = vadd.f32 %v4106, %v4218
    %v4220 = vpop.f32.mrb[0].mxu0
    %v4221 = vadd.f32 %v4108, %v4220
    %v4222 = vpop.f32.mrb[0].mxu0
    %v4223 = vadd.f32 %v4110, %v4222
    %4224 = vmatprep.mubr.bf16.mxu0 %v4042
    %4225 = vmatmul.mubr.bf16.gmra.mrb[0].mxu0 %v3988
    %v4226 = vpop.f32.mrb[0].mxu0
    %v4227 = vadd.f32 %v4114, %v4226
    %v4228 = vpop.f32.mrb[0].mxu0
    %v4229 = vadd.f32 %v4116, %v4228
    %v4230 = vpop.f32.mrb[0].mxu0
    %v4231 = vadd.f32 %v4118, %v4230
    %v4232 = vpop.f32.mrb[0].mxu0
    %v4233 = vadd.f32 %v4120, %v4232
    %4234 = vmatprep.mubr.bf16.mxu0 %v4045
    %4235 = vmatmul.mubr.bf16.gmra.mrb[0].mxu0 %v3992
    %v4236 = vpop.f32.mrb[0].mxu0
    %v4237 = vadd.f32 %v4124, %v4236
    %v4238 = vpop.f32.mrb[0].mxu0
    %v4239 = vadd.f32 %v4126, %v4238
    %v4240 = vpop.f32.mrb[0].mxu0
    %v4241 = vadd.f32 %v4128, %v4240
    %v4242 = vpop.f32.mrb[0].mxu0
    %v4243 = vadd.f32 %v4130, %v4242
    %4244 = vmatprep.mubr.bf16.mxu0 %v4048
    %4245 = vmatmul.mubr.bf16.gmra.mrb[0].mxu0 %v3996
    %v4246 = vpop.f32.mrb[0].mxu0
    %v4247 = vadd.f32 %v4134, %v4246
    %v4248 = vpop.f32.mrb[0].mxu0
    %v4249 = vadd.f32 %v4136, %v4248
    %v4250 = vpop.f32.mrb[0].mxu0
    %v4251 = vadd.f32 %v4138, %v4250
    %v4252 = vpop.f32.mrb[0].mxu0
    %v4253 = vadd.f32 %v4140, %v4252
    %4254 = vmatprep.mubr.bf16.mxu0 %v4051
    %4255 = vmatmul.mubr.bf16.gmra.mrb[0].mxu0 %v4000
    %v4256 = vpop.f32.mrb[0].mxu0
    %v4257 = vadd.f32 %v4144, %v4256
    %v4258 = vpop.f32.mrb[0].mxu0
    %v4259 = vadd.f32 %v4146, %v4258
    %v4260 = vpop.f32.mrb[0].mxu0
    %v4261 = vadd.f32 %v4148, %v4260
    %v4262 = vpop.f32.mrb[0].mxu0
    %v4263 = vadd.f32 %v4150, %v4262
    %4264 = vmatprep.mubr.bf16.mxu0 %v4054
    %4265 = vmatmul.mubr.bf16.gmra.mrb[0].mxu0 %v4004
    %v4266 = vpop.f32.mrb[0].mxu0
    %v4267 = vadd.f32 %v4154, %v4266
    %v4268 = vpop.f32.mrb[0].mxu0
    %v4269 = vadd.f32 %v4156, %v4268
    %v4270 = vpop.f32.mrb[0].mxu0
    %v4271 = vadd.f32 %v4158, %v4270
    %v4272 = vpop.f32.mrb[0].mxu0
    %v4273 = vadd.f32 %v4160, %v4272
    %4274 = vmatprep.mubr.bf16.mxu0 %v4057
    %4275 = vmatmul.mubr.bf16.gmra.mrb[0].mxu0 %v4008
    %v4276 = vpop.f32.mrb[0].mxu0
    %v4277 = vadd.f32 %v4164, %v4276
    %v4278 = vpop.f32.mrb[0].mxu0
    %v4279 = vadd.f32 %v4166, %v4278
    %v4280 = vpop.f32.mrb[0].mxu0
    %v4281 = vadd.f32 %v4168, %v4280
    %v4282 = vpop.f32.mrb[0].mxu0
    %v4283 = vadd.f32 %v4170, %v4282
    %4284 = vdwg.mxu0
    %v4285 = vadd.f32 %v1808, %v4207
    %v4286 = vadd.f32 %v1937, %v4209
    %v4287 = vadd.f32 %v1809, %v4211
    %v4288 = vadd.f32 %v1938, %v4213
    %v4289 = vadd.f32 %v1810, %v4217
    %v4290 = vadd.f32 %v1939, %v4219
    %v4291 = vadd.f32 %v1811, %v4221
    %v4292 = vadd.f32 %v1940, %v4223
    %v4293 = vadd.f32 %v1812, %v4227
    %v4294 = vadd.f32 %v1941, %v4229
    %v4295 = vadd.f32 %v1813, %v4231
    %v4296 = vadd.f32 %v1942, %v4233
    %v4297 = vadd.f32 %v1814, %v4237
    %v4298 = vadd.f32 %v1943, %v4239
    %v4299 = vadd.f32 %v1815, %v4241
    %v4300 = vadd.f32 %v1944, %v4243
    %v4301 = vadd.f32 %v1816, %v4247
    %v4302 = vadd.f32 %v1945, %v4249
    %v4303 = vadd.f32 %v1817, %v4251
    %v4304 = vadd.f32 %v1946, %v4253
    %v4305 = vadd.f32 %v1818, %v4257
    %v4306 = vadd.f32 %v1947, %v4259
    %v4307 = vadd.f32 %v1819, %v4261
    %v4308 = vadd.f32 %v1948, %v4263
    %v4309 = vadd.f32 %v1820, %v4267
    %v4310 = vadd.f32 %v1949, %v4269
    %v4311 = vadd.f32 %v1821, %v4271
    %v4312 = vadd.f32 %v1950, %v4273
    %v4313 = vadd.f32 %v1822, %v4277
    %v4314 = vadd.f32 %v1951, %v4279
    %v4315 = vadd.f32 %v1823, %v4281
    %v4316 = vadd.f32 %v1952, %v4283
    %4317 = vst [vmem:[#allocation8] sm:$0xff] %v4285
    %4318 = vst [vmem:[#allocation8 + $0x8] sm:$0xff] %v4286
    %4319 = vst [vmem:[#allocation8 + $0x10] sm:$0xff] %v4287
    %4320 = vst [vmem:[#allocation8 + $0x18] sm:$0xff] %v4288
    %4321 = vst [vmem:[#allocation8 + $0x20] sm:$0xff] %v4289
    %4322 = vst [vmem:[#allocation8 + $0x28] sm:$0xff] %v4290
    %4323 = vst [vmem:[#allocation8 + $0x30] sm:$0xff] %v4291
    %4324 = vst [vmem:[#allocation8 + $0x38] sm:$0xff] %v4292
    %4325 = vst [vmem:[#allocation8 + $0x40] sm:$0xff] %v4293
    %4326 = vst [vmem:[#allocation8 + $0x48] sm:$0xff] %v4294
    %4327 = vst [vmem:[#allocation8 + $0x50] sm:$0xff] %v4295
    %4328 = vst [vmem:[#allocation8 + $0x58] sm:$0xff] %v4296
    %4329 = vst [vmem:[#allocation8 + $0x60] sm:$0xff] %v4297
    %4330 = vst [vmem:[#allocation8 + $0x68] sm:$0xff] %v4298
    %4331 = vst [vmem:[#allocation8 + $0x70] sm:$0xff] %v4299
    %4332 = vst [vmem:[#allocation8 + $0x78] sm:$0xff] %v4300
    %4333 = vst [vmem:[#allocation8 + $0x80] sm:$0xff] %v4301
    %4334 = vst [vmem:[#allocation8 + $0x88] sm:$0xff] %v4302
    %4335 = vst [vmem:[#allocation8 + $0x90] sm:$0xff] %v4303
    %4336 = vst [vmem:[#allocation8 + $0x98] sm:$0xff] %v4304
    %4337 = vst [vmem:[#allocation8 + $0xa0] sm:$0xff] %v4305
    %4338 = vst [vmem:[#allocation8 + $0xa8] sm:$0xff] %v4306
    %4339 = vst [vmem:[#allocation8 + $0xb0] sm:$0xff] %v4307
    %4340 = vst [vmem:[#allocation8 + $0xb8] sm:$0xff] %v4308
    %4341 = vst [vmem:[#allocation8 + $0xc0] sm:$0xff] %v4309
    %4342 = vst [vmem:[#allocation8 + $0xc8] sm:$0xff] %v4310
    %4343 = vst [vmem:[#allocation8 + $0xd0] sm:$0xff] %v4311
    %4344 = vst [vmem:[#allocation8 + $0xd8] sm:$0xff] %v4312
    %4345 = vst [vmem:[#allocation8 + $0xe0] sm:$0xff] %v4313
    %4346 = vst [vmem:[#allocation8 + $0xe8] sm:$0xff] %v4314
    %4347 = vst [vmem:[#allocation8 + $0xf0] sm:$0xff] %v4315
    %4348 = vst [vmem:[#allocation8 + $0xf8] sm:$0xff] %v4316
    // Predicated region
    $region50: #{tpu_custom_call.1} parent=1 // pred_check
      _
    $region51: #{tpu_custom_call.1} parent=1 // pred_check_branch
      %4350 = sbr.rel (0) target = $region53
    $region52: #{tpu_custom_call.1} parent=1 // pred_region
      %s4352 = ssub.s32 4096, 4096
      %4353 = vsyncadd [#allocation4], %s4352
      %s4354 = sshll.u32 [#allocation8], 4
      %s4355 = int_to_ptr.vmem [resolvable:$true] %s4354
      %4360 = dma.vmem_to_hbm [thread:$0]  %s4355, 4096, %s9, [#allocation4], 256, 256, 16
    $region53: #{tpu_custom_call.1} parent=1 // pred_fallthru
      _
    // Predicated region
    $region54: #{tpu_custom_call.1} parent=1 // pred_check
      _
    $region55: #{tpu_custom_call.1} parent=1 // pred_check_branch
      %4362 = sbr.rel (0) target = $region57
    $region56: #{tpu_custom_call.1} parent=1 // pred_region
      %4363 = dma.done [#allocation4], 4096
    $region57: #{tpu_custom_call.1} parent=1 // pred_fallthru
      _
    %4364 = vsyncpa [#allocation3], 1
    %4365 = vsyncpa [#allocation6], 1
    %4366 = vsyncpa [#allocation4], 1

</llo_original>
